<compile_context>
chip_gen: v7x
topology: tpu7x:2x2x1
jax: 0.10.0
libtpu: 0.0.40
codegen_flags: <defaults>
</compile_context>

<pallas_src>
import math
from functools import partial

import jax
import jax.numpy as jnp
import numpy as np
from jax.experimental import pallas as pl
from jax.experimental.pallas import tpu as pltpu

NEG_SLOPE = 0.1        # LeakyReLU(0.1)
LN_EPS = 1e-5          # nn.LayerNorm default eps
OUT_W = 128            # lane-dense combined output width: [action_mean | value | 0-pad]

# Row indices inside the packed vector slab (6 feature layers fixed).
ROW_ATTN_B = 18        # folded attention bias (bv @ Wo + bo)
ROW_BR1 = 19           # actor layer-1 (b,g,be) then critic layer-1 (b,g,be)
ROW_BR2 = 25           # actor layer-2 (b,g,be) then critic layer-2 (b,g,be)
ROW_BR3 = 31           # actor layer-3 (b,g,be) then critic layer-3 (b,g,be)
ROW_HEAD_B = 37        # combined head bias


def elementwise_bf16_ok():
    """Use bf16 elementwise math only on chips with a bf16 VPU (v6e / v7x)."""
    try:
        kind = jax.devices()[0].device_kind.lower()
    except Exception:
        return True
    return not any(f"v{g}" in kind for g in (2, 3, 4, 5))


# ----------------------------- shared math ---------------------------------
def _bf16_dot(x, w):
    # bf16 MXU matmul with f32 accumulation (no-op cast if x already bf16).
    return jnp.dot(x.astype(jnp.bfloat16), w, preferred_element_type=jnp.float32)


def _forward_body(x, w0, w_big, w_mid, w3, w_head, vec, *,
                  hidden_dim, action_dim, bf16_elem):
    """Shared forward math.  Works on Pallas Refs (inside the kernel) and on
    plain jnp arrays (pure-JAX reference)."""
    H = hidden_dim
    h2, h4 = H // 2, H // 4

    def vrow(r, width=H):
        return vec[r:r + 1, :width]                    # (1, width) f32, static slice

    def ln_lrelu(y, g, b):
        # LayerNorm: f32 stats with the (y - mu)^2 variance form (numerically
        # safe), then normalize/affine + LeakyReLU(0.1) in bf16 where allowed.
        mu = jnp.mean(y, axis=-1, keepdims=True)
        d = y - mu
        var = jnp.mean(d * d, axis=-1, keepdims=True)
        xn = d * jax.lax.rsqrt(var + LN_EPS)
        if bf16_elem:
            xn = xn.astype(jnp.bfloat16)
            g = g.astype(jnp.bfloat16)
            b = b.astype(jnp.bfloat16)
        yn = xn * g + b
        return jnp.maximum(yn, NEG_SLOPE * yn)         # exact LeakyReLU, max form

    # Feature layer 0: (TB, S_pad) @ (S_pad, H); Dropout = inference no-op.
    h = ln_lrelu(_bf16_dot(x[...], w0[...]) + vrow(0), vrow(1), vrow(2))

    # Feature layers 1..5.
    for i in range(1, 6):
        y = _bf16_dot(h, w_big[:, (i - 1) * H:i * H]) + vrow(3 * i)
        h = ln_lrelu(y, vrow(3 * i + 1), vrow(3 * i + 2))

    # seq_len==1 self-attention + residual (softmax over one key == 1, exact):
    #   h <- h + h @ (Wv Wo) + (bv Wo + bo); residual kept in f32.
    h = h.astype(jnp.float32) + _bf16_dot(h, w_big[:, 5 * H:6 * H]) + vrow(ROW_ATTN_B)

    # Fused first actor/critic layers: one (H, 2H) matmul, per-branch LayerNorm.
    y1 = _bf16_dot(h, w_big[:, 6 * H:8 * H])           # (TB, 2H)
    a = ln_lrelu(y1[:, :H] + vrow(ROW_BR1 + 0), vrow(ROW_BR1 + 1), vrow(ROW_BR1 + 2))
    c = ln_lrelu(y1[:, H:] + vrow(ROW_BR1 + 3), vrow(ROW_BR1 + 4), vrow(ROW_BR1 + 5))

    # Branch layer 2: H -> H/2.
    a = ln_lrelu(_bf16_dot(a, w_mid[0]) + vrow(ROW_BR2 + 0, h2),
                 vrow(ROW_BR2 + 1, h2), vrow(ROW_BR2 + 2, h2))
    c = ln_lrelu(_bf16_dot(c, w_mid[1]) + vrow(ROW_BR2 + 3, h2),
                 vrow(ROW_BR2 + 4, h2), vrow(ROW_BR2 + 5, h2))

    # Branch layer 3: H/2 -> H/4.
    a = ln_lrelu(_bf16_dot(a, w3[0]) + vrow(ROW_BR3 + 0, h4),
                 vrow(ROW_BR3 + 1, h4), vrow(ROW_BR3 + 2, h4))
    c = ln_lrelu(_bf16_dot(c, w3[1]) + vrow(ROW_BR3 + 3, h4),
                 vrow(ROW_BR3 + 4, h4), vrow(ROW_BR3 + 5, h4))

    # Fused head: [a | c] (TB, H/2) @ (H/2, OUT_W) single K=128 MXU matmul.
    #   cols [0, A) = tanh(actor_mean), col A = value, rest = 0.
    ac = jnp.concatenate([a.astype(jnp.bfloat16), c.astype(jnp.bfloat16)], axis=-1)
    comb = jnp.dot(ac, w_head[...], preferred_element_type=jnp.float32) \
        + vrow(ROW_HEAD_B, OUT_W)
    col = jax.lax.broadcasted_iota(jnp.int32, comb.shape, 1)
    return jnp.where(col < action_dim, jnp.tanh(comb), comb)


# --------------------------------- kernel ----------------------------------
def actor_critic_kernel(x_ref, w0_ref, w_big_ref, w_mid_ref, w3_ref, w_head_ref,
                        vec_ref, out_ref, *, hidden_dim, action_dim, bf16_elem):
    out_ref[...] = _forward_body(
        x_ref, w0_ref, w_big_ref, w_mid_ref, w3_ref, w_head_ref, vec_ref,
        hidden_dim=hidden_dim, action_dim=action_dim, bf16_elem=bf16_elem)


# ----------------------------- raw param init -------------------------------
def init_raw_params(key, state_dim, hidden_dim, action_dim):
    """PyTorch-style init: kaiming_normal(mode='fan_out', nonlinearity='leaky_relu',
    a=0 -> gain=sqrt(2)) for Linear weights, zero biases, LayerNorm gamma=1/beta=0.
    Weights are stored pre-transposed as (in, out) so y = x @ W + b."""
    H = hidden_dim
    keys = iter(jax.random.split(key, 20))

    def linear(k, din, dout):
        std = math.sqrt(2.0) / math.sqrt(dout)          # gain / sqrt(fan_out)
        w = jax.random.normal(k, (din, dout), jnp.float32) * std
        b = jnp.zeros((dout,), jnp.float32)
        return w, b

    def ln(d):
        return jnp.ones((d,), jnp.float32), jnp.zeros((d,), jnp.float32)

    p = {}
    p['feat'] = []
    for i in range(6):
        w, b = linear(next(keys), state_dim if i == 0 else H, H)
        g, be = ln(H)
        p['feat'].append((w, b, g, be))

    # MultiheadAttention: only v_proj / out_proj influence the seq_len==1 output.
    wv, bv = linear(next(keys), H, H)
    wo, bo = linear(next(keys), H, H)
    p['attn'] = (wv, bv, wo, bo)

    def branch(dims):
        out = []
        for din, dout in dims:
            w, b = linear(next(keys), din, dout)
            g, be = ln(dout)
            out.append((w, b, g, be))
        return out

    dims = [(H, H), (H, H // 2), (H // 2, H // 4)]
    p['actor'] = branch(dims)
    p['actor_mean'] = linear(next(keys), H // 4, action_dim)
    p['critic'] = branch(dims)
    p['critic_head'] = linear(next(keys), H // 4, 1)
    p['log_std'] = jnp.full((action_dim,), -0.5, jnp.float32)
    return p


# ------------------------------ param packing -------------------------------
def pack_params(p, state_dim, hidden_dim, action_dim):
    H, A = hidden_dim, action_dim
    assert A + 1 <= OUT_W and H % 128 == 0 and H >= OUT_W

    s_pad = ((state_dim + 7) // 8) * 8

    # First feature layer keeps its own narrow (s_pad, H) slab (no 8x zero pad).
    w0 = jnp.zeros((s_pad, H), jnp.float32).at[:state_dim].set(p['feat'][0][0])
    w0 = w0.astype(jnp.bfloat16)

    wv, bv, wo, bo = p['attn']

    # W_big: (H, 8H) bf16: feature layers 1..5, attention fold (Wv@Wo; residual
    # identity kept exact in-kernel), actor-1 | critic-1 (fused 2H matmul).
    slots = [p['feat'][i][0] for i in range(1, 6)]
    slots.append(wv @ wo)
    slots.append(p['actor'][0][0])
    slots.append(p['critic'][0][0])
    w_big = jnp.concatenate(slots, axis=1).astype(jnp.bfloat16)

    # Stacked narrow branch weights.
    w_mid = jnp.stack([p['actor'][1][0], p['critic'][1][0]]).astype(jnp.bfloat16)
    w3 = jnp.stack([p['actor'][2][0], p['critic'][2][0]]).astype(jnp.bfloat16)

    # Fused head: K = [actor_feat | critic_feat] (H/2 rows), N = OUT_W lanes.
    wam, bam = p['actor_mean']
    wc, bc = p['critic_head']
    wh = jnp.zeros((H // 2, OUT_W), jnp.float32)
    wh = wh.at[:H // 4, :A].set(wam)
    wh = wh.at[H // 4:, A:A + 1].set(wc)
    w_head = wh.astype(jnp.bfloat16)

    # Vector slab: one padded f32 row per bias / gamma / beta.
    rows = []

    def row(v):
        rows.append(jnp.zeros((H,), jnp.float32).at[:v.shape[0]].set(v))

    for i in range(6):
        _, b, g, be = p['feat'][i]
        row(b); row(g); row(be)
    assert len(rows) == ROW_ATTN_B
    row(bv @ wo + bo)                                  # folded attention bias
    assert len(rows) == ROW_BR1
    for layer in (0, 1, 2):
        for br in ('actor', 'critic'):
            _, b, g, be = p[br][layer]
            row(b); row(g); row(be)
    assert len(rows) == ROW_HEAD_B
    row(jnp.zeros((OUT_W,), jnp.float32).at[:A].set(bam).at[A:A + 1].set(bc))
    n = len(rows)
    n_pad = ((n + 7) // 8) * 8
    vec = jnp.stack(rows + [jnp.zeros((H,), jnp.float32)] * (n_pad - n))
    return w0, w_big, w_mid, w3, w_head, vec


# ------------------------------ wrapper -------------------------------------
def _choose_tile(batch):
    """Batch tile: multiple of 8, capped at 512, >= 2 grid tiles whenever B >= 16
    (engages the second TensorCore on v7x via the 'parallel' grid axis), and
    sized to minimize last-tile padding."""
    b8 = ((batch + 7) // 8) * 8
    if b8 < 16:
        tb = b8
    else:
        tb = min(512, ((b8 + 15) // 16) * 8)   # round8(ceil(b8/2)) -> >= 2 tiles
    b_pad = ((b8 + tb - 1) // tb) * tb
    return tb, b_pad


def forward(state, packed, log_std, hidden_dim, bf16_elem=None):
    w0, w_big, w_mid, w3, w_head, vec = packed
    if bf16_elem is None:
        bf16_elem = elementwise_bf16_ok()

    B = state.shape[0]
    A = int(log_std.shape[0])
    H = hidden_dim
    s_pad = w0.shape[0]

    tb, b_pad = _choose_tile(B)
    x = jnp.zeros((b_pad, s_pad), jnp.float32).at[:B, :state.shape[1]].set(
        state.astype(jnp.float32))

    kernel = partial(actor_critic_kernel, hidden_dim=H, action_dim=A,
                     bf16_elem=bf16_elem)
    out = pl.pallas_call(
        kernel,
        out_shape=jax.ShapeDtypeStruct((b_pad, OUT_W), jnp.float32),
        grid_spec=pltpu.PrefetchScalarGridSpec(
            num_scalar_prefetch=0,
            grid=(b_pad // tb,),
            in_specs=[
                pl.BlockSpec((tb, s_pad), lambda i: (i, 0)),     # state batch tile
                pl.BlockSpec(w0.shape, lambda i: (0, 0)),        # resident slabs
                pl.BlockSpec(w_big.shape, lambda i: (0, 0)),
                pl.BlockSpec(w_mid.shape, lambda i: (0, 0, 0)),
                pl.BlockSpec(w3.shape, lambda i: (0, 0, 0)),
                pl.BlockSpec(w_head.shape, lambda i: (0, 0)),
                pl.BlockSpec(vec.shape, lambda i: (0, 0)),
            ],
            out_specs=pl.BlockSpec((tb, OUT_W), lambda i: (i, 0)),
        ),
        compiler_params=pltpu.CompilerParams(
            dimension_semantics=("parallel",)),
    )(x, w0, w_big, w_mid, w3, w_head, vec)

    action_mean = out[:B, :A]
    value = out[:B, A:A + 1]
    action_std = jnp.exp(jnp.clip(log_std, -20.0, 2.0))
    return action_mean, action_std, value


# -------------------- pure-f32 reference of the original graph --------------
def forward_ref_f32(state, p):
    def ln(x, g, b):
        mu = jnp.mean(x, -1, keepdims=True)
        var = jnp.mean((x - mu) ** 2, -1, keepdims=True)
        return (x - mu) * jax.lax.rsqrt(var + LN_EPS) * g + b

    def lrelu(x):
        return jnp.where(x > 0, x, NEG_SLOPE * x)

    x = state
    for w, b, g, be in p['feat']:
        x = lrelu(ln(x @ w + b, g, be))
    wv, bv, wo, bo = p['attn']
    x = x + ((x @ wv + bv) @ wo + bo)                  # seq_len==1: softmax == 1

    def branch(x, layers):
        for w, b, g, be in layers:
            x = lrelu(ln(x @ w + b, g, be))
        return x

    wam, bam = p['actor_mean']
    wc, bc = p['critic_head']
    action_mean = jnp.tanh(branch(x, p['actor']) @ wam + bam)
    value = branch(x, p['critic']) @ wc + bc
    action_std = jnp.exp(jnp.clip(p['log_std'], -20.0, 2.0))
    return action_mean, action_std, value


# --------------------------------- main --------------------------------------
if __name__ == "__main__":
    BATCH, STATE_DIM, HIDDEN_DIM, ACTION_DIM = 2, 32, 256, 8

    root = jax.random.PRNGKey(0)
    k_param, k_state = jax.random.split(root)
    raw = init_raw_params(k_param, STATE_DIM, HIDDEN_DIM, ACTION_DIM)
    packed = pack_params(raw, STATE_DIM, HIDDEN_DIM, ACTION_DIM)
    state = jax.random.normal(k_state, (BATCH, STATE_DIM), jnp.float32)

    bf16_elem = elementwise_bf16_ok()
    action_mean, action_std, value = forward(state, packed, raw['log_std'],
                                             HIDDEN_DIM, bf16_elem=bf16_elem)
    jax.block_until_ready((action_mean, action_std, value))

    assert action_mean.shape == (BATCH, ACTION_DIM)
    assert action_std.shape == (ACTION_DIM,)
    assert value.shape == (BATCH, 1)

    # Check 1 (tight): same folded/bf16 math executed in pure JAX on the packed slabs.
    _, b_pad = _choose_tile(BATCH)
    s_pad = packed[0].shape[0]
    x_pad = jnp.zeros((b_pad, s_pad), jnp.float32).at[:BATCH, :STATE_DIM].set(state)
    ref_out = _forward_body(x_pad, *packed, hidden_dim=HIDDEN_DIM,
                            action_dim=ACTION_DIM, bf16_elem=bf16_elem)
    np.testing.assert_allclose(np.asarray(action_mean),
                               np.asarray(ref_out[:BATCH, :ACTION_DIM]),
                               rtol=2e-3, atol=2e-3)
    np.testing.assert_allclose(np.asarray(value),
                               np.asarray(ref_out[:BATCH, ACTION_DIM:ACTION_DIM + 1]),
                               rtol=2e-3, atol=2e-3)

    # Check 2 (loose): semantics vs the unfolded, full-f32 original module graph.
    ref_mean, ref_std, ref_value = forward_ref_f32(state, raw)
    np.testing.assert_allclose(np.asarray(action_mean), np.asarray(ref_mean),
                               rtol=0.1, atol=0.15)
    np.testing.assert_allclose(np.asarray(value), np.asarray(ref_value),
                               rtol=0.1, atol=0.5)
    np.testing.assert_allclose(np.asarray(action_std), np.asarray(ref_std),
                               rtol=1e-6, atol=1e-6)

    print("KERNEL_OK")
</pallas_src>

<mosaic_0001>
module attributes {stable_mosaic.version = 11 : i64} {
  func.func @actor_critic_kernel(%arg0: i32, %arg1: memref<8x32xf32, #tpu.memory_space<vmem>>, %arg2: memref<32x256xbf16, #tpu.memory_space<vmem>>, %arg3: memref<256x2048xbf16, #tpu.memory_space<vmem>>, %arg4: memref<2x256x128xbf16, #tpu.memory_space<vmem>>, %arg5: memref<2x128x64xbf16, #tpu.memory_space<vmem>>, %arg6: memref<128x128xbf16, #tpu.memory_space<vmem>>, %arg7: memref<40x256xf32, #tpu.memory_space<vmem>>, %arg8: memref<8x128xf32, #tpu.memory_space<vmem>>) attributes {dimension_semantics = [#tpu.dimension_semantics<parallel>], iteration_bounds = array<i64: 1>, scalar_prefetch = 0 : i64, scratch_operands = 0 : i64, tpu.core_type = #tpu.core_type<tc>, window_params = [{transform_indices = @transform_0, window_bounds = array<i64: 8, 32>}, {pipeline_mode = #tpu.pipeline_mode<synchronous>, transform_indices = @transform_1, window_bounds = array<i64: 32, 256>}, {pipeline_mode = #tpu.pipeline_mode<synchronous>, transform_indices = @transform_2, window_bounds = array<i64: 256, 2048>}, {pipeline_mode = #tpu.pipeline_mode<synchronous>, transform_indices = @transform_3, window_bounds = array<i64: 2, 256, 128>}, {pipeline_mode = #tpu.pipeline_mode<synchronous>, transform_indices = @transform_4, window_bounds = array<i64: 2, 128, 64>}, {pipeline_mode = #tpu.pipeline_mode<synchronous>, transform_indices = @transform_5, window_bounds = array<i64: 128, 128>}, {pipeline_mode = #tpu.pipeline_mode<synchronous>, transform_indices = @transform_6, window_bounds = array<i64: 40, 256>}, {transform_indices = @transform_7, window_bounds = array<i64: 8, 128>}]} {
    %c0 = arith.constant 0 : index
    %c0_0 = arith.constant 0 : index
    %0 = vector.load %arg1[%c0, %c0_0] : memref<8x32xf32, #tpu.memory_space<vmem>>, vector<8x32xf32>
    %c0_1 = arith.constant 0 : index
    %c0_2 = arith.constant 0 : index
    %1 = vector.load %arg2[%c0_1, %c0_2] : memref<32x256xbf16, #tpu.memory_space<vmem>>, vector<32x256xbf16>
    %2 = arith.truncf %0 : vector<8x32xf32> to vector<8x32xbf16>
    %cst = arith.constant dense<0.000000e+00> : vector<8x256xf32>
    %3 = tpu.matmul %2, %1, %cst {dimension_numbers = #tpu.dot_dimension_numbers<[1], [0], [0], [1], [0, 0, 1, 1], [], []>} : vector<8x32xbf16>, vector<32x256xbf16>, vector<8x256xf32> -> vector<8x256xf32>
    %c0_3 = arith.constant 0 : index
    %c0_4 = arith.constant 0 : index
    %4 = vector.load %arg7[%c0_3, %c0_4] : memref<40x256xf32, #tpu.memory_space<vmem>>, vector<1x256xf32>
    %5 = vector.broadcast %4 : vector<1x256xf32> to vector<8x256xf32>
    %6 = arith.addf %3, %5 : vector<8x256xf32>
    %c1 = arith.constant 1 : index
    %c0_5 = arith.constant 0 : index
    %7 = vector.load %arg7[%c1, %c0_5] : memref<40x256xf32, #tpu.memory_space<vmem>>, vector<1x256xf32>
    %c2 = arith.constant 2 : index
    %c0_6 = arith.constant 0 : index
    %8 = vector.load %arg7[%c2, %c0_6] : memref<40x256xf32, #tpu.memory_space<vmem>>, vector<1x256xf32>
    %cst_7 = arith.constant dense<0.000000e+00> : vector<8xf32>
    %9 = vector.multi_reduction <add>, %6, %cst_7 [1] : vector<8x256xf32> to vector<8xf32>
    %10 = vector.shape_cast %9 : vector<8xf32> to vector<8x1xf32>
    %cst_8 = arith.constant 2.560000e+02 : f32
    %11 = vector.broadcast %cst_8 : f32 to vector<8x1xf32>
    %12 = arith.divf %10, %11 : vector<8x1xf32>
    %13 = vector.broadcast %12 : vector<8x1xf32> to vector<8x256xf32>
    %14 = arith.subf %6, %13 : vector<8x256xf32>
    %15 = arith.mulf %14, %14 : vector<8x256xf32>
    %cst_9 = arith.constant dense<0.000000e+00> : vector<8xf32>
    %16 = vector.multi_reduction <add>, %15, %cst_9 [1] : vector<8x256xf32> to vector<8xf32>
    %17 = vector.shape_cast %16 : vector<8xf32> to vector<8x1xf32>
    %cst_10 = arith.constant 2.560000e+02 : f32
    %18 = vector.broadcast %cst_10 : f32 to vector<8x1xf32>
    %19 = arith.divf %17, %18 : vector<8x1xf32>
    %cst_11 = arith.constant 9.99999974E-6 : f32
    %20 = vector.broadcast %cst_11 : f32 to vector<8x1xf32>
    %21 = arith.addf %19, %20 : vector<8x1xf32>
    %22 = math.rsqrt %21 : vector<8x1xf32>
    %23 = vector.broadcast %22 : vector<8x1xf32> to vector<8x256xf32>
    %24 = arith.mulf %14, %23 : vector<8x256xf32>
    %25 = arith.truncf %24 : vector<8x256xf32> to vector<8x256xbf16>
    %26 = arith.truncf %7 : vector<1x256xf32> to vector<1x256xbf16>
    %27 = arith.truncf %8 : vector<1x256xf32> to vector<1x256xbf16>
    %28 = vector.broadcast %26 : vector<1x256xbf16> to vector<8x256xbf16>
    %29 = arith.mulf %25, %28 : vector<8x256xbf16>
    %30 = vector.broadcast %27 : vector<1x256xbf16> to vector<8x256xbf16>
    %31 = arith.addf %29, %30 : vector<8x256xbf16>
    %cst_12 = arith.constant 1.000980e-01 : bf16
    %32 = vector.broadcast %cst_12 : bf16 to vector<8x256xbf16>
    %33 = arith.mulf %32, %31 : vector<8x256xbf16>
    %34 = arith.maximumf %31, %33 : vector<8x256xbf16>
    %c0_13 = arith.constant 0 : index
    %c0_14 = arith.constant 0 : index
    %35 = vector.load %arg3[%c0_13, %c0_14] : memref<256x2048xbf16, #tpu.memory_space<vmem>>, vector<256x256xbf16>
    %cst_15 = arith.constant dense<0.000000e+00> : vector<8x256xf32>
    %36 = tpu.matmul %34, %35, %cst_15 {dimension_numbers = #tpu.dot_dimension_numbers<[1], [0], [0], [1], [0, 0, 1, 1], [], []>} : vector<8x256xbf16>, vector<256x256xbf16>, vector<8x256xf32> -> vector<8x256xf32>
    %c3 = arith.constant 3 : index
    %c0_16 = arith.constant 0 : index
    %37 = vector.load %arg7[%c3, %c0_16] : memref<40x256xf32, #tpu.memory_space<vmem>>, vector<1x256xf32>
    %38 = vector.broadcast %37 : vector<1x256xf32> to vector<8x256xf32>
    %39 = arith.addf %36, %38 : vector<8x256xf32>
    %c4 = arith.constant 4 : index
    %c0_17 = arith.constant 0 : index
    %40 = vector.load %arg7[%c4, %c0_17] : memref<40x256xf32, #tpu.memory_space<vmem>>, vector<1x256xf32>
    %c5 = arith.constant 5 : index
    %c0_18 = arith.constant 0 : index
    %41 = vector.load %arg7[%c5, %c0_18] : memref<40x256xf32, #tpu.memory_space<vmem>>, vector<1x256xf32>
    %cst_19 = arith.constant dense<0.000000e+00> : vector<8xf32>
    %42 = vector.multi_reduction <add>, %39, %cst_19 [1] : vector<8x256xf32> to vector<8xf32>
    %43 = vector.shape_cast %42 : vector<8xf32> to vector<8x1xf32>
    %cst_20 = arith.constant 2.560000e+02 : f32
    %44 = vector.broadcast %cst_20 : f32 to vector<8x1xf32>
    %45 = arith.divf %43, %44 : vector<8x1xf32>
    %46 = vector.broadcast %45 : vector<8x1xf32> to vector<8x256xf32>
    %47 = arith.subf %39, %46 : vector<8x256xf32>
    %48 = arith.mulf %47, %47 : vector<8x256xf32>
    %cst_21 = arith.constant dense<0.000000e+00> : vector<8xf32>
    %49 = vector.multi_reduction <add>, %48, %cst_21 [1] : vector<8x256xf32> to vector<8xf32>
    %50 = vector.shape_cast %49 : vector<8xf32> to vector<8x1xf32>
    %cst_22 = arith.constant 2.560000e+02 : f32
    %51 = vector.broadcast %cst_22 : f32 to vector<8x1xf32>
    %52 = arith.divf %50, %51 : vector<8x1xf32>
    %cst_23 = arith.constant 9.99999974E-6 : f32
    %53 = vector.broadcast %cst_23 : f32 to vector<8x1xf32>
    %54 = arith.addf %52, %53 : vector<8x1xf32>
    %55 = math.rsqrt %54 : vector<8x1xf32>
    %56 = vector.broadcast %55 : vector<8x1xf32> to vector<8x256xf32>
    %57 = arith.mulf %47, %56 : vector<8x256xf32>
    %58 = arith.truncf %57 : vector<8x256xf32> to vector<8x256xbf16>
    %59 = arith.truncf %40 : vector<1x256xf32> to vector<1x256xbf16>
    %60 = arith.truncf %41 : vector<1x256xf32> to vector<1x256xbf16>
    %61 = vector.broadcast %59 : vector<1x256xbf16> to vector<8x256xbf16>
    %62 = arith.mulf %58, %61 : vector<8x256xbf16>
    %63 = vector.broadcast %60 : vector<1x256xbf16> to vector<8x256xbf16>
    %64 = arith.addf %62, %63 : vector<8x256xbf16>
    %cst_24 = arith.constant 1.000980e-01 : bf16
    %65 = vector.broadcast %cst_24 : bf16 to vector<8x256xbf16>
    %66 = arith.mulf %65, %64 : vector<8x256xbf16>
    %67 = arith.maximumf %64, %66 : vector<8x256xbf16>
    %c0_25 = arith.constant 0 : index
    %c256 = arith.constant 256 : index
    %68 = vector.load %arg3[%c0_25, %c256] : memref<256x2048xbf16, #tpu.memory_space<vmem>>, vector<256x256xbf16>
    %cst_26 = arith.constant dense<0.000000e+00> : vector<8x256xf32>
    %69 = tpu.matmul %67, %68, %cst_26 {dimension_numbers = #tpu.dot_dimension_numbers<[1], [0], [0], [1], [0, 0, 1, 1], [], []>} : vector<8x256xbf16>, vector<256x256xbf16>, vector<8x256xf32> -> vector<8x256xf32>
    %c6 = arith.constant 6 : index
    %c0_27 = arith.constant 0 : index
    %70 = vector.load %arg7[%c6, %c0_27] : memref<40x256xf32, #tpu.memory_space<vmem>>, vector<1x256xf32>
    %71 = vector.broadcast %70 : vector<1x256xf32> to vector<8x256xf32>
    %72 = arith.addf %69, %71 : vector<8x256xf32>
    %c7 = arith.constant 7 : index
    %c0_28 = arith.constant 0 : index
    %73 = vector.load %arg7[%c7, %c0_28] : memref<40x256xf32, #tpu.memory_space<vmem>>, vector<1x256xf32>
    %c8 = arith.constant 8 : index
    %c0_29 = arith.constant 0 : index
    %74 = vector.load %arg7[%c8, %c0_29] : memref<40x256xf32, #tpu.memory_space<vmem>>, vector<1x256xf32>
    %cst_30 = arith.constant dense<0.000000e+00> : vector<8xf32>
    %75 = vector.multi_reduction <add>, %72, %cst_30 [1] : vector<8x256xf32> to vector<8xf32>
    %76 = vector.shape_cast %75 : vector<8xf32> to vector<8x1xf32>
    %cst_31 = arith.constant 2.560000e+02 : f32
    %77 = vector.broadcast %cst_31 : f32 to vector<8x1xf32>
    %78 = arith.divf %76, %77 : vector<8x1xf32>
    %79 = vector.broadcast %78 : vector<8x1xf32> to vector<8x256xf32>
    %80 = arith.subf %72, %79 : vector<8x256xf32>
    %81 = arith.mulf %80, %80 : vector<8x256xf32>
    %cst_32 = arith.constant dense<0.000000e+00> : vector<8xf32>
    %82 = vector.multi_reduction <add>, %81, %cst_32 [1] : vector<8x256xf32> to vector<8xf32>
    %83 = vector.shape_cast %82 : vector<8xf32> to vector<8x1xf32>
    %cst_33 = arith.constant 2.560000e+02 : f32
    %84 = vector.broadcast %cst_33 : f32 to vector<8x1xf32>
    %85 = arith.divf %83, %84 : vector<8x1xf32>
    %cst_34 = arith.constant 9.99999974E-6 : f32
    %86 = vector.broadcast %cst_34 : f32 to vector<8x1xf32>
    %87 = arith.addf %85, %86 : vector<8x1xf32>
    %88 = math.rsqrt %87 : vector<8x1xf32>
    %89 = vector.broadcast %88 : vector<8x1xf32> to vector<8x256xf32>
    %90 = arith.mulf %80, %89 : vector<8x256xf32>
    %91 = arith.truncf %90 : vector<8x256xf32> to vector<8x256xbf16>
    %92 = arith.truncf %73 : vector<1x256xf32> to vector<1x256xbf16>
    %93 = arith.truncf %74 : vector<1x256xf32> to vector<1x256xbf16>
    %94 = vector.broadcast %92 : vector<1x256xbf16> to vector<8x256xbf16>
    %95 = arith.mulf %91, %94 : vector<8x256xbf16>
    %96 = vector.broadcast %93 : vector<1x256xbf16> to vector<8x256xbf16>
    %97 = arith.addf %95, %96 : vector<8x256xbf16>
    %cst_35 = arith.constant 1.000980e-01 : bf16
    %98 = vector.broadcast %cst_35 : bf16 to vector<8x256xbf16>
    %99 = arith.mulf %98, %97 : vector<8x256xbf16>
    %100 = arith.maximumf %97, %99 : vector<8x256xbf16>
    %c0_36 = arith.constant 0 : index
    %c512 = arith.constant 512 : index
    %101 = vector.load %arg3[%c0_36, %c512] : memref<256x2048xbf16, #tpu.memory_space<vmem>>, vector<256x256xbf16>
    %cst_37 = arith.constant dense<0.000000e+00> : vector<8x256xf32>
    %102 = tpu.matmul %100, %101, %cst_37 {dimension_numbers = #tpu.dot_dimension_numbers<[1], [0], [0], [1], [0, 0, 1, 1], [], []>} : vector<8x256xbf16>, vector<256x256xbf16>, vector<8x256xf32> -> vector<8x256xf32>
    %c9 = arith.constant 9 : index
    %c0_38 = arith.constant 0 : index
    %103 = vector.load %arg7[%c9, %c0_38] : memref<40x256xf32, #tpu.memory_space<vmem>>, vector<1x256xf32>
    %104 = vector.broadcast %103 : vector<1x256xf32> to vector<8x256xf32>
    %105 = arith.addf %102, %104 : vector<8x256xf32>
    %c10 = arith.constant 10 : index
    %c0_39 = arith.constant 0 : index
    %106 = vector.load %arg7[%c10, %c0_39] : memref<40x256xf32, #tpu.memory_space<vmem>>, vector<1x256xf32>
    %c11 = arith.constant 11 : index
    %c0_40 = arith.constant 0 : index
    %107 = vector.load %arg7[%c11, %c0_40] : memref<40x256xf32, #tpu.memory_space<vmem>>, vector<1x256xf32>
    %cst_41 = arith.constant dense<0.000000e+00> : vector<8xf32>
    %108 = vector.multi_reduction <add>, %105, %cst_41 [1] : vector<8x256xf32> to vector<8xf32>
    %109 = vector.shape_cast %108 : vector<8xf32> to vector<8x1xf32>
    %cst_42 = arith.constant 2.560000e+02 : f32
    %110 = vector.broadcast %cst_42 : f32 to vector<8x1xf32>
    %111 = arith.divf %109, %110 : vector<8x1xf32>
    %112 = vector.broadcast %111 : vector<8x1xf32> to vector<8x256xf32>
    %113 = arith.subf %105, %112 : vector<8x256xf32>
    %114 = arith.mulf %113, %113 : vector<8x256xf32>
    %cst_43 = arith.constant dense<0.000000e+00> : vector<8xf32>
    %115 = vector.multi_reduction <add>, %114, %cst_43 [1] : vector<8x256xf32> to vector<8xf32>
    %116 = vector.shape_cast %115 : vector<8xf32> to vector<8x1xf32>
    %cst_44 = arith.constant 2.560000e+02 : f32
    %117 = vector.broadcast %cst_44 : f32 to vector<8x1xf32>
    %118 = arith.divf %116, %117 : vector<8x1xf32>
    %cst_45 = arith.constant 9.99999974E-6 : f32
    %119 = vector.broadcast %cst_45 : f32 to vector<8x1xf32>
    %120 = arith.addf %118, %119 : vector<8x1xf32>
    %121 = math.rsqrt %120 : vector<8x1xf32>
    %122 = vector.broadcast %121 : vector<8x1xf32> to vector<8x256xf32>
    %123 = arith.mulf %113, %122 : vector<8x256xf32>
    %124 = arith.truncf %123 : vector<8x256xf32> to vector<8x256xbf16>
    %125 = arith.truncf %106 : vector<1x256xf32> to vector<1x256xbf16>
    %126 = arith.truncf %107 : vector<1x256xf32> to vector<1x256xbf16>
    %127 = vector.broadcast %125 : vector<1x256xbf16> to vector<8x256xbf16>
    %128 = arith.mulf %124, %127 : vector<8x256xbf16>
    %129 = vector.broadcast %126 : vector<1x256xbf16> to vector<8x256xbf16>
    %130 = arith.addf %128, %129 : vector<8x256xbf16>
    %cst_46 = arith.constant 1.000980e-01 : bf16
    %131 = vector.broadcast %cst_46 : bf16 to vector<8x256xbf16>
    %132 = arith.mulf %131, %130 : vector<8x256xbf16>
    %133 = arith.maximumf %130, %132 : vector<8x256xbf16>
    %c0_47 = arith.constant 0 : index
    %c768 = arith.constant 768 : index
    %134 = vector.load %arg3[%c0_47, %c768] : memref<256x2048xbf16, #tpu.memory_space<vmem>>, vector<256x256xbf16>
    %cst_48 = arith.constant dense<0.000000e+00> : vector<8x256xf32>
    %135 = tpu.matmul %133, %134, %cst_48 {dimension_numbers = #tpu.dot_dimension_numbers<[1], [0], [0], [1], [0, 0, 1, 1], [], []>} : vector<8x256xbf16>, vector<256x256xbf16>, vector<8x256xf32> -> vector<8x256xf32>
    %c12 = arith.constant 12 : index
    %c0_49 = arith.constant 0 : index
    %136 = vector.load %arg7[%c12, %c0_49] : memref<40x256xf32, #tpu.memory_space<vmem>>, vector<1x256xf32>
    %137 = vector.broadcast %136 : vector<1x256xf32> to vector<8x256xf32>
    %138 = arith.addf %135, %137 : vector<8x256xf32>
    %c13 = arith.constant 13 : index
    %c0_50 = arith.constant 0 : index
    %139 = vector.load %arg7[%c13, %c0_50] : memref<40x256xf32, #tpu.memory_space<vmem>>, vector<1x256xf32>
    %c14 = arith.constant 14 : index
    %c0_51 = arith.constant 0 : index
    %140 = vector.load %arg7[%c14, %c0_51] : memref<40x256xf32, #tpu.memory_space<vmem>>, vector<1x256xf32>
    %cst_52 = arith.constant dense<0.000000e+00> : vector<8xf32>
    %141 = vector.multi_reduction <add>, %138, %cst_52 [1] : vector<8x256xf32> to vector<8xf32>
    %142 = vector.shape_cast %141 : vector<8xf32> to vector<8x1xf32>
    %cst_53 = arith.constant 2.560000e+02 : f32
    %143 = vector.broadcast %cst_53 : f32 to vector<8x1xf32>
    %144 = arith.divf %142, %143 : vector<8x1xf32>
    %145 = vector.broadcast %144 : vector<8x1xf32> to vector<8x256xf32>
    %146 = arith.subf %138, %145 : vector<8x256xf32>
    %147 = arith.mulf %146, %146 : vector<8x256xf32>
    %cst_54 = arith.constant dense<0.000000e+00> : vector<8xf32>
    %148 = vector.multi_reduction <add>, %147, %cst_54 [1] : vector<8x256xf32> to vector<8xf32>
    %149 = vector.shape_cast %148 : vector<8xf32> to vector<8x1xf32>
    %cst_55 = arith.constant 2.560000e+02 : f32
    %150 = vector.broadcast %cst_55 : f32 to vector<8x1xf32>
    %151 = arith.divf %149, %150 : vector<8x1xf32>
    %cst_56 = arith.constant 9.99999974E-6 : f32
    %152 = vector.broadcast %cst_56 : f32 to vector<8x1xf32>
    %153 = arith.addf %151, %152 : vector<8x1xf32>
    %154 = math.rsqrt %153 : vector<8x1xf32>
    %155 = vector.broadcast %154 : vector<8x1xf32> to vector<8x256xf32>
    %156 = arith.mulf %146, %155 : vector<8x256xf32>
    %157 = arith.truncf %156 : vector<8x256xf32> to vector<8x256xbf16>
    %158 = arith.truncf %139 : vector<1x256xf32> to vector<1x256xbf16>
    %159 = arith.truncf %140 : vector<1x256xf32> to vector<1x256xbf16>
    %160 = vector.broadcast %158 : vector<1x256xbf16> to vector<8x256xbf16>
    %161 = arith.mulf %157, %160 : vector<8x256xbf16>
    %162 = vector.broadcast %159 : vector<1x256xbf16> to vector<8x256xbf16>
    %163 = arith.addf %161, %162 : vector<8x256xbf16>
    %cst_57 = arith.constant 1.000980e-01 : bf16
    %164 = vector.broadcast %cst_57 : bf16 to vector<8x256xbf16>
    %165 = arith.mulf %164, %163 : vector<8x256xbf16>
    %166 = arith.maximumf %163, %165 : vector<8x256xbf16>
    %c0_58 = arith.constant 0 : index
    %c1024 = arith.constant 1024 : index
    %167 = vector.load %arg3[%c0_58, %c1024] : memref<256x2048xbf16, #tpu.memory_space<vmem>>, vector<256x256xbf16>
    %cst_59 = arith.constant dense<0.000000e+00> : vector<8x256xf32>
    %168 = tpu.matmul %166, %167, %cst_59 {dimension_numbers = #tpu.dot_dimension_numbers<[1], [0], [0], [1], [0, 0, 1, 1], [], []>} : vector<8x256xbf16>, vector<256x256xbf16>, vector<8x256xf32> -> vector<8x256xf32>
    %c15 = arith.constant 15 : index
    %c0_60 = arith.constant 0 : index
    %169 = vector.load %arg7[%c15, %c0_60] : memref<40x256xf32, #tpu.memory_space<vmem>>, vector<1x256xf32>
    %170 = vector.broadcast %169 : vector<1x256xf32> to vector<8x256xf32>
    %171 = arith.addf %168, %170 : vector<8x256xf32>
    %c16 = arith.constant 16 : index
    %c0_61 = arith.constant 0 : index
    %172 = vector.load %arg7[%c16, %c0_61] : memref<40x256xf32, #tpu.memory_space<vmem>>, vector<1x256xf32>
    %c17 = arith.constant 17 : index
    %c0_62 = arith.constant 0 : index
    %173 = vector.load %arg7[%c17, %c0_62] : memref<40x256xf32, #tpu.memory_space<vmem>>, vector<1x256xf32>
    %cst_63 = arith.constant dense<0.000000e+00> : vector<8xf32>
    %174 = vector.multi_reduction <add>, %171, %cst_63 [1] : vector<8x256xf32> to vector<8xf32>
    %175 = vector.shape_cast %174 : vector<8xf32> to vector<8x1xf32>
    %cst_64 = arith.constant 2.560000e+02 : f32
    %176 = vector.broadcast %cst_64 : f32 to vector<8x1xf32>
    %177 = arith.divf %175, %176 : vector<8x1xf32>
    %178 = vector.broadcast %177 : vector<8x1xf32> to vector<8x256xf32>
    %179 = arith.subf %171, %178 : vector<8x256xf32>
    %180 = arith.mulf %179, %179 : vector<8x256xf32>
    %cst_65 = arith.constant dense<0.000000e+00> : vector<8xf32>
    %181 = vector.multi_reduction <add>, %180, %cst_65 [1] : vector<8x256xf32> to vector<8xf32>
    %182 = vector.shape_cast %181 : vector<8xf32> to vector<8x1xf32>
    %cst_66 = arith.constant 2.560000e+02 : f32
    %183 = vector.broadcast %cst_66 : f32 to vector<8x1xf32>
    %184 = arith.divf %182, %183 : vector<8x1xf32>
    %cst_67 = arith.constant 9.99999974E-6 : f32
    %185 = vector.broadcast %cst_67 : f32 to vector<8x1xf32>
    %186 = arith.addf %184, %185 : vector<8x1xf32>
    %187 = math.rsqrt %186 : vector<8x1xf32>
    %188 = vector.broadcast %187 : vector<8x1xf32> to vector<8x256xf32>
    %189 = arith.mulf %179, %188 : vector<8x256xf32>
    %190 = arith.truncf %189 : vector<8x256xf32> to vector<8x256xbf16>
    %191 = arith.truncf %172 : vector<1x256xf32> to vector<1x256xbf16>
    %192 = arith.truncf %173 : vector<1x256xf32> to vector<1x256xbf16>
    %193 = vector.broadcast %191 : vector<1x256xbf16> to vector<8x256xbf16>
    %194 = arith.mulf %190, %193 : vector<8x256xbf16>
    %195 = vector.broadcast %192 : vector<1x256xbf16> to vector<8x256xbf16>
    %196 = arith.addf %194, %195 : vector<8x256xbf16>
    %cst_68 = arith.constant 1.000980e-01 : bf16
    %197 = vector.broadcast %cst_68 : bf16 to vector<8x256xbf16>
    %198 = arith.mulf %197, %196 : vector<8x256xbf16>
    %199 = arith.maximumf %196, %198 : vector<8x256xbf16>
    %200 = arith.extf %199 : vector<8x256xbf16> to vector<8x256xf32>
    %c0_69 = arith.constant 0 : index
    %c1280 = arith.constant 1280 : index
    %201 = vector.load %arg3[%c0_69, %c1280] : memref<256x2048xbf16, #tpu.memory_space<vmem>>, vector<256x256xbf16>
    %cst_70 = arith.constant dense<0.000000e+00> : vector<8x256xf32>
    %202 = tpu.matmul %199, %201, %cst_70 {dimension_numbers = #tpu.dot_dimension_numbers<[1], [0], [0], [1], [0, 0, 1, 1], [], []>} : vector<8x256xbf16>, vector<256x256xbf16>, vector<8x256xf32> -> vector<8x256xf32>
    %203 = arith.addf %200, %202 : vector<8x256xf32>
    %c18 = arith.constant 18 : index
    %c0_71 = arith.constant 0 : index
    %204 = vector.load %arg7[%c18, %c0_71] : memref<40x256xf32, #tpu.memory_space<vmem>>, vector<1x256xf32>
    %205 = vector.broadcast %204 : vector<1x256xf32> to vector<8x256xf32>
    %206 = arith.addf %203, %205 : vector<8x256xf32>
    %c0_72 = arith.constant 0 : index
    %c1536 = arith.constant 1536 : index
    %207 = vector.load %arg3[%c0_72, %c1536] : memref<256x2048xbf16, #tpu.memory_space<vmem>>, vector<256x512xbf16>
    %208 = arith.truncf %206 : vector<8x256xf32> to vector<8x256xbf16>
    %cst_73 = arith.constant dense<0.000000e+00> : vector<8x512xf32>
    %209 = tpu.matmul %208, %207, %cst_73 {dimension_numbers = #tpu.dot_dimension_numbers<[1], [0], [0], [1], [0, 0, 1, 1], [], []>} : vector<8x256xbf16>, vector<256x512xbf16>, vector<8x512xf32> -> vector<8x512xf32>
    %210 = vector.extract_strided_slice %209 {offsets = [0, 0], sizes = [8, 256], strides = [1, 1]} : vector<8x512xf32> to vector<8x256xf32>
    %c19 = arith.constant 19 : index
    %c0_74 = arith.constant 0 : index
    %211 = vector.load %arg7[%c19, %c0_74] : memref<40x256xf32, #tpu.memory_space<vmem>>, vector<1x256xf32>
    %212 = vector.broadcast %211 : vector<1x256xf32> to vector<8x256xf32>
    %213 = arith.addf %210, %212 : vector<8x256xf32>
    %c20 = arith.constant 20 : index
    %c0_75 = arith.constant 0 : index
    %214 = vector.load %arg7[%c20, %c0_75] : memref<40x256xf32, #tpu.memory_space<vmem>>, vector<1x256xf32>
    %c21 = arith.constant 21 : index
    %c0_76 = arith.constant 0 : index
    %215 = vector.load %arg7[%c21, %c0_76] : memref<40x256xf32, #tpu.memory_space<vmem>>, vector<1x256xf32>
    %cst_77 = arith.constant dense<0.000000e+00> : vector<8xf32>
    %216 = vector.multi_reduction <add>, %213, %cst_77 [1] : vector<8x256xf32> to vector<8xf32>
    %217 = vector.shape_cast %216 : vector<8xf32> to vector<8x1xf32>
    %cst_78 = arith.constant 2.560000e+02 : f32
    %218 = vector.broadcast %cst_78 : f32 to vector<8x1xf32>
    %219 = arith.divf %217, %218 : vector<8x1xf32>
    %220 = vector.broadcast %219 : vector<8x1xf32> to vector<8x256xf32>
    %221 = arith.subf %213, %220 : vector<8x256xf32>
    %222 = arith.mulf %221, %221 : vector<8x256xf32>
    %cst_79 = arith.constant dense<0.000000e+00> : vector<8xf32>
    %223 = vector.multi_reduction <add>, %222, %cst_79 [1] : vector<8x256xf32> to vector<8xf32>
    %224 = vector.shape_cast %223 : vector<8xf32> to vector<8x1xf32>
    %cst_80 = arith.constant 2.560000e+02 : f32
    %225 = vector.broadcast %cst_80 : f32 to vector<8x1xf32>
    %226 = arith.divf %224, %225 : vector<8x1xf32>
    %cst_81 = arith.constant 9.99999974E-6 : f32
    %227 = vector.broadcast %cst_81 : f32 to vector<8x1xf32>
    %228 = arith.addf %226, %227 : vector<8x1xf32>
    %229 = math.rsqrt %228 : vector<8x1xf32>
    %230 = vector.broadcast %229 : vector<8x1xf32> to vector<8x256xf32>
    %231 = arith.mulf %221, %230 : vector<8x256xf32>
    %232 = arith.truncf %231 : vector<8x256xf32> to vector<8x256xbf16>
    %233 = arith.truncf %214 : vector<1x256xf32> to vector<1x256xbf16>
    %234 = arith.truncf %215 : vector<1x256xf32> to vector<1x256xbf16>
    %235 = vector.broadcast %233 : vector<1x256xbf16> to vector<8x256xbf16>
    %236 = arith.mulf %232, %235 : vector<8x256xbf16>
    %237 = vector.broadcast %234 : vector<1x256xbf16> to vector<8x256xbf16>
    %238 = arith.addf %236, %237 : vector<8x256xbf16>
    %cst_82 = arith.constant 1.000980e-01 : bf16
    %239 = vector.broadcast %cst_82 : bf16 to vector<8x256xbf16>
    %240 = arith.mulf %239, %238 : vector<8x256xbf16>
    %241 = arith.maximumf %238, %240 : vector<8x256xbf16>
    %242 = vector.extract_strided_slice %209 {offsets = [0, 256], sizes = [8, 256], strides = [1, 1]} : vector<8x512xf32> to vector<8x256xf32>
    %c22 = arith.constant 22 : index
    %c0_83 = arith.constant 0 : index
    %243 = vector.load %arg7[%c22, %c0_83] : memref<40x256xf32, #tpu.memory_space<vmem>>, vector<1x256xf32>
    %244 = vector.broadcast %243 : vector<1x256xf32> to vector<8x256xf32>
    %245 = arith.addf %242, %244 : vector<8x256xf32>
    %c23 = arith.constant 23 : index
    %c0_84 = arith.constant 0 : index
    %246 = vector.load %arg7[%c23, %c0_84] : memref<40x256xf32, #tpu.memory_space<vmem>>, vector<1x256xf32>
    %c24 = arith.constant 24 : index
    %c0_85 = arith.constant 0 : index
    %247 = vector.load %arg7[%c24, %c0_85] : memref<40x256xf32, #tpu.memory_space<vmem>>, vector<1x256xf32>
    %cst_86 = arith.constant dense<0.000000e+00> : vector<8xf32>
    %248 = vector.multi_reduction <add>, %245, %cst_86 [1] : vector<8x256xf32> to vector<8xf32>
    %249 = vector.shape_cast %248 : vector<8xf32> to vector<8x1xf32>
    %cst_87 = arith.constant 2.560000e+02 : f32
    %250 = vector.broadcast %cst_87 : f32 to vector<8x1xf32>
    %251 = arith.divf %249, %250 : vector<8x1xf32>
    %252 = vector.broadcast %251 : vector<8x1xf32> to vector<8x256xf32>
    %253 = arith.subf %245, %252 : vector<8x256xf32>
    %254 = arith.mulf %253, %253 : vector<8x256xf32>
    %cst_88 = arith.constant dense<0.000000e+00> : vector<8xf32>
    %255 = vector.multi_reduction <add>, %254, %cst_88 [1] : vector<8x256xf32> to vector<8xf32>
    %256 = vector.shape_cast %255 : vector<8xf32> to vector<8x1xf32>
    %cst_89 = arith.constant 2.560000e+02 : f32
    %257 = vector.broadcast %cst_89 : f32 to vector<8x1xf32>
    %258 = arith.divf %256, %257 : vector<8x1xf32>
    %cst_90 = arith.constant 9.99999974E-6 : f32
    %259 = vector.broadcast %cst_90 : f32 to vector<8x1xf32>
    %260 = arith.addf %258, %259 : vector<8x1xf32>
    %261 = math.rsqrt %260 : vector<8x1xf32>
    %262 = vector.broadcast %261 : vector<8x1xf32> to vector<8x256xf32>
    %263 = arith.mulf %253, %262 : vector<8x256xf32>
    %264 = arith.truncf %263 : vector<8x256xf32> to vector<8x256xbf16>
    %265 = arith.truncf %246 : vector<1x256xf32> to vector<1x256xbf16>
    %266 = arith.truncf %247 : vector<1x256xf32> to vector<1x256xbf16>
    %267 = vector.broadcast %265 : vector<1x256xbf16> to vector<8x256xbf16>
    %268 = arith.mulf %264, %267 : vector<8x256xbf16>
    %269 = vector.broadcast %266 : vector<1x256xbf16> to vector<8x256xbf16>
    %270 = arith.addf %268, %269 : vector<8x256xbf16>
    %cst_91 = arith.constant 1.000980e-01 : bf16
    %271 = vector.broadcast %cst_91 : bf16 to vector<8x256xbf16>
    %272 = arith.mulf %271, %270 : vector<8x256xbf16>
    %273 = arith.maximumf %270, %272 : vector<8x256xbf16>
    %c0_92 = arith.constant 0 : index
    %c0_93 = arith.constant 0 : index
    %c0_94 = arith.constant 0 : index
    %274 = vector.load %arg4[%c0_92, %c0_93, %c0_94] : memref<2x256x128xbf16, #tpu.memory_space<vmem>>, vector<1x256x128xbf16>
    %275 = vector.shape_cast %274 : vector<1x256x128xbf16> to vector<256x128xbf16>
    %cst_95 = arith.constant dense<0.000000e+00> : vector<8x128xf32>
    %276 = tpu.matmul %241, %275, %cst_95 {dimension_numbers = #tpu.dot_dimension_numbers<[1], [0], [0], [1], [0, 0, 1, 1], [], []>} : vector<8x256xbf16>, vector<256x128xbf16>, vector<8x128xf32> -> vector<8x128xf32>
    %c25 = arith.constant 25 : index
    %c0_96 = arith.constant 0 : index
    %277 = vector.load %arg7[%c25, %c0_96] : memref<40x256xf32, #tpu.memory_space<vmem>>, vector<1x128xf32>
    %278 = vector.broadcast %277 : vector<1x128xf32> to vector<8x128xf32>
    %279 = arith.addf %276, %278 : vector<8x128xf32>
    %c26 = arith.constant 26 : index
    %c0_97 = arith.constant 0 : index
    %280 = vector.load %arg7[%c26, %c0_97] : memref<40x256xf32, #tpu.memory_space<vmem>>, vector<1x128xf32>
    %c27 = arith.constant 27 : index
    %c0_98 = arith.constant 0 : index
    %281 = vector.load %arg7[%c27, %c0_98] : memref<40x256xf32, #tpu.memory_space<vmem>>, vector<1x128xf32>
    %cst_99 = arith.constant dense<0.000000e+00> : vector<8xf32>
    %282 = vector.multi_reduction <add>, %279, %cst_99 [1] : vector<8x128xf32> to vector<8xf32>
    %283 = vector.shape_cast %282 : vector<8xf32> to vector<8x1xf32>
    %cst_100 = arith.constant 1.280000e+02 : f32
    %284 = vector.broadcast %cst_100 : f32 to vector<8x1xf32>
    %285 = arith.divf %283, %284 : vector<8x1xf32>
    %286 = vector.broadcast %285 : vector<8x1xf32> to vector<8x128xf32>
    %287 = arith.subf %279, %286 : vector<8x128xf32>
    %288 = arith.mulf %287, %287 : vector<8x128xf32>
    %cst_101 = arith.constant dense<0.000000e+00> : vector<8xf32>
    %289 = vector.multi_reduction <add>, %288, %cst_101 [1] : vector<8x128xf32> to vector<8xf32>
    %290 = vector.shape_cast %289 : vector<8xf32> to vector<8x1xf32>
    %cst_102 = arith.constant 1.280000e+02 : f32
    %291 = vector.broadcast %cst_102 : f32 to vector<8x1xf32>
    %292 = arith.divf %290, %291 : vector<8x1xf32>
    %cst_103 = arith.constant 9.99999974E-6 : f32
    %293 = vector.broadcast %cst_103 : f32 to vector<8x1xf32>
    %294 = arith.addf %292, %293 : vector<8x1xf32>
    %295 = math.rsqrt %294 : vector<8x1xf32>
    %296 = vector.broadcast %295 : vector<8x1xf32> to vector<8x128xf32>
    %297 = arith.mulf %287, %296 : vector<8x128xf32>
    %298 = arith.truncf %297 : vector<8x128xf32> to vector<8x128xbf16>
    %299 = arith.truncf %280 : vector<1x128xf32> to vector<1x128xbf16>
    %300 = arith.truncf %281 : vector<1x128xf32> to vector<1x128xbf16>
    %301 = vector.broadcast %299 : vector<1x128xbf16> to vector<8x128xbf16>
    %302 = arith.mulf %298, %301 : vector<8x128xbf16>
    %303 = vector.broadcast %300 : vector<1x128xbf16> to vector<8x128xbf16>
    %304 = arith.addf %302, %303 : vector<8x128xbf16>
    %cst_104 = arith.constant 1.000980e-01 : bf16
    %305 = vector.broadcast %cst_104 : bf16 to vector<8x128xbf16>
    %306 = arith.mulf %305, %304 : vector<8x128xbf16>
    %307 = arith.maximumf %304, %306 : vector<8x128xbf16>
    %c1_105 = arith.constant 1 : index
    %c0_106 = arith.constant 0 : index
    %c0_107 = arith.constant 0 : index
    %308 = vector.load %arg4[%c1_105, %c0_106, %c0_107] : memref<2x256x128xbf16, #tpu.memory_space<vmem>>, vector<1x256x128xbf16>
    %309 = vector.shape_cast %308 : vector<1x256x128xbf16> to vector<256x128xbf16>
    %cst_108 = arith.constant dense<0.000000e+00> : vector<8x128xf32>
    %310 = tpu.matmul %273, %309, %cst_108 {dimension_numbers = #tpu.dot_dimension_numbers<[1], [0], [0], [1], [0, 0, 1, 1], [], []>} : vector<8x256xbf16>, vector<256x128xbf16>, vector<8x128xf32> -> vector<8x128xf32>
    %c28 = arith.constant 28 : index
    %c0_109 = arith.constant 0 : index
    %311 = vector.load %arg7[%c28, %c0_109] : memref<40x256xf32, #tpu.memory_space<vmem>>, vector<1x128xf32>
    %312 = vector.broadcast %311 : vector<1x128xf32> to vector<8x128xf32>
    %313 = arith.addf %310, %312 : vector<8x128xf32>
    %c29 = arith.constant 29 : index
    %c0_110 = arith.constant 0 : index
    %314 = vector.load %arg7[%c29, %c0_110] : memref<40x256xf32, #tpu.memory_space<vmem>>, vector<1x128xf32>
    %c30 = arith.constant 30 : index
    %c0_111 = arith.constant 0 : index
    %315 = vector.load %arg7[%c30, %c0_111] : memref<40x256xf32, #tpu.memory_space<vmem>>, vector<1x128xf32>
    %cst_112 = arith.constant dense<0.000000e+00> : vector<8xf32>
    %316 = vector.multi_reduction <add>, %313, %cst_112 [1] : vector<8x128xf32> to vector<8xf32>
    %317 = vector.shape_cast %316 : vector<8xf32> to vector<8x1xf32>
    %cst_113 = arith.constant 1.280000e+02 : f32
    %318 = vector.broadcast %cst_113 : f32 to vector<8x1xf32>
    %319 = arith.divf %317, %318 : vector<8x1xf32>
    %320 = vector.broadcast %319 : vector<8x1xf32> to vector<8x128xf32>
    %321 = arith.subf %313, %320 : vector<8x128xf32>
    %322 = arith.mulf %321, %321 : vector<8x128xf32>
    %cst_114 = arith.constant dense<0.000000e+00> : vector<8xf32>
    %323 = vector.multi_reduction <add>, %322, %cst_114 [1] : vector<8x128xf32> to vector<8xf32>
    %324 = vector.shape_cast %323 : vector<8xf32> to vector<8x1xf32>
    %cst_115 = arith.constant 1.280000e+02 : f32
    %325 = vector.broadcast %cst_115 : f32 to vector<8x1xf32>
    %326 = arith.divf %324, %325 : vector<8x1xf32>
    %cst_116 = arith.constant 9.99999974E-6 : f32
    %327 = vector.broadcast %cst_116 : f32 to vector<8x1xf32>
    %328 = arith.addf %326, %327 : vector<8x1xf32>
    %329 = math.rsqrt %328 : vector<8x1xf32>
    %330 = vector.broadcast %329 : vector<8x1xf32> to vector<8x128xf32>
    %331 = arith.mulf %321, %330 : vector<8x128xf32>
    %332 = arith.truncf %331 : vector<8x128xf32> to vector<8x128xbf16>
    %333 = arith.truncf %314 : vector<1x128xf32> to vector<1x128xbf16>
    %334 = arith.truncf %315 : vector<1x128xf32> to vector<1x128xbf16>
    %335 = vector.broadcast %333 : vector<1x128xbf16> to vector<8x128xbf16>
    %336 = arith.mulf %332, %335 : vector<8x128xbf16>
    %337 = vector.broadcast %334 : vector<1x128xbf16> to vector<8x128xbf16>
    %338 = arith.addf %336, %337 : vector<8x128xbf16>
    %cst_117 = arith.constant 1.000980e-01 : bf16
    %339 = vector.broadcast %cst_117 : bf16 to vector<8x128xbf16>
    %340 = arith.mulf %339, %338 : vector<8x128xbf16>
    %341 = arith.maximumf %338, %340 : vector<8x128xbf16>
    %c0_118 = arith.constant 0 : index
    %c0_119 = arith.constant 0 : index
    %c0_120 = arith.constant 0 : index
    %342 = vector.load %arg5[%c0_118, %c0_119, %c0_120] : memref<2x128x64xbf16, #tpu.memory_space<vmem>>, vector<1x128x64xbf16>
    %343 = vector.shape_cast %342 : vector<1x128x64xbf16> to vector<128x64xbf16>
    %cst_121 = arith.constant dense<0.000000e+00> : vector<8x64xf32>
    %344 = tpu.matmul %307, %343, %cst_121 {dimension_numbers = #tpu.dot_dimension_numbers<[1], [0], [0], [1], [0, 0, 1, 1], [], []>} : vector<8x128xbf16>, vector<128x64xbf16>, vector<8x64xf32> -> vector<8x64xf32>
    %c31 = arith.constant 31 : index
    %c0_122 = arith.constant 0 : index
    %345 = vector.load %arg7[%c31, %c0_122] : memref<40x256xf32, #tpu.memory_space<vmem>>, vector<1x64xf32>
    %346 = vector.broadcast %345 : vector<1x64xf32> to vector<8x64xf32>
    %347 = arith.addf %344, %346 : vector<8x64xf32>
    %c32 = arith.constant 32 : index
    %c0_123 = arith.constant 0 : index
    %348 = vector.load %arg7[%c32, %c0_123] : memref<40x256xf32, #tpu.memory_space<vmem>>, vector<1x64xf32>
    %c33 = arith.constant 33 : index
    %c0_124 = arith.constant 0 : index
    %349 = vector.load %arg7[%c33, %c0_124] : memref<40x256xf32, #tpu.memory_space<vmem>>, vector<1x64xf32>
    %cst_125 = arith.constant dense<0.000000e+00> : vector<8xf32>
    %350 = vector.multi_reduction <add>, %347, %cst_125 [1] : vector<8x64xf32> to vector<8xf32>
    %351 = vector.shape_cast %350 : vector<8xf32> to vector<8x1xf32>
    %cst_126 = arith.constant 6.400000e+01 : f32
    %352 = vector.broadcast %cst_126 : f32 to vector<8x1xf32>
    %353 = arith.divf %351, %352 : vector<8x1xf32>
    %354 = vector.broadcast %353 : vector<8x1xf32> to vector<8x64xf32>
    %355 = arith.subf %347, %354 : vector<8x64xf32>
    %356 = arith.mulf %355, %355 : vector<8x64xf32>
    %cst_127 = arith.constant dense<0.000000e+00> : vector<8xf32>
    %357 = vector.multi_reduction <add>, %356, %cst_127 [1] : vector<8x64xf32> to vector<8xf32>
    %358 = vector.shape_cast %357 : vector<8xf32> to vector<8x1xf32>
    %cst_128 = arith.constant 6.400000e+01 : f32
    %359 = vector.broadcast %cst_128 : f32 to vector<8x1xf32>
    %360 = arith.divf %358, %359 : vector<8x1xf32>
    %cst_129 = arith.constant 9.99999974E-6 : f32
    %361 = vector.broadcast %cst_129 : f32 to vector<8x1xf32>
    %362 = arith.addf %360, %361 : vector<8x1xf32>
    %363 = math.rsqrt %362 : vector<8x1xf32>
    %364 = vector.broadcast %363 : vector<8x1xf32> to vector<8x64xf32>
    %365 = arith.mulf %355, %364 : vector<8x64xf32>
    %366 = arith.truncf %365 : vector<8x64xf32> to vector<8x64xbf16>
    %367 = arith.truncf %348 : vector<1x64xf32> to vector<1x64xbf16>
    %368 = arith.truncf %349 : vector<1x64xf32> to vector<1x64xbf16>
    %369 = vector.broadcast %367 : vector<1x64xbf16> to vector<8x64xbf16>
    %370 = arith.mulf %366, %369 : vector<8x64xbf16>
    %371 = vector.broadcast %368 : vector<1x64xbf16> to vector<8x64xbf16>
    %372 = arith.addf %370, %371 : vector<8x64xbf16>
    %cst_130 = arith.constant 1.000980e-01 : bf16
    %373 = vector.broadcast %cst_130 : bf16 to vector<8x64xbf16>
    %374 = arith.mulf %373, %372 : vector<8x64xbf16>
    %375 = arith.maximumf %372, %374 : vector<8x64xbf16>
    %c1_131 = arith.constant 1 : index
    %c0_132 = arith.constant 0 : index
    %c0_133 = arith.constant 0 : index
    %376 = vector.load %arg5[%c1_131, %c0_132, %c0_133] : memref<2x128x64xbf16, #tpu.memory_space<vmem>>, vector<1x128x64xbf16>
    %377 = vector.shape_cast %376 : vector<1x128x64xbf16> to vector<128x64xbf16>
    %cst_134 = arith.constant dense<0.000000e+00> : vector<8x64xf32>
    %378 = tpu.matmul %341, %377, %cst_134 {dimension_numbers = #tpu.dot_dimension_numbers<[1], [0], [0], [1], [0, 0, 1, 1], [], []>} : vector<8x128xbf16>, vector<128x64xbf16>, vector<8x64xf32> -> vector<8x64xf32>
    %c34 = arith.constant 34 : index
    %c0_135 = arith.constant 0 : index
    %379 = vector.load %arg7[%c34, %c0_135] : memref<40x256xf32, #tpu.memory_space<vmem>>, vector<1x64xf32>
    %380 = vector.broadcast %379 : vector<1x64xf32> to vector<8x64xf32>
    %381 = arith.addf %378, %380 : vector<8x64xf32>
    %c35 = arith.constant 35 : index
    %c0_136 = arith.constant 0 : index
    %382 = vector.load %arg7[%c35, %c0_136] : memref<40x256xf32, #tpu.memory_space<vmem>>, vector<1x64xf32>
    %c36 = arith.constant 36 : index
    %c0_137 = arith.constant 0 : index
    %383 = vector.load %arg7[%c36, %c0_137] : memref<40x256xf32, #tpu.memory_space<vmem>>, vector<1x64xf32>
    %cst_138 = arith.constant dense<0.000000e+00> : vector<8xf32>
    %384 = vector.multi_reduction <add>, %381, %cst_138 [1] : vector<8x64xf32> to vector<8xf32>
    %385 = vector.shape_cast %384 : vector<8xf32> to vector<8x1xf32>
    %cst_139 = arith.constant 6.400000e+01 : f32
    %386 = vector.broadcast %cst_139 : f32 to vector<8x1xf32>
    %387 = arith.divf %385, %386 : vector<8x1xf32>
    %388 = vector.broadcast %387 : vector<8x1xf32> to vector<8x64xf32>
    %389 = arith.subf %381, %388 : vector<8x64xf32>
    %390 = arith.mulf %389, %389 : vector<8x64xf32>
    %cst_140 = arith.constant dense<0.000000e+00> : vector<8xf32>
    %391 = vector.multi_reduction <add>, %390, %cst_140 [1] : vector<8x64xf32> to vector<8xf32>
    %392 = vector.shape_cast %391 : vector<8xf32> to vector<8x1xf32>
    %cst_141 = arith.constant 6.400000e+01 : f32
    %393 = vector.broadcast %cst_141 : f32 to vector<8x1xf32>
    %394 = arith.divf %392, %393 : vector<8x1xf32>
    %cst_142 = arith.constant 9.99999974E-6 : f32
    %395 = vector.broadcast %cst_142 : f32 to vector<8x1xf32>
    %396 = arith.addf %394, %395 : vector<8x1xf32>
    %397 = math.rsqrt %396 : vector<8x1xf32>
    %398 = vector.broadcast %397 : vector<8x1xf32> to vector<8x64xf32>
    %399 = arith.mulf %389, %398 : vector<8x64xf32>
    %400 = arith.truncf %399 : vector<8x64xf32> to vector<8x64xbf16>
    %401 = arith.truncf %382 : vector<1x64xf32> to vector<1x64xbf16>
    %402 = arith.truncf %383 : vector<1x64xf32> to vector<1x64xbf16>
    %403 = vector.broadcast %401 : vector<1x64xbf16> to vector<8x64xbf16>
    %404 = arith.mulf %400, %403 : vector<8x64xbf16>
    %405 = vector.broadcast %402 : vector<1x64xbf16> to vector<8x64xbf16>
    %406 = arith.addf %404, %405 : vector<8x64xbf16>
    %cst_143 = arith.constant 1.000980e-01 : bf16
    %407 = vector.broadcast %cst_143 : bf16 to vector<8x64xbf16>
    %408 = arith.mulf %407, %406 : vector<8x64xbf16>
    %409 = arith.maximumf %406, %408 : vector<8x64xbf16>
    %410 = tpu.concatenate %375, %409 in 1 : vector<8x64xbf16>, vector<8x64xbf16> -> vector<8x128xbf16>
    %c0_144 = arith.constant 0 : index
    %c0_145 = arith.constant 0 : index
    %411 = vector.load %arg6[%c0_144, %c0_145] : memref<128x128xbf16, #tpu.memory_space<vmem>>, vector<128x128xbf16>
    %cst_146 = arith.constant dense<0.000000e+00> : vector<8x128xf32>
    %412 = tpu.matmul %410, %411, %cst_146 {dimension_numbers = #tpu.dot_dimension_numbers<[1], [0], [0], [1], [0, 0, 1, 1], [], []>} : vector<8x128xbf16>, vector<128x128xbf16>, vector<8x128xf32> -> vector<8x128xf32>
    %c37 = arith.constant 37 : index
    %c0_147 = arith.constant 0 : index
    %413 = vector.load %arg7[%c37, %c0_147] : memref<40x256xf32, #tpu.memory_space<vmem>>, vector<1x128xf32>
    %414 = vector.broadcast %413 : vector<1x128xf32> to vector<8x128xf32>
    %415 = arith.addf %412, %414 : vector<8x128xf32>
    %416 = tpu.iota {dimensions = array<i32: 1>} : vector<8x128xi32>
    %c8_i32 = arith.constant 8 : i32
    %417 = vector.broadcast %c8_i32 : i32 to vector<8x128xi32>
    %418 = arith.cmpi slt, %416, %417 : vector<8x128xi32>
    %419 = math.tanh %415 : vector<8x128xf32>
    %420 = arith.select %418, %419, %415 : vector<8x128xi1>, vector<8x128xf32>
    %c0_148 = arith.constant 0 : index
    %c0_149 = arith.constant 0 : index
    %421 = vector.load %arg8[%c0_148, %c0_149] : memref<8x128xf32, #tpu.memory_space<vmem>>, vector<8x128xf32>
    tpu.vector_store %arg8[%c0_148, %c0_149], %420 {strides = array<i32>} : memref<8x128xf32, #tpu.memory_space<vmem>>, vector<8x128xf32>,
    return
  }
  func.func @transform_0(%arg0: i32) -> (i32, i32) {
    %c0_i32 = arith.constant 0 : i32
    %c0_i32_0 = arith.constant 0 : i32
    return %arg0, %c0_i32 : i32, i32
  }
  func.func @transform_1(%arg0: i32) -> (i32, i32) {
    %c0_i32 = arith.constant 0 : i32
    %c0_i32_0 = arith.constant 0 : i32
    %c0_i32_1 = arith.constant 0 : i32
    return %c0_i32, %c0_i32_0 : i32, i32
  }
  func.func @transform_2(%arg0: i32) -> (i32, i32) {
    %c0_i32 = arith.constant 0 : i32
    %c0_i32_0 = arith.constant 0 : i32
    %c0_i32_1 = arith.constant 0 : i32
    return %c0_i32, %c0_i32_0 : i32, i32
  }
  func.func @transform_3(%arg0: i32) -> (i32, i32, i32) {
    %c0_i32 = arith.constant 0 : i32
    %c0_i32_0 = arith.constant 0 : i32
    %c0_i32_1 = arith.constant 0 : i32
    %c0_i32_2 = arith.constant 0 : i32
    return %c0_i32, %c0_i32_0, %c0_i32_1 : i32, i32, i32
  }
  func.func @transform_4(%arg0: i32) -> (i32, i32, i32) {
    %c0_i32 = arith.constant 0 : i32
    %c0_i32_0 = arith.constant 0 : i32
    %c0_i32_1 = arith.constant 0 : i32
    %c0_i32_2 = arith.constant 0 : i32
    return %c0_i32, %c0_i32_0, %c0_i32_1 : i32, i32, i32
  }
  func.func @transform_5(%arg0: i32) -> (i32, i32) {
    %c0_i32 = arith.constant 0 : i32
    %c0_i32_0 = arith.constant 0 : i32
    %c0_i32_1 = arith.constant 0 : i32
    return %c0_i32, %c0_i32_0 : i32, i32
  }
  func.func @transform_6(%arg0: i32) -> (i32, i32) {
    %c0_i32 = arith.constant 0 : i32
    %c0_i32_0 = arith.constant 0 : i32
    %c0_i32_1 = arith.constant 0 : i32
    return %c0_i32, %c0_i32_0 : i32, i32
  }
  func.func @transform_7(%arg0: i32) -> (i32, i32) {
    %c0_i32 = arith.constant 0 : i32
    %c0_i32_0 = arith.constant 0 : i32
    return %arg0, %c0_i32 : i32, i32
  }
}

</mosaic_0001>

<llo_original>
// kernel: tpu_custom_call.1
$region0: #{tpu_custom_call.1}
  #allocation0 [shape = 'u32[]', space=smem, size = 0x4, offset = 0x4, fixed_abs, tag = 'smem constant byte address 0x4 - core index']
  #allocation1 [shape = 'u32[144,128]{1,0:T(1,128)}', space=vmem, size = 0x12000, scoped, tag = 'internal scratch']
  %s0 = inlined_call_operand.vmem [shape: f32[8,32], index: 0, kind: input, shape index: {}]
  %s1 = inlined_call_operand.vmem [shape: bf16[32,256], index: 1, kind: input, shape index: {}]
  %s2 = inlined_call_operand.hbm [shape: bf16[256,2048], index: 2, kind: input, shape index: {}]
  %s3 = inlined_call_operand.hbm [shape: bf16[2,256,128], index: 3, kind: input, shape index: {}]
  %s4 = inlined_call_operand.vmem [shape: bf16[2,128,64], index: 4, kind: input, shape index: {}]
  %s5 = inlined_call_operand.vmem [shape: bf16[128,128], index: 5, kind: input, shape index: {}]
  %s6 = inlined_call_operand.vmem [shape: f32[40,256], index: 6, kind: input, shape index: {}]
  %s7 = inlined_call_operand.hbm [shape: f32[8,128], index: 7, kind: output, shape index: {}]
  %s8 = sld [smem:[#allocation0]]
  $region46: #{tpu_custom_call.1} parent=0
    _
  %s10 = ssub.s32 1, %s8
  %s11 = scalar_select 0, %s10, %s8
  $region1: #{tpu_custom_call.1} parent=0
    #allocation2 [shape = 'u8[1048576]{0}', space=vmem, size = 0x100000, scoped, tag = 'input window, operand 2, single buffered']
    #allocation3 [shape = 's32[1]{0}', space=sflag, size = 0x4, scoped, tag = 'scoped memory for tpu_custom_call.1']
    #allocation4 [shape = 's32[1]{0}', space=sflag, size = 0x4, scoped, tag = 'scoped memory for tpu_custom_call.1']
    #allocation5 [shape = 'u8[131072]{0}', space=vmem, size = 0x20000, scoped, tag = 'input window, operand 3, single buffered']
    #allocation6 [shape = 's32[1]{0}', space=sflag, size = 0x4, scoped, tag = 'scoped memory for tpu_custom_call.1']
    #allocation7 [shape = 'u8[4096]{0}', space=vmem, size = 0x1000, scoped, tag = 'output window, operand 0, single buffered']
    %12 = vsyncpa [#allocation3], 0
    %13 = vsyncpa [#allocation6], 0
    %14 = vsyncpa [#allocation4], 0
    // Predicated region
    $region2: #{tpu_custom_call.1} parent=1 // pred_check
      _
    $region3: #{tpu_custom_call.1} parent=1 // pred_check_branch
      %16 = sbr.rel (0) target = $region5
    $region4: #{tpu_custom_call.1} parent=1 // pred_region
      _
    $region5: #{tpu_custom_call.1} parent=1 // pred_fallthru
      _
    // Predicated region
    $region6: #{tpu_custom_call.1} parent=1 // pred_check
      _
    $region7: #{tpu_custom_call.1} parent=1 // pred_check_branch
      %18 = sbr.rel (0) target = $region9
    $region8: #{tpu_custom_call.1} parent=1 // pred_region
      _
    $region9: #{tpu_custom_call.1} parent=1 // pred_fallthru
      _
    // Predicated region
    $region10: #{tpu_custom_call.1} parent=1 // pred_check
      _
    $region11: #{tpu_custom_call.1} parent=1 // pred_check_branch
      %20 = sbr.rel (0) target = $region13
    $region12: #{tpu_custom_call.1} parent=1 // pred_region
      %s22 = ssub.s32 32768, 32768
      %23 = vsyncadd [#allocation3], %s22
      %s24 = sshll.u32 [#allocation2], 4
      %s25 = int_to_ptr.vmem [resolvable:$true] %s24
      %30 = dma.hbm_to_vmem [thread:$0]  %s2, 32768, %s25, [#allocation3], 1024, 1024, 64
    $region13: #{tpu_custom_call.1} parent=1 // pred_fallthru
      _
    // Predicated region
    $region14: #{tpu_custom_call.1} parent=1 // pred_check
      _
    $region15: #{tpu_custom_call.1} parent=1 // pred_check_branch
      %32 = sbr.rel (0) target = $region17
    $region16: #{tpu_custom_call.1} parent=1 // pred_region
      %s34 = ssub.s32 4096, 4096
      %35 = vsyncadd [#allocation6], %s34
      %s36 = sshll.u32 [#allocation5], 4
      %s37 = int_to_ptr.vmem [resolvable:$true] %s36
      %42 = dma.hbm_to_vmem [thread:$0]  %s3, 4096, %s37, [#allocation6], 64, 64, 4
    $region17: #{tpu_custom_call.1} parent=1 // pred_fallthru
      _
    // Predicated region
    $region18: #{tpu_custom_call.1} parent=1 // pred_check
      _
    $region19: #{tpu_custom_call.1} parent=1 // pred_check_branch
      %44 = sbr.rel (0) target = $region21
    $region20: #{tpu_custom_call.1} parent=1 // pred_region
      _
    $region21: #{tpu_custom_call.1} parent=1 // pred_fallthru
      _
    // Predicated region
    $region22: #{tpu_custom_call.1} parent=1 // pred_check
      _
    $region23: #{tpu_custom_call.1} parent=1 // pred_check_branch
      %46 = sbr.rel (0) target = $region25
    $region24: #{tpu_custom_call.1} parent=1 // pred_region
      _
    $region25: #{tpu_custom_call.1} parent=1 // pred_fallthru
      _
    // Predicated region
    $region26: #{tpu_custom_call.1} parent=1 // pred_check
      _
    $region27: #{tpu_custom_call.1} parent=1 // pred_check_branch
      %48 = sbr.rel (0) target = $region29
    $region28: #{tpu_custom_call.1} parent=1 // pred_region
      _
    $region29: #{tpu_custom_call.1} parent=1 // pred_fallthru
      _
    // Predicated region
    $region30: #{tpu_custom_call.1} parent=1 // pred_check
      _
    $region31: #{tpu_custom_call.1} parent=1 // pred_check_branch
      %50 = sbr.rel (0) target = $region33
    $region32: #{tpu_custom_call.1} parent=1 // pred_region
      %51 = dma.done [#allocation3], 32768
    $region33: #{tpu_custom_call.1} parent=1 // pred_fallthru
      _
    // Predicated region
    $region34: #{tpu_custom_call.1} parent=1 // pred_check
      _
    $region35: #{tpu_custom_call.1} parent=1 // pred_check_branch
      %53 = sbr.rel (0) target = $region37
    $region36: #{tpu_custom_call.1} parent=1 // pred_region
      %54 = dma.done [#allocation6], 4096
    $region37: #{tpu_custom_call.1} parent=1 // pred_fallthru
      _
    %v57 = vld [vmem:[%s0] sm:$0xff]
    %v58 = vld [vmem:[%s1] sm:$0xff]
    %v59 = vld [vmem:[%s1 + $0x8] sm:$0xff]
    %v60 = vld [vmem:[%s1 + $0x10] sm:$0xff]
    %v61 = vld [vmem:[%s1 + $0x18] sm:$0xff]
    %v62 = vpack.c.bf16 %v57, %v57
    %v63 = vld [vmem:[%s6] ss:$8 sm:$0x3]
    %v65 = vlaneseq
    %v66 = vshrl.u32 %v65, 7
    %v67 = vsub.s32 0, %v66
    %v68 = vrot.slane %v63, %v67
    %v69 = vlaneseq
    %v70 = vshrl.u32 %v69, 7
    %v71 = vsub.s32 1, %v70
    %v72 = vrot.slane %v63, %v71
    %v79 = vunpack.c.l.b16 %v58
    %v80 = vunpack.c.h.b16 %v58
    %v81 = vunpack.c.l.b16 %v59
    %v82 = vunpack.c.h.b16 %v59
    %v83 = vunpack.c.l.b16 %v60
    %v84 = vunpack.c.h.b16 %v60
    %v85 = vunpack.c.l.b16 %v61
    %v86 = vunpack.c.h.b16 %v61
    %v87 = vpack.c.b16 %v81, %v79
    %v88 = vpack.c.b16 %v82, %v80
    %v89 = vpack.c.b16 %v85, %v83
    %v90 = vpack.c.b16 %v86, %v84
    %vm95 = vcmask 261120
    %v97 = vsel %vm95, %v62, 0
    %99 = vmatprep.subr.bf16.mxu0 %v88
    %100 = vmatpush1.bf16.msra.mxu0 %v87
    %101 = vmatprep.subr.bf16.mxu0 %v90
    %102 = vmatpush1.bf16.msra.mxu0 %v89
    %103 = vmatprep.subr.bf16.mxu0 0
    %104 = vmatpush1.bf16.msra.mxu0 0
    %105 = vmatprep.subr.bf16.mxu0 0
    %106 = vmatpush1.bf16.msra.mxu0 0
    %107 = vmatprep.subr.bf16.mxu0 0
    %108 = vmatpush1.bf16.msra.mxu0 0
    %109 = vmatprep.subr.bf16.mxu0 0
    %110 = vmatpush1.bf16.msra.mxu0 0
    %111 = vmatprep.subr.bf16.mxu0 0
    %112 = vmatpush1.bf16.msra.mxu0 0
    %113 = vmatprep.subr.bf16.mxu0 0
    %114 = vmatpush1.bf16.msra.mxu0 0
    %115 = vmatprep.subr.bf16.mxu0 0
    %116 = vmatpush1.bf16.msra.mxu0 0
    %117 = vmatprep.subr.bf16.mxu0 0
    %118 = vmatpush1.bf16.msra.mxu0 0
    %119 = vmatprep.subr.bf16.mxu0 0
    %120 = vmatpush1.bf16.msra.mxu0 0
    %121 = vmatprep.subr.bf16.mxu0 0
    %122 = vmatpush1.bf16.msra.mxu0 0
    %123 = vmatprep.subr.bf16.mxu0 0
    %124 = vmatpush1.bf16.msra.mxu0 0
    %125 = vmatprep.subr.bf16.mxu0 0
    %126 = vmatpush1.bf16.msra.mxu0 0
    %127 = vmatprep.subr.bf16.mxu0 0
    %128 = vmatpush1.bf16.msra.mxu0 0
    %129 = vmatprep.subr.bf16.mxu0 0
    %130 = vmatpush1.bf16.msra.mxu0 0
    %131 = vmatprep.mubr.bf16.mxu0 0
    %132 = vmatmul.mubr.bf16.gmra.mrb[0].mxu0 %v97
    %v133 = vpop.f32.mrb[0].mxu0
    %v134 = vadd.f32 %v68, %v133
    %v135 = vpop.f32.mrb[0].mxu0
    %v136 = vadd.f32 %v72, %v135
    %v137 = vpop.f32.mrb[0].mxu0
    %v138 = vpop.f32.mrb[0].mxu0
    %139 = vdwg.mxu0
    %s140 = scalar_lea.vmem %s6, 1
    %v141 = vld [vmem:[%s140] ss:$8 sm:$0x3]
    %s142 = scalar_lea.vmem %s6, 2
    %v143 = vld [vmem:[%s142] ss:$8 sm:$0x3]
    %v144 = vadd.f32 %v134, %v136
    %145 = vadd.xlane.f32.xlu0 %v144
    %v146 = vpop.xlane.xlu0 %145
    %v147 = vrcp.pop 256.0
    %v148 = vmul.f32 %v146, %v147
    %v149 = vsub.f32 %v134, %v148
    %v150 = vsub.f32 %v136, %v148
    %v151 = vmul.f32 %v149, %v149
    %v152 = vmul.f32 %v150, %v150
    %v153 = vadd.f32 %v151, %v152
    %154 = vadd.xlane.f32.xlu0 %v153
    %v155 = vpop.xlane.xlu0 %154
    %v156 = vmul.f32 %v155, %v147
    %v157 = vadd.f32 %v156, 1e-05
    %v158 = vrsqrt.pop %v157
    %v159 = vmul.f32 %v149, %v158
    %v160 = vmul.f32 %v150, %v158
    %v161 = vpack.c.bf16 %v159, %v159
    %v162 = vpack.c.bf16 %v160, %v160
    %v164 = vlaneseq
    %v165 = vshrl.u32 %v164, 7
    %v166 = vsub.s32 0, %v165
    %v167 = vrot.slane %v141, %v166
    %v168 = vlaneseq
    %v169 = vshrl.u32 %v168, 7
    %v170 = vsub.s32 1, %v169
    %v171 = vrot.slane %v141, %v170
    %v174 = vpack.c.bf16 %v167, %v167
    %v175 = vpack.c.bf16 %v171, %v171
    %v177 = vlaneseq
    %v178 = vshrl.u32 %v177, 7
    %v179 = vsub.s32 0, %v178
    %v180 = vrot.slane %v143, %v179
    %v181 = vlaneseq
    %v182 = vshrl.u32 %v181, 7
    %v183 = vsub.s32 1, %v182
    %v184 = vrot.slane %v143, %v183
    %v187 = vpack.c.bf16 %v180, %v180
    %v188 = vpack.c.bf16 %v184, %v184
    %v190 = vpack.i.b16 %v174, %v174
    %v192 = vlaneseq
    %v193 = vshrl.u32 %v192, 7
    %v194 = vsub.s32 0, %v193
    %v195 = vrot.slane %v190, %v194
    %v197 = vpack.i.b16 %v175, %v175
    %v199 = vlaneseq
    %v200 = vshrl.u32 %v199, 7
    %v201 = vsub.s32 0, %v200
    %v202 = vrot.slane %v197, %v201
    %v203 = vmul.bf16 %v161, %v195
    %v204 = vmul.bf16 %v162, %v202
    %v206 = vpack.i.b16 %v187, %v187
    %v208 = vlaneseq
    %v209 = vshrl.u32 %v208, 7
    %v210 = vsub.s32 0, %v209
    %v211 = vrot.slane %v206, %v210
    %v213 = vpack.i.b16 %v188, %v188
    %v215 = vlaneseq
    %v216 = vshrl.u32 %v215, 7
    %v217 = vsub.s32 0, %v216
    %v218 = vrot.slane %v213, %v217
    %v219 = vadd.bf16 %v203, %v211
    %v220 = vadd.bf16 %v204, %v218
    %v221 = vmul.bf16 %v219, 1036860877
    %v222 = vmul.bf16 %v220, 1036860877
    %v223 = vmax.bf16 %v219, %v221
    %v224 = vmax.bf16 %v220, %v222
    %v225 = vld [vmem:[#allocation2] sm:$0xff]
    %v226 = vld [vmem:[#allocation2 + $0x40] sm:$0xff]
    %v227 = vld [vmem:[#allocation2 + $0x80] sm:$0xff]
    %v228 = vld [vmem:[#allocation2 + $0xc0] sm:$0xff]
    %v229 = vld [vmem:[#allocation2 + $0x100] sm:$0xff]
    %v230 = vld [vmem:[#allocation2 + $0x140] sm:$0xff]
    %v231 = vld [vmem:[#allocation2 + $0x180] sm:$0xff]
    %v232 = vld [vmem:[#allocation2 + $0x1c0] sm:$0xff]
    %v233 = vld [vmem:[#allocation2 + $0x200] sm:$0xff]
    %v234 = vld [vmem:[#allocation2 + $0x240] sm:$0xff]
    %v235 = vld [vmem:[#allocation2 + $0x280] sm:$0xff]
    %v236 = vld [vmem:[#allocation2 + $0x2c0] sm:$0xff]
    %v237 = vld [vmem:[#allocation2 + $0x300] sm:$0xff]
    %v238 = vld [vmem:[#allocation2 + $0x340] sm:$0xff]
    %v239 = vld [vmem:[#allocation2 + $0x380] sm:$0xff]
    %v240 = vld [vmem:[#allocation2 + $0x3c0] sm:$0xff]
    %v241 = vld [vmem:[#allocation2 + $0x400] sm:$0xff]
    %v242 = vld [vmem:[#allocation2 + $0x440] sm:$0xff]
    %v243 = vld [vmem:[#allocation2 + $0x480] sm:$0xff]
    %v244 = vld [vmem:[#allocation2 + $0x4c0] sm:$0xff]
    %v245 = vld [vmem:[#allocation2 + $0x500] sm:$0xff]
    %v246 = vld [vmem:[#allocation2 + $0x540] sm:$0xff]
    %v247 = vld [vmem:[#allocation2 + $0x580] sm:$0xff]
    %v248 = vld [vmem:[#allocation2 + $0x5c0] sm:$0xff]
    %v249 = vld [vmem:[#allocation2 + $0x600] sm:$0xff]
    %v250 = vld [vmem:[#allocation2 + $0x640] sm:$0xff]
    %v251 = vld [vmem:[#allocation2 + $0x680] sm:$0xff]
    %v252 = vld [vmem:[#allocation2 + $0x6c0] sm:$0xff]
    %v253 = vld [vmem:[#allocation2 + $0x700] sm:$0xff]
    %v254 = vld [vmem:[#allocation2 + $0x740] sm:$0xff]
    %v255 = vld [vmem:[#allocation2 + $0x780] sm:$0xff]
    %v256 = vld [vmem:[#allocation2 + $0x7c0] sm:$0xff]
    %s257 = scalar_lea.vmem %s6, 3
    %v258 = vld [vmem:[%s257] ss:$8 sm:$0x3]
    %v260 = vlaneseq
    %v261 = vshrl.u32 %v260, 7
    %v262 = vsub.s32 0, %v261
    %v263 = vrot.slane %v258, %v262
    %v264 = vlaneseq
    %v265 = vshrl.u32 %v264, 7
    %v266 = vsub.s32 1, %v265
    %v267 = vrot.slane %v258, %v266
    %v302 = vunpack.c.l.b16 %v225
    %v303 = vunpack.c.h.b16 %v225
    %v304 = vunpack.c.l.b16 %v226
    %v305 = vunpack.c.h.b16 %v226
    %v306 = vunpack.c.l.b16 %v227
    %v307 = vunpack.c.h.b16 %v227
    %v308 = vunpack.c.l.b16 %v228
    %v309 = vunpack.c.h.b16 %v228
    %v310 = vunpack.c.l.b16 %v229
    %v311 = vunpack.c.h.b16 %v229
    %v312 = vunpack.c.l.b16 %v230
    %v313 = vunpack.c.h.b16 %v230
    %v314 = vunpack.c.l.b16 %v231
    %v315 = vunpack.c.h.b16 %v231
    %v316 = vunpack.c.l.b16 %v232
    %v317 = vunpack.c.h.b16 %v232
    %v318 = vunpack.c.l.b16 %v233
    %v319 = vunpack.c.h.b16 %v233
    %v320 = vunpack.c.l.b16 %v234
    %v321 = vunpack.c.h.b16 %v234
    %v322 = vunpack.c.l.b16 %v235
    %v323 = vunpack.c.h.b16 %v235
    %v324 = vunpack.c.l.b16 %v236
    %v325 = vunpack.c.h.b16 %v236
    %v326 = vunpack.c.l.b16 %v237
    %v327 = vunpack.c.h.b16 %v237
    %v328 = vunpack.c.l.b16 %v238
    %v329 = vunpack.c.h.b16 %v238
    %v330 = vunpack.c.l.b16 %v239
    %v331 = vunpack.c.h.b16 %v239
    %v332 = vunpack.c.l.b16 %v240
    %v333 = vunpack.c.h.b16 %v240
    %v334 = vunpack.c.l.b16 %v241
    %v335 = vunpack.c.h.b16 %v241
    %v336 = vunpack.c.l.b16 %v242
    %v337 = vunpack.c.h.b16 %v242
    %v338 = vunpack.c.l.b16 %v243
    %v339 = vunpack.c.h.b16 %v243
    %v340 = vunpack.c.l.b16 %v244
    %v341 = vunpack.c.h.b16 %v244
    %v342 = vunpack.c.l.b16 %v245
    %v343 = vunpack.c.h.b16 %v245
    %v344 = vunpack.c.l.b16 %v246
    %v345 = vunpack.c.h.b16 %v246
    %v346 = vunpack.c.l.b16 %v247
    %v347 = vunpack.c.h.b16 %v247
    %v348 = vunpack.c.l.b16 %v248
    %v349 = vunpack.c.h.b16 %v248
    %v350 = vunpack.c.l.b16 %v249
    %v351 = vunpack.c.h.b16 %v249
    %v352 = vunpack.c.l.b16 %v250
    %v353 = vunpack.c.h.b16 %v250
    %v354 = vunpack.c.l.b16 %v251
    %v355 = vunpack.c.h.b16 %v251
    %v356 = vunpack.c.l.b16 %v252
    %v357 = vunpack.c.h.b16 %v252
    %v358 = vunpack.c.l.b16 %v253
    %v359 = vunpack.c.h.b16 %v253
    %v360 = vunpack.c.l.b16 %v254
    %v361 = vunpack.c.h.b16 %v254
    %v362 = vunpack.c.l.b16 %v255
    %v363 = vunpack.c.h.b16 %v255
    %v364 = vunpack.c.l.b16 %v256
    %v365 = vunpack.c.h.b16 %v256
    %v366 = vpack.c.b16 %v304, %v302
    %v367 = vpack.c.b16 %v305, %v303
    %v368 = vpack.c.b16 %v308, %v306
    %v369 = vpack.c.b16 %v309, %v307
    %v370 = vpack.c.b16 %v312, %v310
    %v371 = vpack.c.b16 %v313, %v311
    %v372 = vpack.c.b16 %v316, %v314
    %v373 = vpack.c.b16 %v317, %v315
    %v374 = vpack.c.b16 %v320, %v318
    %v375 = vpack.c.b16 %v321, %v319
    %v376 = vpack.c.b16 %v324, %v322
    %v377 = vpack.c.b16 %v325, %v323
    %v378 = vpack.c.b16 %v328, %v326
    %v379 = vpack.c.b16 %v329, %v327
    %v380 = vpack.c.b16 %v332, %v330
    %v381 = vpack.c.b16 %v333, %v331
    %v382 = vpack.c.b16 %v336, %v334
    %v383 = vpack.c.b16 %v337, %v335
    %v384 = vpack.c.b16 %v340, %v338
    %v385 = vpack.c.b16 %v341, %v339
    %v386 = vpack.c.b16 %v344, %v342
    %v387 = vpack.c.b16 %v345, %v343
    %v388 = vpack.c.b16 %v348, %v346
    %v389 = vpack.c.b16 %v349, %v347
    %v390 = vpack.c.b16 %v352, %v350
    %v391 = vpack.c.b16 %v353, %v351
    %v392 = vpack.c.b16 %v356, %v354
    %v393 = vpack.c.b16 %v357, %v355
    %v394 = vpack.c.b16 %v360, %v358
    %v395 = vpack.c.b16 %v361, %v359
    %v396 = vpack.c.b16 %v364, %v362
    %v397 = vpack.c.b16 %v365, %v363
    %430 = vmatprep.subr.bf16.mxu0 %v367
    %431 = vmatpush1.bf16.msra.mxu0 %v366
    %432 = vmatprep.subr.bf16.mxu0 %v369
    %433 = vmatpush1.bf16.msra.mxu0 %v368
    %434 = vmatprep.subr.bf16.mxu0 %v371
    %435 = vmatpush1.bf16.msra.mxu0 %v370
    %436 = vmatprep.subr.bf16.mxu0 %v373
    %437 = vmatpush1.bf16.msra.mxu0 %v372
    %438 = vmatprep.subr.bf16.mxu0 %v375
    %439 = vmatpush1.bf16.msra.mxu0 %v374
    %440 = vmatprep.subr.bf16.mxu0 %v377
    %441 = vmatpush1.bf16.msra.mxu0 %v376
    %442 = vmatprep.subr.bf16.mxu0 %v379
    %443 = vmatpush1.bf16.msra.mxu0 %v378
    %444 = vmatprep.subr.bf16.mxu0 %v381
    %445 = vmatpush1.bf16.msra.mxu0 %v380
    %446 = vmatprep.subr.bf16.mxu0 %v383
    %447 = vmatpush1.bf16.msra.mxu0 %v382
    %448 = vmatprep.subr.bf16.mxu0 %v385
    %449 = vmatpush1.bf16.msra.mxu0 %v384
    %450 = vmatprep.subr.bf16.mxu0 %v387
    %451 = vmatpush1.bf16.msra.mxu0 %v386
    %452 = vmatprep.subr.bf16.mxu0 %v389
    %453 = vmatpush1.bf16.msra.mxu0 %v388
    %454 = vmatprep.subr.bf16.mxu0 %v391
    %455 = vmatpush1.bf16.msra.mxu0 %v390
    %456 = vmatprep.subr.bf16.mxu0 %v393
    %457 = vmatpush1.bf16.msra.mxu0 %v392
    %458 = vmatprep.subr.bf16.mxu0 %v395
    %459 = vmatpush1.bf16.msra.mxu0 %v394
    %460 = vmatprep.subr.bf16.mxu0 %v397
    %461 = vmatpush1.bf16.msra.mxu0 %v396
    %462 = vmatprep.mubr.bf16.mxu0 %v224
    %463 = vmatmul.mubr.bf16.gmra.mrb[0].mxu0 %v223
    %v464 = vpop.f32.mrb[0].mxu0
    %v465 = vadd.f32 %v263, %v464
    %v466 = vpop.f32.mrb[0].mxu0
    %v467 = vadd.f32 %v267, %v466
    %v468 = vpop.f32.mrb[0].mxu0
    %v469 = vpop.f32.mrb[0].mxu0
    %470 = vdwg.mxu0
    %s471 = scalar_lea.vmem %s6, 4
    %v472 = vld [vmem:[%s471] ss:$8 sm:$0x3]
    %s473 = scalar_lea.vmem %s6, 5
    %v474 = vld [vmem:[%s473] ss:$8 sm:$0x3]
    %v475 = vadd.f32 %v465, %v467
    %476 = vadd.xlane.f32.xlu0 %v475
    %v477 = vpop.xlane.xlu0 %476
    %v478 = vmul.f32 %v477, %v147
    %v479 = vsub.f32 %v465, %v478
    %v480 = vsub.f32 %v467, %v478
    %v481 = vmul.f32 %v479, %v479
    %v482 = vmul.f32 %v480, %v480
    %v483 = vadd.f32 %v481, %v482
    %484 = vadd.xlane.f32.xlu0 %v483
    %v485 = vpop.xlane.xlu0 %484
    %v486 = vmul.f32 %v485, %v147
    %v487 = vadd.f32 %v486, 1e-05
    %v488 = vrsqrt.pop %v487
    %v489 = vmul.f32 %v479, %v488
    %v490 = vmul.f32 %v480, %v488
    %v491 = vpack.c.bf16 %v489, %v489
    %v492 = vpack.c.bf16 %v490, %v490
    %v494 = vlaneseq
    %v495 = vshrl.u32 %v494, 7
    %v496 = vsub.s32 0, %v495
    %v497 = vrot.slane %v472, %v496
    %v498 = vlaneseq
    %v499 = vshrl.u32 %v498, 7
    %v500 = vsub.s32 1, %v499
    %v501 = vrot.slane %v472, %v500
    %v504 = vpack.c.bf16 %v497, %v497
    %v505 = vpack.c.bf16 %v501, %v501
    %v507 = vlaneseq
    %v508 = vshrl.u32 %v507, 7
    %v509 = vsub.s32 0, %v508
    %v510 = vrot.slane %v474, %v509
    %v511 = vlaneseq
    %v512 = vshrl.u32 %v511, 7
    %v513 = vsub.s32 1, %v512
    %v514 = vrot.slane %v474, %v513
    %v517 = vpack.c.bf16 %v510, %v510
    %v518 = vpack.c.bf16 %v514, %v514
    %v520 = vpack.i.b16 %v504, %v504
    %v522 = vlaneseq
    %v523 = vshrl.u32 %v522, 7
    %v524 = vsub.s32 0, %v523
    %v525 = vrot.slane %v520, %v524
    %v527 = vpack.i.b16 %v505, %v505
    %v529 = vlaneseq
    %v530 = vshrl.u32 %v529, 7
    %v531 = vsub.s32 0, %v530
    %v532 = vrot.slane %v527, %v531
    %v533 = vmul.bf16 %v491, %v525
    %v534 = vmul.bf16 %v492, %v532
    %v536 = vpack.i.b16 %v517, %v517
    %v538 = vlaneseq
    %v539 = vshrl.u32 %v538, 7
    %v540 = vsub.s32 0, %v539
    %v541 = vrot.slane %v536, %v540
    %v543 = vpack.i.b16 %v518, %v518
    %v545 = vlaneseq
    %v546 = vshrl.u32 %v545, 7
    %v547 = vsub.s32 0, %v546
    %v548 = vrot.slane %v543, %v547
    %v549 = vadd.bf16 %v533, %v541
    %v550 = vadd.bf16 %v534, %v548
    %v551 = vmul.bf16 %v549, 1036860877
    %v552 = vmul.bf16 %v550, 1036860877
    %v553 = vmax.bf16 %v549, %v551
    %v554 = vmax.bf16 %v550, %v552
    %v555 = vld [vmem:[#allocation2 + $0x8] sm:$0xff]
    %v556 = vld [vmem:[#allocation2 + $0x48] sm:$0xff]
    %v557 = vld [vmem:[#allocation2 + $0x88] sm:$0xff]
    %v558 = vld [vmem:[#allocation2 + $0xc8] sm:$0xff]
    %v559 = vld [vmem:[#allocation2 + $0x108] sm:$0xff]
    %v560 = vld [vmem:[#allocation2 + $0x148] sm:$0xff]
    %v561 = vld [vmem:[#allocation2 + $0x188] sm:$0xff]
    %v562 = vld [vmem:[#allocation2 + $0x1c8] sm:$0xff]
    %v563 = vld [vmem:[#allocation2 + $0x208] sm:$0xff]
    %v564 = vld [vmem:[#allocation2 + $0x248] sm:$0xff]
    %v565 = vld [vmem:[#allocation2 + $0x288] sm:$0xff]
    %v566 = vld [vmem:[#allocation2 + $0x2c8] sm:$0xff]
    %v567 = vld [vmem:[#allocation2 + $0x308] sm:$0xff]
    %v568 = vld [vmem:[#allocation2 + $0x348] sm:$0xff]
    %v569 = vld [vmem:[#allocation2 + $0x388] sm:$0xff]
    %v570 = vld [vmem:[#allocation2 + $0x3c8] sm:$0xff]
    %v571 = vld [vmem:[#allocation2 + $0x408] sm:$0xff]
    %v572 = vld [vmem:[#allocation2 + $0x448] sm:$0xff]
    %v573 = vld [vmem:[#allocation2 + $0x488] sm:$0xff]
    %v574 = vld [vmem:[#allocation2 + $0x4c8] sm:$0xff]
    %v575 = vld [vmem:[#allocation2 + $0x508] sm:$0xff]
    %v576 = vld [vmem:[#allocation2 + $0x548] sm:$0xff]
    %v577 = vld [vmem:[#allocation2 + $0x588] sm:$0xff]
    %v578 = vld [vmem:[#allocation2 + $0x5c8] sm:$0xff]
    %v579 = vld [vmem:[#allocation2 + $0x608] sm:$0xff]
    %v580 = vld [vmem:[#allocation2 + $0x648] sm:$0xff]
    %v581 = vld [vmem:[#allocation2 + $0x688] sm:$0xff]
    %v582 = vld [vmem:[#allocation2 + $0x6c8] sm:$0xff]
    %v583 = vld [vmem:[#allocation2 + $0x708] sm:$0xff]
    %v584 = vld [vmem:[#allocation2 + $0x748] sm:$0xff]
    %v585 = vld [vmem:[#allocation2 + $0x788] sm:$0xff]
    %v586 = vld [vmem:[#allocation2 + $0x7c8] sm:$0xff]
    %s587 = scalar_lea.vmem %s6, 6
    %v588 = vld [vmem:[%s587] ss:$8 sm:$0x3]
    %v590 = vlaneseq
    %v591 = vshrl.u32 %v590, 7
    %v592 = vsub.s32 0, %v591
    %v593 = vrot.slane %v588, %v592
    %v594 = vlaneseq
    %v595 = vshrl.u32 %v594, 7
    %v596 = vsub.s32 1, %v595
    %v597 = vrot.slane %v588, %v596
    %v632 = vunpack.c.l.b16 %v555
    %v633 = vunpack.c.h.b16 %v555
    %v634 = vunpack.c.l.b16 %v556
    %v635 = vunpack.c.h.b16 %v556
    %v636 = vunpack.c.l.b16 %v557
    %v637 = vunpack.c.h.b16 %v557
    %v638 = vunpack.c.l.b16 %v558
    %v639 = vunpack.c.h.b16 %v558
    %v640 = vunpack.c.l.b16 %v559
    %v641 = vunpack.c.h.b16 %v559
    %v642 = vunpack.c.l.b16 %v560
    %v643 = vunpack.c.h.b16 %v560
    %v644 = vunpack.c.l.b16 %v561
    %v645 = vunpack.c.h.b16 %v561
    %v646 = vunpack.c.l.b16 %v562
    %v647 = vunpack.c.h.b16 %v562
    %v648 = vunpack.c.l.b16 %v563
    %v649 = vunpack.c.h.b16 %v563
    %v650 = vunpack.c.l.b16 %v564
    %v651 = vunpack.c.h.b16 %v564
    %v652 = vunpack.c.l.b16 %v565
    %v653 = vunpack.c.h.b16 %v565
    %v654 = vunpack.c.l.b16 %v566
    %v655 = vunpack.c.h.b16 %v566
    %v656 = vunpack.c.l.b16 %v567
    %v657 = vunpack.c.h.b16 %v567
    %v658 = vunpack.c.l.b16 %v568
    %v659 = vunpack.c.h.b16 %v568
    %v660 = vunpack.c.l.b16 %v569
    %v661 = vunpack.c.h.b16 %v569
    %v662 = vunpack.c.l.b16 %v570
    %v663 = vunpack.c.h.b16 %v570
    %v664 = vunpack.c.l.b16 %v571
    %v665 = vunpack.c.h.b16 %v571
    %v666 = vunpack.c.l.b16 %v572
    %v667 = vunpack.c.h.b16 %v572
    %v668 = vunpack.c.l.b16 %v573
    %v669 = vunpack.c.h.b16 %v573
    %v670 = vunpack.c.l.b16 %v574
    %v671 = vunpack.c.h.b16 %v574
    %v672 = vunpack.c.l.b16 %v575
    %v673 = vunpack.c.h.b16 %v575
    %v674 = vunpack.c.l.b16 %v576
    %v675 = vunpack.c.h.b16 %v576
    %v676 = vunpack.c.l.b16 %v577
    %v677 = vunpack.c.h.b16 %v577
    %v678 = vunpack.c.l.b16 %v578
    %v679 = vunpack.c.h.b16 %v578
    %v680 = vunpack.c.l.b16 %v579
    %v681 = vunpack.c.h.b16 %v579
    %v682 = vunpack.c.l.b16 %v580
    %v683 = vunpack.c.h.b16 %v580
    %v684 = vunpack.c.l.b16 %v581
    %v685 = vunpack.c.h.b16 %v581
    %v686 = vunpack.c.l.b16 %v582
    %v687 = vunpack.c.h.b16 %v582
    %v688 = vunpack.c.l.b16 %v583
    %v689 = vunpack.c.h.b16 %v583
    %v690 = vunpack.c.l.b16 %v584
    %v691 = vunpack.c.h.b16 %v584
    %v692 = vunpack.c.l.b16 %v585
    %v693 = vunpack.c.h.b16 %v585
    %v694 = vunpack.c.l.b16 %v586
    %v695 = vunpack.c.h.b16 %v586
    %v696 = vpack.c.b16 %v634, %v632
    %v697 = vpack.c.b16 %v635, %v633
    %v698 = vpack.c.b16 %v638, %v636
    %v699 = vpack.c.b16 %v639, %v637
    %v700 = vpack.c.b16 %v642, %v640
    %v701 = vpack.c.b16 %v643, %v641
    %v702 = vpack.c.b16 %v646, %v644
    %v703 = vpack.c.b16 %v647, %v645
    %v704 = vpack.c.b16 %v650, %v648
    %v705 = vpack.c.b16 %v651, %v649
    %v706 = vpack.c.b16 %v654, %v652
    %v707 = vpack.c.b16 %v655, %v653
    %v708 = vpack.c.b16 %v658, %v656
    %v709 = vpack.c.b16 %v659, %v657
    %v710 = vpack.c.b16 %v662, %v660
    %v711 = vpack.c.b16 %v663, %v661
    %v712 = vpack.c.b16 %v666, %v664
    %v713 = vpack.c.b16 %v667, %v665
    %v714 = vpack.c.b16 %v670, %v668
    %v715 = vpack.c.b16 %v671, %v669
    %v716 = vpack.c.b16 %v674, %v672
    %v717 = vpack.c.b16 %v675, %v673
    %v718 = vpack.c.b16 %v678, %v676
    %v719 = vpack.c.b16 %v679, %v677
    %v720 = vpack.c.b16 %v682, %v680
    %v721 = vpack.c.b16 %v683, %v681
    %v722 = vpack.c.b16 %v686, %v684
    %v723 = vpack.c.b16 %v687, %v685
    %v724 = vpack.c.b16 %v690, %v688
    %v725 = vpack.c.b16 %v691, %v689
    %v726 = vpack.c.b16 %v694, %v692
    %v727 = vpack.c.b16 %v695, %v693
    %760 = vmatprep.subr.bf16.mxu0 %v697
    %761 = vmatpush1.bf16.msra.mxu0 %v696
    %762 = vmatprep.subr.bf16.mxu0 %v699
    %763 = vmatpush1.bf16.msra.mxu0 %v698
    %764 = vmatprep.subr.bf16.mxu0 %v701
    %765 = vmatpush1.bf16.msra.mxu0 %v700
    %766 = vmatprep.subr.bf16.mxu0 %v703
    %767 = vmatpush1.bf16.msra.mxu0 %v702
    %768 = vmatprep.subr.bf16.mxu0 %v705
    %769 = vmatpush1.bf16.msra.mxu0 %v704
    %770 = vmatprep.subr.bf16.mxu0 %v707
    %771 = vmatpush1.bf16.msra.mxu0 %v706
    %772 = vmatprep.subr.bf16.mxu0 %v709
    %773 = vmatpush1.bf16.msra.mxu0 %v708
    %774 = vmatprep.subr.bf16.mxu0 %v711
    %775 = vmatpush1.bf16.msra.mxu0 %v710
    %776 = vmatprep.subr.bf16.mxu0 %v713
    %777 = vmatpush1.bf16.msra.mxu0 %v712
    %778 = vmatprep.subr.bf16.mxu0 %v715
    %779 = vmatpush1.bf16.msra.mxu0 %v714
    %780 = vmatprep.subr.bf16.mxu0 %v717
    %781 = vmatpush1.bf16.msra.mxu0 %v716
    %782 = vmatprep.subr.bf16.mxu0 %v719
    %783 = vmatpush1.bf16.msra.mxu0 %v718
    %784 = vmatprep.subr.bf16.mxu0 %v721
    %785 = vmatpush1.bf16.msra.mxu0 %v720
    %786 = vmatprep.subr.bf16.mxu0 %v723
    %787 = vmatpush1.bf16.msra.mxu0 %v722
    %788 = vmatprep.subr.bf16.mxu0 %v725
    %789 = vmatpush1.bf16.msra.mxu0 %v724
    %790 = vmatprep.subr.bf16.mxu0 %v727
    %791 = vmatpush1.bf16.msra.mxu0 %v726
    %792 = vmatprep.mubr.bf16.mxu0 %v554
    %793 = vmatmul.mubr.bf16.gmra.mrb[0].mxu0 %v553
    %v794 = vpop.f32.mrb[0].mxu0
    %v795 = vadd.f32 %v593, %v794
    %v796 = vpop.f32.mrb[0].mxu0
    %v797 = vadd.f32 %v597, %v796
    %v798 = vpop.f32.mrb[0].mxu0
    %v799 = vpop.f32.mrb[0].mxu0
    %800 = vdwg.mxu0
    %s801 = scalar_lea.vmem %s6, 7
    %v802 = vld [vmem:[%s801] ss:$8 sm:$0x3]
    %s803 = scalar_lea.vmem %s6, 16
    %v804 = vld [vmem:[%s803] ss:$8 sm:$0x3]
    %v805 = vadd.f32 %v795, %v797
    %806 = vadd.xlane.f32.xlu0 %v805
    %v807 = vpop.xlane.xlu0 %806
    %v808 = vmul.f32 %v807, %v147
    %v809 = vsub.f32 %v795, %v808
    %v810 = vsub.f32 %v797, %v808
    %v811 = vmul.f32 %v809, %v809
    %v812 = vmul.f32 %v810, %v810
    %v813 = vadd.f32 %v811, %v812
    %814 = vadd.xlane.f32.xlu0 %v813
    %v815 = vpop.xlane.xlu0 %814
    %v816 = vmul.f32 %v815, %v147
    %v817 = vadd.f32 %v816, 1e-05
    %v818 = vrsqrt.pop %v817
    %v819 = vmul.f32 %v809, %v818
    %v820 = vmul.f32 %v810, %v818
    %v821 = vpack.c.bf16 %v819, %v819
    %v822 = vpack.c.bf16 %v820, %v820
    %v824 = vlaneseq
    %v825 = vshrl.u32 %v824, 7
    %v826 = vsub.s32 0, %v825
    %v827 = vrot.slane %v802, %v826
    %v828 = vlaneseq
    %v829 = vshrl.u32 %v828, 7
    %v830 = vsub.s32 1, %v829
    %v831 = vrot.slane %v802, %v830
    %v834 = vpack.c.bf16 %v827, %v827
    %v835 = vpack.c.bf16 %v831, %v831
    %v837 = vlaneseq
    %v838 = vshrl.u32 %v837, 7
    %v839 = vsub.s32 0, %v838
    %v840 = vrot.slane %v804, %v839
    %v841 = vlaneseq
    %v842 = vshrl.u32 %v841, 7
    %v843 = vsub.s32 1, %v842
    %v844 = vrot.slane %v804, %v843
    %v847 = vpack.c.bf16 %v840, %v840
    %v848 = vpack.c.bf16 %v844, %v844
    %v850 = vpack.i.b16 %v834, %v834
    %v852 = vlaneseq
    %v853 = vshrl.u32 %v852, 7
    %v854 = vsub.s32 0, %v853
    %v855 = vrot.slane %v850, %v854
    %v857 = vpack.i.b16 %v835, %v835
    %v859 = vlaneseq
    %v860 = vshrl.u32 %v859, 7
    %v861 = vsub.s32 0, %v860
    %v862 = vrot.slane %v857, %v861
    %v863 = vmul.bf16 %v821, %v855
    %v864 = vmul.bf16 %v822, %v862
    %v866 = vpack.i.b16 %v847, %v847
    %v868 = vlaneseq
    %v869 = vshrl.u32 %v868, 7
    %v870 = vsub.s32 0, %v869
    %v871 = vrot.slane %v866, %v870
    %v873 = vpack.i.b16 %v848, %v848
    %v875 = vlaneseq
    %v876 = vshrl.u32 %v875, 7
    %v877 = vsub.s32 0, %v876
    %v878 = vrot.slane %v873, %v877
    %v879 = vadd.bf16 %v863, %v871
    %v880 = vadd.bf16 %v864, %v878
    %v881 = vmul.bf16 %v879, 1036860877
    %v882 = vmul.bf16 %v880, 1036860877
    %v883 = vmax.bf16 %v879, %v881
    %v884 = vmax.bf16 %v880, %v882
    %v885 = vld [vmem:[#allocation2 + $0x10] sm:$0xff]
    %v886 = vld [vmem:[#allocation2 + $0x50] sm:$0xff]
    %v887 = vld [vmem:[#allocation2 + $0x90] sm:$0xff]
    %v888 = vld [vmem:[#allocation2 + $0xd0] sm:$0xff]
    %v889 = vld [vmem:[#allocation2 + $0x110] sm:$0xff]
    %v890 = vld [vmem:[#allocation2 + $0x150] sm:$0xff]
    %v891 = vld [vmem:[#allocation2 + $0x190] sm:$0xff]
    %v892 = vld [vmem:[#allocation2 + $0x1d0] sm:$0xff]
    %v893 = vld [vmem:[#allocation2 + $0x210] sm:$0xff]
    %v894 = vld [vmem:[#allocation2 + $0x250] sm:$0xff]
    %v895 = vld [vmem:[#allocation2 + $0x290] sm:$0xff]
    %v896 = vld [vmem:[#allocation2 + $0x2d0] sm:$0xff]
    %v897 = vld [vmem:[#allocation2 + $0x310] sm:$0xff]
    %v898 = vld [vmem:[#allocation2 + $0x350] sm:$0xff]
    %v899 = vld [vmem:[#allocation2 + $0x390] sm:$0xff]
    %v900 = vld [vmem:[#allocation2 + $0x3d0] sm:$0xff]
    %v901 = vld [vmem:[#allocation2 + $0x410] sm:$0xff]
    %v902 = vld [vmem:[#allocation2 + $0x450] sm:$0xff]
    %v903 = vld [vmem:[#allocation2 + $0x490] sm:$0xff]
    %v904 = vld [vmem:[#allocation2 + $0x4d0] sm:$0xff]
    %v905 = vld [vmem:[#allocation2 + $0x510] sm:$0xff]
    %v906 = vld [vmem:[#allocation2 + $0x550] sm:$0xff]
    %v907 = vld [vmem:[#allocation2 + $0x590] sm:$0xff]
    %v908 = vld [vmem:[#allocation2 + $0x5d0] sm:$0xff]
    %v909 = vld [vmem:[#allocation2 + $0x610] sm:$0xff]
    %v910 = vld [vmem:[#allocation2 + $0x650] sm:$0xff]
    %v911 = vld [vmem:[#allocation2 + $0x690] sm:$0xff]
    %v912 = vld [vmem:[#allocation2 + $0x6d0] sm:$0xff]
    %v913 = vld [vmem:[#allocation2 + $0x710] sm:$0xff]
    %v914 = vld [vmem:[#allocation2 + $0x750] sm:$0xff]
    %v915 = vld [vmem:[#allocation2 + $0x790] sm:$0xff]
    %v916 = vld [vmem:[#allocation2 + $0x7d0] sm:$0xff]
    %s917 = scalar_lea.vmem %s6, 17
    %v918 = vld [vmem:[%s917] ss:$8 sm:$0x3]
    %v920 = vlaneseq
    %v921 = vshrl.u32 %v920, 7
    %v922 = vsub.s32 0, %v921
    %v923 = vrot.slane %v918, %v922
    %v924 = vlaneseq
    %v925 = vshrl.u32 %v924, 7
    %v926 = vsub.s32 1, %v925
    %v927 = vrot.slane %v918, %v926
    %v962 = vunpack.c.l.b16 %v885
    %v963 = vunpack.c.h.b16 %v885
    %v964 = vunpack.c.l.b16 %v886
    %v965 = vunpack.c.h.b16 %v886
    %v966 = vunpack.c.l.b16 %v887
    %v967 = vunpack.c.h.b16 %v887
    %v968 = vunpack.c.l.b16 %v888
    %v969 = vunpack.c.h.b16 %v888
    %v970 = vunpack.c.l.b16 %v889
    %v971 = vunpack.c.h.b16 %v889
    %v972 = vunpack.c.l.b16 %v890
    %v973 = vunpack.c.h.b16 %v890
    %v974 = vunpack.c.l.b16 %v891
    %v975 = vunpack.c.h.b16 %v891
    %v976 = vunpack.c.l.b16 %v892
    %v977 = vunpack.c.h.b16 %v892
    %v978 = vunpack.c.l.b16 %v893
    %v979 = vunpack.c.h.b16 %v893
    %v980 = vunpack.c.l.b16 %v894
    %v981 = vunpack.c.h.b16 %v894
    %v982 = vunpack.c.l.b16 %v895
    %v983 = vunpack.c.h.b16 %v895
    %v984 = vunpack.c.l.b16 %v896
    %v985 = vunpack.c.h.b16 %v896
    %v986 = vunpack.c.l.b16 %v897
    %v987 = vunpack.c.h.b16 %v897
    %v988 = vunpack.c.l.b16 %v898
    %v989 = vunpack.c.h.b16 %v898
    %v990 = vunpack.c.l.b16 %v899
    %v991 = vunpack.c.h.b16 %v899
    %v992 = vunpack.c.l.b16 %v900
    %v993 = vunpack.c.h.b16 %v900
    %v994 = vunpack.c.l.b16 %v901
    %v995 = vunpack.c.h.b16 %v901
    %v996 = vunpack.c.l.b16 %v902
    %v997 = vunpack.c.h.b16 %v902
    %v998 = vunpack.c.l.b16 %v903
    %v999 = vunpack.c.h.b16 %v903
    %v1000 = vunpack.c.l.b16 %v904
    %v1001 = vunpack.c.h.b16 %v904
    %v1002 = vunpack.c.l.b16 %v905
    %v1003 = vunpack.c.h.b16 %v905
    %v1004 = vunpack.c.l.b16 %v906
    %v1005 = vunpack.c.h.b16 %v906
    %v1006 = vunpack.c.l.b16 %v907
    %v1007 = vunpack.c.h.b16 %v907
    %v1008 = vunpack.c.l.b16 %v908
    %v1009 = vunpack.c.h.b16 %v908
    %v1010 = vunpack.c.l.b16 %v909
    %v1011 = vunpack.c.h.b16 %v909
    %v1012 = vunpack.c.l.b16 %v910
    %v1013 = vunpack.c.h.b16 %v910
    %v1014 = vunpack.c.l.b16 %v911
    %v1015 = vunpack.c.h.b16 %v911
    %v1016 = vunpack.c.l.b16 %v912
    %v1017 = vunpack.c.h.b16 %v912
    %v1018 = vunpack.c.l.b16 %v913
    %v1019 = vunpack.c.h.b16 %v913
    %v1020 = vunpack.c.l.b16 %v914
    %v1021 = vunpack.c.h.b16 %v914
    %v1022 = vunpack.c.l.b16 %v915
    %v1023 = vunpack.c.h.b16 %v915
    %v1024 = vunpack.c.l.b16 %v916
    %v1025 = vunpack.c.h.b16 %v916
    %v1026 = vpack.c.b16 %v964, %v962
    %v1027 = vpack.c.b16 %v965, %v963
    %v1028 = vpack.c.b16 %v968, %v966
    %v1029 = vpack.c.b16 %v969, %v967
    %v1030 = vpack.c.b16 %v972, %v970
    %v1031 = vpack.c.b16 %v973, %v971
    %v1032 = vpack.c.b16 %v976, %v974
    %v1033 = vpack.c.b16 %v977, %v975
    %v1034 = vpack.c.b16 %v980, %v978
    %v1035 = vpack.c.b16 %v981, %v979
    %v1036 = vpack.c.b16 %v984, %v982
    %v1037 = vpack.c.b16 %v985, %v983
    %v1038 = vpack.c.b16 %v988, %v986
    %v1039 = vpack.c.b16 %v989, %v987
    %v1040 = vpack.c.b16 %v992, %v990
    %v1041 = vpack.c.b16 %v993, %v991
    %v1042 = vpack.c.b16 %v996, %v994
    %v1043 = vpack.c.b16 %v997, %v995
    %v1044 = vpack.c.b16 %v1000, %v998
    %v1045 = vpack.c.b16 %v1001, %v999
    %v1046 = vpack.c.b16 %v1004, %v1002
    %v1047 = vpack.c.b16 %v1005, %v1003
    %v1048 = vpack.c.b16 %v1008, %v1006
    %v1049 = vpack.c.b16 %v1009, %v1007
    %v1050 = vpack.c.b16 %v1012, %v1010
    %v1051 = vpack.c.b16 %v1013, %v1011
    %v1052 = vpack.c.b16 %v1016, %v1014
    %v1053 = vpack.c.b16 %v1017, %v1015
    %v1054 = vpack.c.b16 %v1020, %v1018
    %v1055 = vpack.c.b16 %v1021, %v1019
    %v1056 = vpack.c.b16 %v1024, %v1022
    %v1057 = vpack.c.b16 %v1025, %v1023
    %1090 = vmatprep.subr.bf16.mxu0 %v1027
    %1091 = vmatpush1.bf16.msra.mxu0 %v1026
    %1092 = vmatprep.subr.bf16.mxu0 %v1029
    %1093 = vmatpush1.bf16.msra.mxu0 %v1028
    %1094 = vmatprep.subr.bf16.mxu0 %v1031
    %1095 = vmatpush1.bf16.msra.mxu0 %v1030
    %1096 = vmatprep.subr.bf16.mxu0 %v1033
    %1097 = vmatpush1.bf16.msra.mxu0 %v1032
    %1098 = vmatprep.subr.bf16.mxu0 %v1035
    %1099 = vmatpush1.bf16.msra.mxu0 %v1034
    %1100 = vmatprep.subr.bf16.mxu0 %v1037
    %1101 = vmatpush1.bf16.msra.mxu0 %v1036
    %1102 = vmatprep.subr.bf16.mxu0 %v1039
    %1103 = vmatpush1.bf16.msra.mxu0 %v1038
    %1104 = vmatprep.subr.bf16.mxu0 %v1041
    %1105 = vmatpush1.bf16.msra.mxu0 %v1040
    %1106 = vmatprep.subr.bf16.mxu0 %v1043
    %1107 = vmatpush1.bf16.msra.mxu0 %v1042
    %1108 = vmatprep.subr.bf16.mxu0 %v1045
    %1109 = vmatpush1.bf16.msra.mxu0 %v1044
    %1110 = vmatprep.subr.bf16.mxu0 %v1047
    %1111 = vmatpush1.bf16.msra.mxu0 %v1046
    %1112 = vmatprep.subr.bf16.mxu0 %v1049
    %1113 = vmatpush1.bf16.msra.mxu0 %v1048
    %1114 = vmatprep.subr.bf16.mxu0 %v1051
    %1115 = vmatpush1.bf16.msra.mxu0 %v1050
    %1116 = vmatprep.subr.bf16.mxu0 %v1053
    %1117 = vmatpush1.bf16.msra.mxu0 %v1052
    %1118 = vmatprep.subr.bf16.mxu0 %v1055
    %1119 = vmatpush1.bf16.msra.mxu0 %v1054
    %1120 = vmatprep.subr.bf16.mxu0 %v1057
    %1121 = vmatpush1.bf16.msra.mxu0 %v1056
    %1122 = vmatprep.mubr.bf16.mxu0 %v884
    %1123 = vmatmul.mubr.bf16.gmra.mrb[0].mxu0 %v883
    %v1124 = vpop.f32.mrb[0].mxu0
    %v1125 = vadd.f32 %v923, %v1124
    %v1126 = vpop.f32.mrb[0].mxu0
    %v1127 = vadd.f32 %v927, %v1126
    %v1128 = vpop.f32.mrb[0].mxu0
    %v1129 = vpop.f32.mrb[0].mxu0
    %1130 = vdwg.mxu0
    %s1131 = scalar_lea.vmem %s6, 18
    %v1132 = vld [vmem:[%s1131] ss:$8 sm:$0x3]
    %s1133 = scalar_lea.vmem %s6, 19
    %v1134 = vld [vmem:[%s1133] ss:$8 sm:$0x3]
    %v1135 = vadd.f32 %v1125, %v1127
    %1136 = vadd.xlane.f32.xlu0 %v1135
    %v1137 = vpop.xlane.xlu0 %1136
    %v1138 = vmul.f32 %v1137, %v147
    %v1139 = vsub.f32 %v1125, %v1138
    %v1140 = vsub.f32 %v1127, %v1138
    %v1141 = vmul.f32 %v1139, %v1139
    %v1142 = vmul.f32 %v1140, %v1140
    %v1143 = vadd.f32 %v1141, %v1142
    %1144 = vadd.xlane.f32.xlu0 %v1143
    %v1145 = vpop.xlane.xlu0 %1144
    %v1146 = vmul.f32 %v1145, %v147
    %v1147 = vadd.f32 %v1146, 1e-05
    %v1148 = vrsqrt.pop %v1147
    %v1149 = vmul.f32 %v1139, %v1148
    %v1150 = vmul.f32 %v1140, %v1148
    %v1151 = vpack.c.bf16 %v1149, %v1149
    %v1152 = vpack.c.bf16 %v1150, %v1150
    %v1154 = vlaneseq
    %v1155 = vshrl.u32 %v1154, 7
    %v1156 = vsub.s32 0, %v1155
    %v1157 = vrot.slane %v1132, %v1156
    %v1158 = vlaneseq
    %v1159 = vshrl.u32 %v1158, 7
    %v1160 = vsub.s32 1, %v1159
    %v1161 = vrot.slane %v1132, %v1160
    %v1164 = vpack.c.bf16 %v1157, %v1157
    %v1165 = vpack.c.bf16 %v1161, %v1161
    %v1167 = vlaneseq
    %v1168 = vshrl.u32 %v1167, 7
    %v1169 = vsub.s32 0, %v1168
    %v1170 = vrot.slane %v1134, %v1169
    %v1171 = vlaneseq
    %v1172 = vshrl.u32 %v1171, 7
    %v1173 = vsub.s32 1, %v1172
    %v1174 = vrot.slane %v1134, %v1173
    %v1177 = vpack.c.bf16 %v1170, %v1170
    %v1178 = vpack.c.bf16 %v1174, %v1174
    %v1180 = vpack.i.b16 %v1164, %v1164
    %v1182 = vlaneseq
    %v1183 = vshrl.u32 %v1182, 7
    %v1184 = vsub.s32 0, %v1183
    %v1185 = vrot.slane %v1180, %v1184
    %v1187 = vpack.i.b16 %v1165, %v1165
    %v1189 = vlaneseq
    %v1190 = vshrl.u32 %v1189, 7
    %v1191 = vsub.s32 0, %v1190
    %v1192 = vrot.slane %v1187, %v1191
    %v1193 = vmul.bf16 %v1151, %v1185
    %v1194 = vmul.bf16 %v1152, %v1192
    %v1196 = vpack.i.b16 %v1177, %v1177
    %v1198 = vlaneseq
    %v1199 = vshrl.u32 %v1198, 7
    %v1200 = vsub.s32 0, %v1199
    %v1201 = vrot.slane %v1196, %v1200
    %v1203 = vpack.i.b16 %v1178, %v1178
    %v1205 = vlaneseq
    %v1206 = vshrl.u32 %v1205, 7
    %v1207 = vsub.s32 0, %v1206
    %v1208 = vrot.slane %v1203, %v1207
    %v1209 = vadd.bf16 %v1193, %v1201
    %v1210 = vadd.bf16 %v1194, %v1208
    %v1211 = vmul.bf16 %v1209, 1036860877
    %v1212 = vmul.bf16 %v1210, 1036860877
    %v1213 = vmax.bf16 %v1209, %v1211
    %v1214 = vmax.bf16 %v1210, %v1212
    %v1215 = vld [vmem:[#allocation2 + $0x18] sm:$0xff]
    %v1216 = vld [vmem:[#allocation2 + $0x58] sm:$0xff]
    %v1217 = vld [vmem:[#allocation2 + $0x98] sm:$0xff]
    %v1218 = vld [vmem:[#allocation2 + $0xd8] sm:$0xff]
    %v1219 = vld [vmem:[#allocation2 + $0x118] sm:$0xff]
    %v1220 = vld [vmem:[#allocation2 + $0x158] sm:$0xff]
    %v1221 = vld [vmem:[#allocation2 + $0x198] sm:$0xff]
    %v1222 = vld [vmem:[#allocation2 + $0x1d8] sm:$0xff]
    %v1223 = vld [vmem:[#allocation2 + $0x218] sm:$0xff]
    %v1224 = vld [vmem:[#allocation2 + $0x258] sm:$0xff]
    %v1225 = vld [vmem:[#allocation2 + $0x298] sm:$0xff]
    %v1226 = vld [vmem:[#allocation2 + $0x2d8] sm:$0xff]
    %v1227 = vld [vmem:[#allocation2 + $0x318] sm:$0xff]
    %v1228 = vld [vmem:[#allocation2 + $0x358] sm:$0xff]
    %v1229 = vld [vmem:[#allocation2 + $0x398] sm:$0xff]
    %v1230 = vld [vmem:[#allocation2 + $0x3d8] sm:$0xff]
    %v1231 = vld [vmem:[#allocation2 + $0x418] sm:$0xff]
    %v1232 = vld [vmem:[#allocation2 + $0x458] sm:$0xff]
    %v1233 = vld [vmem:[#allocation2 + $0x498] sm:$0xff]
    %v1234 = vld [vmem:[#allocation2 + $0x4d8] sm:$0xff]
    %v1235 = vld [vmem:[#allocation2 + $0x518] sm:$0xff]
    %v1236 = vld [vmem:[#allocation2 + $0x558] sm:$0xff]
    %v1237 = vld [vmem:[#allocation2 + $0x598] sm:$0xff]
    %v1238 = vld [vmem:[#allocation2 + $0x5d8] sm:$0xff]
    %v1239 = vld [vmem:[#allocation2 + $0x618] sm:$0xff]
    %v1240 = vld [vmem:[#allocation2 + $0x658] sm:$0xff]
    %v1241 = vld [vmem:[#allocation2 + $0x698] sm:$0xff]
    %v1242 = vld [vmem:[#allocation2 + $0x6d8] sm:$0xff]
    %v1243 = vld [vmem:[#allocation2 + $0x718] sm:$0xff]
    %v1244 = vld [vmem:[#allocation2 + $0x758] sm:$0xff]
    %v1245 = vld [vmem:[#allocation2 + $0x798] sm:$0xff]
    %v1246 = vld [vmem:[#allocation2 + $0x7d8] sm:$0xff]
    %s1247 = scalar_lea.vmem %s6, 20
    %v1248 = vld [vmem:[%s1247] ss:$8 sm:$0x3]
    %v1250 = vlaneseq
    %v1251 = vshrl.u32 %v1250, 7
    %v1252 = vsub.s32 0, %v1251
    %v1253 = vrot.slane %v1248, %v1252
    %v1254 = vlaneseq
    %v1255 = vshrl.u32 %v1254, 7
    %v1256 = vsub.s32 1, %v1255
    %v1257 = vrot.slane %v1248, %v1256
    %v1292 = vunpack.c.l.b16 %v1215
    %v1293 = vunpack.c.h.b16 %v1215
    %v1294 = vunpack.c.l.b16 %v1216
    %v1295 = vunpack.c.h.b16 %v1216
    %v1296 = vunpack.c.l.b16 %v1217
    %v1297 = vunpack.c.h.b16 %v1217
    %v1298 = vunpack.c.l.b16 %v1218
    %v1299 = vunpack.c.h.b16 %v1218
    %v1300 = vunpack.c.l.b16 %v1219
    %v1301 = vunpack.c.h.b16 %v1219
    %v1302 = vunpack.c.l.b16 %v1220
    %v1303 = vunpack.c.h.b16 %v1220
    %v1304 = vunpack.c.l.b16 %v1221
    %v1305 = vunpack.c.h.b16 %v1221
    %v1306 = vunpack.c.l.b16 %v1222
    %v1307 = vunpack.c.h.b16 %v1222
    %v1308 = vunpack.c.l.b16 %v1223
    %v1309 = vunpack.c.h.b16 %v1223
    %v1310 = vunpack.c.l.b16 %v1224
    %v1311 = vunpack.c.h.b16 %v1224
    %v1312 = vunpack.c.l.b16 %v1225
    %v1313 = vunpack.c.h.b16 %v1225
    %v1314 = vunpack.c.l.b16 %v1226
    %v1315 = vunpack.c.h.b16 %v1226
    %v1316 = vunpack.c.l.b16 %v1227
    %v1317 = vunpack.c.h.b16 %v1227
    %v1318 = vunpack.c.l.b16 %v1228
    %v1319 = vunpack.c.h.b16 %v1228
    %v1320 = vunpack.c.l.b16 %v1229
    %v1321 = vunpack.c.h.b16 %v1229
    %v1322 = vunpack.c.l.b16 %v1230
    %v1323 = vunpack.c.h.b16 %v1230
    %v1324 = vunpack.c.l.b16 %v1231
    %v1325 = vunpack.c.h.b16 %v1231
    %v1326 = vunpack.c.l.b16 %v1232
    %v1327 = vunpack.c.h.b16 %v1232
    %v1328 = vunpack.c.l.b16 %v1233
    %v1329 = vunpack.c.h.b16 %v1233
    %v1330 = vunpack.c.l.b16 %v1234
    %v1331 = vunpack.c.h.b16 %v1234
    %v1332 = vunpack.c.l.b16 %v1235
    %v1333 = vunpack.c.h.b16 %v1235
    %v1334 = vunpack.c.l.b16 %v1236
    %v1335 = vunpack.c.h.b16 %v1236
    %v1336 = vunpack.c.l.b16 %v1237
    %v1337 = vunpack.c.h.b16 %v1237
    %v1338 = vunpack.c.l.b16 %v1238
    %v1339 = vunpack.c.h.b16 %v1238
    %v1340 = vunpack.c.l.b16 %v1239
    %v1341 = vunpack.c.h.b16 %v1239
    %v1342 = vunpack.c.l.b16 %v1240
    %v1343 = vunpack.c.h.b16 %v1240
    %v1344 = vunpack.c.l.b16 %v1241
    %v1345 = vunpack.c.h.b16 %v1241
    %v1346 = vunpack.c.l.b16 %v1242
    %v1347 = vunpack.c.h.b16 %v1242
    %v1348 = vunpack.c.l.b16 %v1243
    %v1349 = vunpack.c.h.b16 %v1243
    %v1350 = vunpack.c.l.b16 %v1244
    %v1351 = vunpack.c.h.b16 %v1244
    %v1352 = vunpack.c.l.b16 %v1245
    %v1353 = vunpack.c.h.b16 %v1245
    %v1354 = vunpack.c.l.b16 %v1246
    %v1355 = vunpack.c.h.b16 %v1246
    %v1356 = vpack.c.b16 %v1294, %v1292
    %v1357 = vpack.c.b16 %v1295, %v1293
    %v1358 = vpack.c.b16 %v1298, %v1296
    %v1359 = vpack.c.b16 %v1299, %v1297
    %v1360 = vpack.c.b16 %v1302, %v1300
    %v1361 = vpack.c.b16 %v1303, %v1301
    %v1362 = vpack.c.b16 %v1306, %v1304
    %v1363 = vpack.c.b16 %v1307, %v1305
    %v1364 = vpack.c.b16 %v1310, %v1308
    %v1365 = vpack.c.b16 %v1311, %v1309
    %v1366 = vpack.c.b16 %v1314, %v1312
    %v1367 = vpack.c.b16 %v1315, %v1313
    %v1368 = vpack.c.b16 %v1318, %v1316
    %v1369 = vpack.c.b16 %v1319, %v1317
    %v1370 = vpack.c.b16 %v1322, %v1320
    %v1371 = vpack.c.b16 %v1323, %v1321
    %v1372 = vpack.c.b16 %v1326, %v1324
    %v1373 = vpack.c.b16 %v1327, %v1325
    %v1374 = vpack.c.b16 %v1330, %v1328
    %v1375 = vpack.c.b16 %v1331, %v1329
    %v1376 = vpack.c.b16 %v1334, %v1332
    %v1377 = vpack.c.b16 %v1335, %v1333
    %v1378 = vpack.c.b16 %v1338, %v1336
    %v1379 = vpack.c.b16 %v1339, %v1337
    %v1380 = vpack.c.b16 %v1342, %v1340
    %v1381 = vpack.c.b16 %v1343, %v1341
    %v1382 = vpack.c.b16 %v1346, %v1344
    %v1383 = vpack.c.b16 %v1347, %v1345
    %v1384 = vpack.c.b16 %v1350, %v1348
    %v1385 = vpack.c.b16 %v1351, %v1349
    %v1386 = vpack.c.b16 %v1354, %v1352
    %v1387 = vpack.c.b16 %v1355, %v1353
    %1420 = vmatprep.subr.bf16.mxu0 %v1357
    %1421 = vmatpush1.bf16.msra.mxu0 %v1356
    %1422 = vmatprep.subr.bf16.mxu0 %v1359
    %1423 = vmatpush1.bf16.msra.mxu0 %v1358
    %1424 = vmatprep.subr.bf16.mxu0 %v1361
    %1425 = vmatpush1.bf16.msra.mxu0 %v1360
    %1426 = vmatprep.subr.bf16.mxu0 %v1363
    %1427 = vmatpush1.bf16.msra.mxu0 %v1362
    %1428 = vmatprep.subr.bf16.mxu0 %v1365
    %1429 = vmatpush1.bf16.msra.mxu0 %v1364
    %1430 = vmatprep.subr.bf16.mxu0 %v1367
    %1431 = vmatpush1.bf16.msra.mxu0 %v1366
    %1432 = vmatprep.subr.bf16.mxu0 %v1369
    %1433 = vmatpush1.bf16.msra.mxu0 %v1368
    %1434 = vmatprep.subr.bf16.mxu0 %v1371
    %1435 = vmatpush1.bf16.msra.mxu0 %v1370
    %1436 = vmatprep.subr.bf16.mxu0 %v1373
    %1437 = vmatpush1.bf16.msra.mxu0 %v1372
    %1438 = vmatprep.subr.bf16.mxu0 %v1375
    %1439 = vmatpush1.bf16.msra.mxu0 %v1374
    %1440 = vmatprep.subr.bf16.mxu0 %v1377
    %1441 = vmatpush1.bf16.msra.mxu0 %v1376
    %1442 = vmatprep.subr.bf16.mxu0 %v1379
    %1443 = vmatpush1.bf16.msra.mxu0 %v1378
    %1444 = vmatprep.subr.bf16.mxu0 %v1381
    %1445 = vmatpush1.bf16.msra.mxu0 %v1380
    %1446 = vmatprep.subr.bf16.mxu0 %v1383
    %1447 = vmatpush1.bf16.msra.mxu0 %v1382
    %1448 = vmatprep.subr.bf16.mxu0 %v1385
    %1449 = vmatpush1.bf16.msra.mxu0 %v1384
    %1450 = vmatprep.subr.bf16.mxu0 %v1387
    %1451 = vmatpush1.bf16.msra.mxu0 %v1386
    %1452 = vmatprep.mubr.bf16.mxu0 %v1214
    %1453 = vmatmul.mubr.bf16.gmra.mrb[0].mxu0 %v1213
    %v1454 = vpop.f32.mrb[0].mxu0
    %v1455 = vadd.f32 %v1253, %v1454
    %v1456 = vpop.f32.mrb[0].mxu0
    %v1457 = vadd.f32 %v1257, %v1456
    %v1458 = vpop.f32.mrb[0].mxu0
    %v1459 = vpop.f32.mrb[0].mxu0
    %1460 = vdwg.mxu0
    %s1461 = scalar_lea.vmem %s6, 21
    %v1462 = vld [vmem:[%s1461] ss:$8 sm:$0x3]
    %s1463 = scalar_lea.vmem %s6, 22
    %v1464 = vld [vmem:[%s1463] ss:$8 sm:$0x3]
    %v1465 = vadd.f32 %v1455, %v1457
    %1466 = vadd.xlane.f32.xlu0 %v1465
    %v1467 = vpop.xlane.xlu0 %1466
    %v1468 = vmul.f32 %v1467, %v147
    %v1469 = vsub.f32 %v1455, %v1468
    %v1470 = vsub.f32 %v1457, %v1468
    %v1471 = vmul.f32 %v1469, %v1469
    %v1472 = vmul.f32 %v1470, %v1470
    %v1473 = vadd.f32 %v1471, %v1472
    %1474 = vadd.xlane.f32.xlu0 %v1473
    %v1475 = vpop.xlane.xlu0 %1474
    %v1476 = vmul.f32 %v1475, %v147
    %v1477 = vadd.f32 %v1476, 1e-05
    %v1478 = vrsqrt.pop %v1477
    %v1479 = vmul.f32 %v1469, %v1478
    %v1480 = vmul.f32 %v1470, %v1478
    %v1481 = vpack.c.bf16 %v1479, %v1479
    %v1482 = vpack.c.bf16 %v1480, %v1480
    %v1484 = vlaneseq
    %v1485 = vshrl.u32 %v1484, 7
    %v1486 = vsub.s32 0, %v1485
    %v1487 = vrot.slane %v1462, %v1486
    %v1488 = vlaneseq
    %v1489 = vshrl.u32 %v1488, 7
    %v1490 = vsub.s32 1, %v1489
    %v1491 = vrot.slane %v1462, %v1490
    %v1494 = vpack.c.bf16 %v1487, %v1487
    %v1495 = vpack.c.bf16 %v1491, %v1491
    %v1497 = vlaneseq
    %v1498 = vshrl.u32 %v1497, 7
    %v1499 = vsub.s32 0, %v1498
    %v1500 = vrot.slane %v1464, %v1499
    %v1501 = vlaneseq
    %v1502 = vshrl.u32 %v1501, 7
    %v1503 = vsub.s32 1, %v1502
    %v1504 = vrot.slane %v1464, %v1503
    %v1507 = vpack.c.bf16 %v1500, %v1500
    %v1508 = vpack.c.bf16 %v1504, %v1504
    %v1510 = vpack.i.b16 %v1494, %v1494
    %v1512 = vlaneseq
    %v1513 = vshrl.u32 %v1512, 7
    %v1514 = vsub.s32 0, %v1513
    %v1515 = vrot.slane %v1510, %v1514
    %v1517 = vpack.i.b16 %v1495, %v1495
    %v1519 = vlaneseq
    %v1520 = vshrl.u32 %v1519, 7
    %v1521 = vsub.s32 0, %v1520
    %v1522 = vrot.slane %v1517, %v1521
    %v1523 = vmul.bf16 %v1481, %v1515
    %v1524 = vmul.bf16 %v1482, %v1522
    %v1526 = vpack.i.b16 %v1507, %v1507
    %v1528 = vlaneseq
    %v1529 = vshrl.u32 %v1528, 7
    %v1530 = vsub.s32 0, %v1529
    %v1531 = vrot.slane %v1526, %v1530
    %v1533 = vpack.i.b16 %v1508, %v1508
    %v1535 = vlaneseq
    %v1536 = vshrl.u32 %v1535, 7
    %v1537 = vsub.s32 0, %v1536
    %v1538 = vrot.slane %v1533, %v1537
    %v1539 = vadd.bf16 %v1523, %v1531
    %v1540 = vadd.bf16 %v1524, %v1538
    %v1541 = vmul.bf16 %v1539, 1036860877
    %v1542 = vmul.bf16 %v1540, 1036860877
    %v1543 = vmax.bf16 %v1539, %v1541
    %v1544 = vmax.bf16 %v1540, %v1542
    %v1545 = vld [vmem:[#allocation2 + $0x20] sm:$0xff]
    %v1546 = vld [vmem:[#allocation2 + $0x60] sm:$0xff]
    %v1547 = vld [vmem:[#allocation2 + $0xa0] sm:$0xff]
    %v1548 = vld [vmem:[#allocation2 + $0xe0] sm:$0xff]
    %v1549 = vld [vmem:[#allocation2 + $0x120] sm:$0xff]
    %v1550 = vld [vmem:[#allocation2 + $0x160] sm:$0xff]
    %v1551 = vld [vmem:[#allocation2 + $0x1a0] sm:$0xff]
    %v1552 = vld [vmem:[#allocation2 + $0x1e0] sm:$0xff]
    %v1553 = vld [vmem:[#allocation2 + $0x220] sm:$0xff]
    %v1554 = vld [vmem:[#allocation2 + $0x260] sm:$0xff]
    %v1555 = vld [vmem:[#allocation2 + $0x2a0] sm:$0xff]
    %v1556 = vld [vmem:[#allocation2 + $0x2e0] sm:$0xff]
    %v1557 = vld [vmem:[#allocation2 + $0x320] sm:$0xff]
    %v1558 = vld [vmem:[#allocation2 + $0x360] sm:$0xff]
    %v1559 = vld [vmem:[#allocation2 + $0x3a0] sm:$0xff]
    %v1560 = vld [vmem:[#allocation2 + $0x3e0] sm:$0xff]
    %v1561 = vld [vmem:[#allocation2 + $0x420] sm:$0xff]
    %v1562 = vld [vmem:[#allocation2 + $0x460] sm:$0xff]
    %v1563 = vld [vmem:[#allocation2 + $0x4a0] sm:$0xff]
    %v1564 = vld [vmem:[#allocation2 + $0x4e0] sm:$0xff]
    %v1565 = vld [vmem:[#allocation2 + $0x520] sm:$0xff]
    %v1566 = vld [vmem:[#allocation2 + $0x560] sm:$0xff]
    %v1567 = vld [vmem:[#allocation2 + $0x5a0] sm:$0xff]
    %v1568 = vld [vmem:[#allocation2 + $0x5e0] sm:$0xff]
    %v1569 = vld [vmem:[#allocation2 + $0x620] sm:$0xff]
    %v1570 = vld [vmem:[#allocation2 + $0x660] sm:$0xff]
    %v1571 = vld [vmem:[#allocation2 + $0x6a0] sm:$0xff]
    %v1572 = vld [vmem:[#allocation2 + $0x6e0] sm:$0xff]
    %v1573 = vld [vmem:[#allocation2 + $0x720] sm:$0xff]
    %v1574 = vld [vmem:[#allocation2 + $0x760] sm:$0xff]
    %v1575 = vld [vmem:[#allocation2 + $0x7a0] sm:$0xff]
    %v1576 = vld [vmem:[#allocation2 + $0x7e0] sm:$0xff]
    %s1577 = scalar_lea.vmem %s6, 23
    %v1578 = vld [vmem:[%s1577] ss:$8 sm:$0x3]
    %v1580 = vlaneseq
    %v1581 = vshrl.u32 %v1580, 7
    %v1582 = vsub.s32 0, %v1581
    %v1583 = vrot.slane %v1578, %v1582
    %v1584 = vlaneseq
    %v1585 = vshrl.u32 %v1584, 7
    %v1586 = vsub.s32 1, %v1585
    %v1587 = vrot.slane %v1578, %v1586
    %v1622 = vunpack.c.l.b16 %v1545
    %v1623 = vunpack.c.h.b16 %v1545
    %v1624 = vunpack.c.l.b16 %v1546
    %v1625 = vunpack.c.h.b16 %v1546
    %v1626 = vunpack.c.l.b16 %v1547
    %v1627 = vunpack.c.h.b16 %v1547
    %v1628 = vunpack.c.l.b16 %v1548
    %v1629 = vunpack.c.h.b16 %v1548
    %v1630 = vunpack.c.l.b16 %v1549
    %v1631 = vunpack.c.h.b16 %v1549
    %v1632 = vunpack.c.l.b16 %v1550
    %v1633 = vunpack.c.h.b16 %v1550
    %v1634 = vunpack.c.l.b16 %v1551
    %v1635 = vunpack.c.h.b16 %v1551
    %v1636 = vunpack.c.l.b16 %v1552
    %v1637 = vunpack.c.h.b16 %v1552
    %v1638 = vunpack.c.l.b16 %v1553
    %v1639 = vunpack.c.h.b16 %v1553
    %v1640 = vunpack.c.l.b16 %v1554
    %v1641 = vunpack.c.h.b16 %v1554
    %v1642 = vunpack.c.l.b16 %v1555
    %v1643 = vunpack.c.h.b16 %v1555
    %v1644 = vunpack.c.l.b16 %v1556
    %v1645 = vunpack.c.h.b16 %v1556
    %v1646 = vunpack.c.l.b16 %v1557
    %v1647 = vunpack.c.h.b16 %v1557
    %v1648 = vunpack.c.l.b16 %v1558
    %v1649 = vunpack.c.h.b16 %v1558
    %v1650 = vunpack.c.l.b16 %v1559
    %v1651 = vunpack.c.h.b16 %v1559
    %v1652 = vunpack.c.l.b16 %v1560
    %v1653 = vunpack.c.h.b16 %v1560
    %v1654 = vunpack.c.l.b16 %v1561
    %v1655 = vunpack.c.h.b16 %v1561
    %v1656 = vunpack.c.l.b16 %v1562
    %v1657 = vunpack.c.h.b16 %v1562
    %v1658 = vunpack.c.l.b16 %v1563
    %v1659 = vunpack.c.h.b16 %v1563
    %v1660 = vunpack.c.l.b16 %v1564
    %v1661 = vunpack.c.h.b16 %v1564
    %v1662 = vunpack.c.l.b16 %v1565
    %v1663 = vunpack.c.h.b16 %v1565
    %v1664 = vunpack.c.l.b16 %v1566
    %v1665 = vunpack.c.h.b16 %v1566
    %v1666 = vunpack.c.l.b16 %v1567
    %v1667 = vunpack.c.h.b16 %v1567
    %v1668 = vunpack.c.l.b16 %v1568
    %v1669 = vunpack.c.h.b16 %v1568
    %v1670 = vunpack.c.l.b16 %v1569
    %v1671 = vunpack.c.h.b16 %v1569
    %v1672 = vunpack.c.l.b16 %v1570
    %v1673 = vunpack.c.h.b16 %v1570
    %v1674 = vunpack.c.l.b16 %v1571
    %v1675 = vunpack.c.h.b16 %v1571
    %v1676 = vunpack.c.l.b16 %v1572
    %v1677 = vunpack.c.h.b16 %v1572
    %v1678 = vunpack.c.l.b16 %v1573
    %v1679 = vunpack.c.h.b16 %v1573
    %v1680 = vunpack.c.l.b16 %v1574
    %v1681 = vunpack.c.h.b16 %v1574
    %v1682 = vunpack.c.l.b16 %v1575
    %v1683 = vunpack.c.h.b16 %v1575
    %v1684 = vunpack.c.l.b16 %v1576
    %v1685 = vunpack.c.h.b16 %v1576
    %v1686 = vpack.c.b16 %v1624, %v1622
    %v1687 = vpack.c.b16 %v1625, %v1623
    %v1688 = vpack.c.b16 %v1628, %v1626
    %v1689 = vpack.c.b16 %v1629, %v1627
    %v1690 = vpack.c.b16 %v1632, %v1630
    %v1691 = vpack.c.b16 %v1633, %v1631
    %v1692 = vpack.c.b16 %v1636, %v1634
    %v1693 = vpack.c.b16 %v1637, %v1635
    %v1694 = vpack.c.b16 %v1640, %v1638
    %v1695 = vpack.c.b16 %v1641, %v1639
    %v1696 = vpack.c.b16 %v1644, %v1642
    %v1697 = vpack.c.b16 %v1645, %v1643
    %v1698 = vpack.c.b16 %v1648, %v1646
    %v1699 = vpack.c.b16 %v1649, %v1647
    %v1700 = vpack.c.b16 %v1652, %v1650
    %v1701 = vpack.c.b16 %v1653, %v1651
    %v1702 = vpack.c.b16 %v1656, %v1654
    %v1703 = vpack.c.b16 %v1657, %v1655
    %v1704 = vpack.c.b16 %v1660, %v1658
    %v1705 = vpack.c.b16 %v1661, %v1659
    %v1706 = vpack.c.b16 %v1664, %v1662
    %v1707 = vpack.c.b16 %v1665, %v1663
    %v1708 = vpack.c.b16 %v1668, %v1666
    %v1709 = vpack.c.b16 %v1669, %v1667
    %v1710 = vpack.c.b16 %v1672, %v1670
    %v1711 = vpack.c.b16 %v1673, %v1671
    %v1712 = vpack.c.b16 %v1676, %v1674
    %v1713 = vpack.c.b16 %v1677, %v1675
    %v1714 = vpack.c.b16 %v1680, %v1678
    %v1715 = vpack.c.b16 %v1681, %v1679
    %v1716 = vpack.c.b16 %v1684, %v1682
    %v1717 = vpack.c.b16 %v1685, %v1683
    %1750 = vmatprep.subr.bf16.mxu0 %v1687
    %1751 = vmatpush1.bf16.msra.mxu0 %v1686
    %1752 = vmatprep.subr.bf16.mxu0 %v1689
    %1753 = vmatpush1.bf16.msra.mxu0 %v1688
    %1754 = vmatprep.subr.bf16.mxu0 %v1691
    %1755 = vmatpush1.bf16.msra.mxu0 %v1690
    %1756 = vmatprep.subr.bf16.mxu0 %v1693
    %1757 = vmatpush1.bf16.msra.mxu0 %v1692
    %1758 = vmatprep.subr.bf16.mxu0 %v1695
    %1759 = vmatpush1.bf16.msra.mxu0 %v1694
    %1760 = vmatprep.subr.bf16.mxu0 %v1697
    %1761 = vmatpush1.bf16.msra.mxu0 %v1696
    %1762 = vmatprep.subr.bf16.mxu0 %v1699
    %1763 = vmatpush1.bf16.msra.mxu0 %v1698
    %1764 = vmatprep.subr.bf16.mxu0 %v1701
    %1765 = vmatpush1.bf16.msra.mxu0 %v1700
    %1766 = vmatprep.subr.bf16.mxu0 %v1703
    %1767 = vmatpush1.bf16.msra.mxu0 %v1702
    %1768 = vmatprep.subr.bf16.mxu0 %v1705
    %1769 = vmatpush1.bf16.msra.mxu0 %v1704
    %1770 = vmatprep.subr.bf16.mxu0 %v1707
    %1771 = vmatpush1.bf16.msra.mxu0 %v1706
    %1772 = vmatprep.subr.bf16.mxu0 %v1709
    %1773 = vmatpush1.bf16.msra.mxu0 %v1708
    %1774 = vmatprep.subr.bf16.mxu0 %v1711
    %1775 = vmatpush1.bf16.msra.mxu0 %v1710
    %1776 = vmatprep.subr.bf16.mxu0 %v1713
    %1777 = vmatpush1.bf16.msra.mxu0 %v1712
    %1778 = vmatprep.subr.bf16.mxu0 %v1715
    %1779 = vmatpush1.bf16.msra.mxu0 %v1714
    %1780 = vmatprep.subr.bf16.mxu0 %v1717
    %1781 = vmatpush1.bf16.msra.mxu0 %v1716
    %1782 = vmatprep.mubr.bf16.mxu0 %v1544
    %1783 = vmatmul.mubr.bf16.gmra.mrb[0].mxu0 %v1543
    %v1784 = vpop.f32.mrb[0].mxu0
    %v1785 = vadd.f32 %v1583, %v1784
    %v1786 = vpop.f32.mrb[0].mxu0
    %v1787 = vadd.f32 %v1587, %v1786
    %v1788 = vpop.f32.mrb[0].mxu0
    %v1789 = vpop.f32.mrb[0].mxu0
    %1790 = vdwg.mxu0
    %s1791 = scalar_lea.vmem %s6, 32
    %v1792 = vld [vmem:[%s1791] ss:$8 sm:$0x3]
    %s1793 = scalar_lea.vmem %s6, 33
    %v1794 = vld [vmem:[%s1793] ss:$8 sm:$0x3]
    %v1795 = vadd.f32 %v1785, %v1787
    %1796 = vadd.xlane.f32.xlu0 %v1795
    %v1797 = vpop.xlane.xlu0 %1796
    %v1798 = vmul.f32 %v1797, %v147
    %v1799 = vsub.f32 %v1785, %v1798
    %v1800 = vsub.f32 %v1787, %v1798
    %v1801 = vmul.f32 %v1799, %v1799
    %v1802 = vmul.f32 %v1800, %v1800
    %v1803 = vadd.f32 %v1801, %v1802
    %1804 = vadd.xlane.f32.xlu0 %v1803
    %v1805 = vpop.xlane.xlu0 %1804
    %v1806 = vmul.f32 %v1805, %v147
    %v1807 = vadd.f32 %v1806, 1e-05
    %v1808 = vrsqrt.pop %v1807
    %v1809 = vmul.f32 %v1799, %v1808
    %v1810 = vmul.f32 %v1800, %v1808
    %v1811 = vpack.c.bf16 %v1809, %v1809
    %v1812 = vpack.c.bf16 %v1810, %v1810
    %v1814 = vlaneseq
    %v1815 = vshrl.u32 %v1814, 7
    %v1816 = vsub.s32 0, %v1815
    %v1817 = vrot.slane %v1792, %v1816
    %v1818 = vlaneseq
    %v1819 = vshrl.u32 %v1818, 7
    %v1820 = vsub.s32 1, %v1819
    %v1821 = vrot.slane %v1792, %v1820
    %v1824 = vpack.c.bf16 %v1817, %v1817
    %v1825 = vpack.c.bf16 %v1821, %v1821
    %v1827 = vlaneseq
    %v1828 = vshrl.u32 %v1827, 7
    %v1829 = vsub.s32 0, %v1828
    %v1830 = vrot.slane %v1794, %v1829
    %v1831 = vlaneseq
    %v1832 = vshrl.u32 %v1831, 7
    %v1833 = vsub.s32 1, %v1832
    %v1834 = vrot.slane %v1794, %v1833
    %v1837 = vpack.c.bf16 %v1830, %v1830
    %v1838 = vpack.c.bf16 %v1834, %v1834
    %v1840 = vpack.i.b16 %v1824, %v1824
    %v1842 = vlaneseq
    %v1843 = vshrl.u32 %v1842, 7
    %v1844 = vsub.s32 0, %v1843
    %v1845 = vrot.slane %v1840, %v1844
    %v1847 = vpack.i.b16 %v1825, %v1825
    %v1849 = vlaneseq
    %v1850 = vshrl.u32 %v1849, 7
    %v1851 = vsub.s32 0, %v1850
    %v1852 = vrot.slane %v1847, %v1851
    %v1853 = vmul.bf16 %v1811, %v1845
    %v1854 = vmul.bf16 %v1812, %v1852
    %v1856 = vpack.i.b16 %v1837, %v1837
    %v1858 = vlaneseq
    %v1859 = vshrl.u32 %v1858, 7
    %v1860 = vsub.s32 0, %v1859
    %v1861 = vrot.slane %v1856, %v1860
    %v1863 = vpack.i.b16 %v1838, %v1838
    %v1865 = vlaneseq
    %v1866 = vshrl.u32 %v1865, 7
    %v1867 = vsub.s32 0, %v1866
    %v1868 = vrot.slane %v1863, %v1867
    %v1869 = vadd.bf16 %v1853, %v1861
    %v1870 = vadd.bf16 %v1854, %v1868
    %v1871 = vmul.bf16 %v1869, 1036860877
    %v1872 = vmul.bf16 %v1870, 1036860877
    %v1873 = vmax.bf16 %v1869, %v1871
    %v1874 = vmax.bf16 %v1870, %v1872
    %v1875 = vunpack.c.l.bf16 %v1873
    %v1876 = vunpack.c.l.bf16 %v1874
    %v1877 = vld [vmem:[#allocation2 + $0x28] sm:$0xff]
    %v1878 = vld [vmem:[#allocation2 + $0x68] sm:$0xff]
    %v1879 = vld [vmem:[#allocation2 + $0xa8] sm:$0xff]
    %v1880 = vld [vmem:[#allocation2 + $0xe8] sm:$0xff]
    %v1881 = vld [vmem:[#allocation2 + $0x128] sm:$0xff]
    %v1882 = vld [vmem:[#allocation2 + $0x168] sm:$0xff]
    %v1883 = vld [vmem:[#allocation2 + $0x1a8] sm:$0xff]
    %v1884 = vld [vmem:[#allocation2 + $0x1e8] sm:$0xff]
    %v1885 = vld [vmem:[#allocation2 + $0x228] sm:$0xff]
    %v1886 = vld [vmem:[#allocation2 + $0x268] sm:$0xff]
    %v1887 = vld [vmem:[#allocation2 + $0x2a8] sm:$0xff]
    %v1888 = vld [vmem:[#allocation2 + $0x2e8] sm:$0xff]
    %v1889 = vld [vmem:[#allocation2 + $0x328] sm:$0xff]
    %v1890 = vld [vmem:[#allocation2 + $0x368] sm:$0xff]
    %v1891 = vld [vmem:[#allocation2 + $0x3a8] sm:$0xff]
    %v1892 = vld [vmem:[#allocation2 + $0x3e8] sm:$0xff]
    %v1893 = vld [vmem:[#allocation2 + $0x428] sm:$0xff]
    %v1894 = vld [vmem:[#allocation2 + $0x468] sm:$0xff]
    %v1895 = vld [vmem:[#allocation2 + $0x4a8] sm:$0xff]
    %v1896 = vld [vmem:[#allocation2 + $0x4e8] sm:$0xff]
    %v1897 = vld [vmem:[#allocation2 + $0x528] sm:$0xff]
    %v1898 = vld [vmem:[#allocation2 + $0x568] sm:$0xff]
    %v1899 = vld [vmem:[#allocation2 + $0x5a8] sm:$0xff]
    %v1900 = vld [vmem:[#allocation2 + $0x5e8] sm:$0xff]
    %v1901 = vld [vmem:[#allocation2 + $0x628] sm:$0xff]
    %v1902 = vld [vmem:[#allocation2 + $0x668] sm:$0xff]
    %v1903 = vld [vmem:[#allocation2 + $0x6a8] sm:$0xff]
    %v1904 = vld [vmem:[#allocation2 + $0x6e8] sm:$0xff]
    %v1905 = vld [vmem:[#allocation2 + $0x728] sm:$0xff]
    %v1906 = vld [vmem:[#allocation2 + $0x768] sm:$0xff]
    %v1907 = vld [vmem:[#allocation2 + $0x7a8] sm:$0xff]
    %v1908 = vld [vmem:[#allocation2 + $0x7e8] sm:$0xff]
    %v1941 = vunpack.c.l.b16 %v1877
    %v1942 = vunpack.c.h.b16 %v1877
    %v1943 = vunpack.c.l.b16 %v1878
    %v1944 = vunpack.c.h.b16 %v1878
    %v1945 = vunpack.c.l.b16 %v1879
    %v1946 = vunpack.c.h.b16 %v1879
    %v1947 = vunpack.c.l.b16 %v1880
    %v1948 = vunpack.c.h.b16 %v1880
    %v1949 = vunpack.c.l.b16 %v1881
    %v1950 = vunpack.c.h.b16 %v1881
    %v1951 = vunpack.c.l.b16 %v1882
    %v1952 = vunpack.c.h.b16 %v1882
    %v1953 = vunpack.c.l.b16 %v1883
    %v1954 = vunpack.c.h.b16 %v1883
    %v1955 = vunpack.c.l.b16 %v1884
    %v1956 = vunpack.c.h.b16 %v1884
    %v1957 = vunpack.c.l.b16 %v1885
    %v1958 = vunpack.c.h.b16 %v1885
    %v1959 = vunpack.c.l.b16 %v1886
    %v1960 = vunpack.c.h.b16 %v1886
    %v1961 = vunpack.c.l.b16 %v1887
    %v1962 = vunpack.c.h.b16 %v1887
    %v1963 = vunpack.c.l.b16 %v1888
    %v1964 = vunpack.c.h.b16 %v1888
    %v1965 = vunpack.c.l.b16 %v1889
    %v1966 = vunpack.c.h.b16 %v1889
    %v1967 = vunpack.c.l.b16 %v1890
    %v1968 = vunpack.c.h.b16 %v1890
    %v1969 = vunpack.c.l.b16 %v1891
    %v1970 = vunpack.c.h.b16 %v1891
    %v1971 = vunpack.c.l.b16 %v1892
    %v1972 = vunpack.c.h.b16 %v1892
    %v1973 = vunpack.c.l.b16 %v1893
    %v1974 = vunpack.c.h.b16 %v1893
    %v1975 = vunpack.c.l.b16 %v1894
    %v1976 = vunpack.c.h.b16 %v1894
    %v1977 = vunpack.c.l.b16 %v1895
    %v1978 = vunpack.c.h.b16 %v1895
    %v1979 = vunpack.c.l.b16 %v1896
    %v1980 = vunpack.c.h.b16 %v1896
    %v1981 = vunpack.c.l.b16 %v1897
    %v1982 = vunpack.c.h.b16 %v1897
    %v1983 = vunpack.c.l.b16 %v1898
    %v1984 = vunpack.c.h.b16 %v1898
    %v1985 = vunpack.c.l.b16 %v1899
    %v1986 = vunpack.c.h.b16 %v1899
    %v1987 = vunpack.c.l.b16 %v1900
    %v1988 = vunpack.c.h.b16 %v1900
    %v1989 = vunpack.c.l.b16 %v1901
    %v1990 = vunpack.c.h.b16 %v1901
    %v1991 = vunpack.c.l.b16 %v1902
    %v1992 = vunpack.c.h.b16 %v1902
    %v1993 = vunpack.c.l.b16 %v1903
    %v1994 = vunpack.c.h.b16 %v1903
    %v1995 = vunpack.c.l.b16 %v1904
    %v1996 = vunpack.c.h.b16 %v1904
    %v1997 = vunpack.c.l.b16 %v1905
    %v1998 = vunpack.c.h.b16 %v1905
    %v1999 = vunpack.c.l.b16 %v1906
    %v2000 = vunpack.c.h.b16 %v1906
    %v2001 = vunpack.c.l.b16 %v1907
    %v2002 = vunpack.c.h.b16 %v1907
    %v2003 = vunpack.c.l.b16 %v1908
    %v2004 = vunpack.c.h.b16 %v1908
    %v2005 = vpack.c.b16 %v1943, %v1941
    %v2006 = vpack.c.b16 %v1944, %v1942
    %v2007 = vpack.c.b16 %v1947, %v1945
    %v2008 = vpack.c.b16 %v1948, %v1946
    %v2009 = vpack.c.b16 %v1951, %v1949
    %v2010 = vpack.c.b16 %v1952, %v1950
    %v2011 = vpack.c.b16 %v1955, %v1953
    %v2012 = vpack.c.b16 %v1956, %v1954
    %v2013 = vpack.c.b16 %v1959, %v1957
    %v2014 = vpack.c.b16 %v1960, %v1958
    %v2015 = vpack.c.b16 %v1963, %v1961
    %v2016 = vpack.c.b16 %v1964, %v1962
    %v2017 = vpack.c.b16 %v1967, %v1965
    %v2018 = vpack.c.b16 %v1968, %v1966
    %v2019 = vpack.c.b16 %v1971, %v1969
    %v2020 = vpack.c.b16 %v1972, %v1970
    %v2021 = vpack.c.b16 %v1975, %v1973
    %v2022 = vpack.c.b16 %v1976, %v1974
    %v2023 = vpack.c.b16 %v1979, %v1977
    %v2024 = vpack.c.b16 %v1980, %v1978
    %v2025 = vpack.c.b16 %v1983, %v1981
    %v2026 = vpack.c.b16 %v1984, %v1982
    %v2027 = vpack.c.b16 %v1987, %v1985
    %v2028 = vpack.c.b16 %v1988, %v1986
    %v2029 = vpack.c.b16 %v1991, %v1989
    %v2030 = vpack.c.b16 %v1992, %v1990
    %v2031 = vpack.c.b16 %v1995, %v1993
    %v2032 = vpack.c.b16 %v1996, %v1994
    %v2033 = vpack.c.b16 %v1999, %v1997
    %v2034 = vpack.c.b16 %v2000, %v1998
    %v2035 = vpack.c.b16 %v2003, %v2001
    %v2036 = vpack.c.b16 %v2004, %v2002
    %2069 = vmatprep.subr.bf16.mxu0 %v2006
    %2070 = vmatpush1.bf16.msra.mxu0 %v2005
    %2071 = vmatprep.subr.bf16.mxu0 %v2008
    %2072 = vmatpush1.bf16.msra.mxu0 %v2007
    %2073 = vmatprep.subr.bf16.mxu0 %v2010
    %2074 = vmatpush1.bf16.msra.mxu0 %v2009
    %2075 = vmatprep.subr.bf16.mxu0 %v2012
    %2076 = vmatpush1.bf16.msra.mxu0 %v2011
    %2077 = vmatprep.subr.bf16.mxu0 %v2014
    %2078 = vmatpush1.bf16.msra.mxu0 %v2013
    %2079 = vmatprep.subr.bf16.mxu0 %v2016
    %2080 = vmatpush1.bf16.msra.mxu0 %v2015
    %2081 = vmatprep.subr.bf16.mxu0 %v2018
    %2082 = vmatpush1.bf16.msra.mxu0 %v2017
    %2083 = vmatprep.subr.bf16.mxu0 %v2020
    %2084 = vmatpush1.bf16.msra.mxu0 %v2019
    %2085 = vmatprep.subr.bf16.mxu0 %v2022
    %2086 = vmatpush1.bf16.msra.mxu0 %v2021
    %2087 = vmatprep.subr.bf16.mxu0 %v2024
    %2088 = vmatpush1.bf16.msra.mxu0 %v2023
    %2089 = vmatprep.subr.bf16.mxu0 %v2026
    %2090 = vmatpush1.bf16.msra.mxu0 %v2025
    %2091 = vmatprep.subr.bf16.mxu0 %v2028
    %2092 = vmatpush1.bf16.msra.mxu0 %v2027
    %2093 = vmatprep.subr.bf16.mxu0 %v2030
    %2094 = vmatpush1.bf16.msra.mxu0 %v2029
    %2095 = vmatprep.subr.bf16.mxu0 %v2032
    %2096 = vmatpush1.bf16.msra.mxu0 %v2031
    %2097 = vmatprep.subr.bf16.mxu0 %v2034
    %2098 = vmatpush1.bf16.msra.mxu0 %v2033
    %2099 = vmatprep.subr.bf16.mxu0 %v2036
    %2100 = vmatpush1.bf16.msra.mxu0 %v2035
    %2101 = vmatprep.mubr.bf16.mxu0 %v1874
    %2102 = vmatmul.mubr.bf16.gmra.mrb[0].mxu0 %v1873
    %v2103 = vpop.f32.mrb[0].mxu0
    %v2104 = vadd.f32 0.0, %v2103
    %v2105 = vpop.f32.mrb[0].mxu0
    %v2106 = vadd.f32 0.0, %v2105
    %v2107 = vpop.f32.mrb[0].mxu0
    %v2108 = vpop.f32.mrb[0].mxu0
    %2109 = vdwg.mxu0
    %v2110 = vadd.f32 %v1875, %v2104
    %v2111 = vadd.f32 %v1876, %v2106
    %s2112 = scalar_lea.vmem %s6, 34
    %v2113 = vld [vmem:[%s2112] ss:$8 sm:$0x3]
    %v2115 = vlaneseq
    %v2116 = vshrl.u32 %v2115, 7
    %v2117 = vsub.s32 0, %v2116
    %v2118 = vrot.slane %v2113, %v2117
    %v2119 = vlaneseq
    %v2120 = vshrl.u32 %v2119, 7
    %v2121 = vsub.s32 1, %v2120
    %v2122 = vrot.slane %v2113, %v2121
    %v2125 = vadd.f32 %v2110, %v2118
    %v2126 = vadd.f32 %v2111, %v2122
    %v2127 = vld [vmem:[#allocation2 + $0x30] sm:$0xff]
    %v2128 = vld [vmem:[#allocation2 + $0x38] sm:$0xff]
    %v2129 = vld [vmem:[#allocation2 + $0x70] sm:$0xff]
    %v2130 = vld [vmem:[#allocation2 + $0x78] sm:$0xff]
    %v2131 = vld [vmem:[#allocation2 + $0xb0] sm:$0xff]
    %v2132 = vld [vmem:[#allocation2 + $0xb8] sm:$0xff]
    %v2133 = vld [vmem:[#allocation2 + $0xf0] sm:$0xff]
    %v2134 = vld [vmem:[#allocation2 + $0xf8] sm:$0xff]
    %v2135 = vld [vmem:[#allocation2 + $0x130] sm:$0xff]
    %v2136 = vld [vmem:[#allocation2 + $0x138] sm:$0xff]
    %v2137 = vld [vmem:[#allocation2 + $0x170] sm:$0xff]
    %v2138 = vld [vmem:[#allocation2 + $0x178] sm:$0xff]
    %v2139 = vld [vmem:[#allocation2 + $0x1b0] sm:$0xff]
    %v2140 = vld [vmem:[#allocation2 + $0x1b8] sm:$0xff]
    %v2141 = vld [vmem:[#allocation2 + $0x1f0] sm:$0xff]
    %v2142 = vld [vmem:[#allocation2 + $0x1f8] sm:$0xff]
    %v2143 = vld [vmem:[#allocation2 + $0x230] sm:$0xff]
    %v2144 = vld [vmem:[#allocation2 + $0x238] sm:$0xff]
    %v2145 = vld [vmem:[#allocation2 + $0x270] sm:$0xff]
    %v2146 = vld [vmem:[#allocation2 + $0x278] sm:$0xff]
    %v2147 = vld [vmem:[#allocation2 + $0x2b0] sm:$0xff]
    %v2148 = vld [vmem:[#allocation2 + $0x2b8] sm:$0xff]
    %v2149 = vld [vmem:[#allocation2 + $0x2f0] sm:$0xff]
    %v2150 = vld [vmem:[#allocation2 + $0x2f8] sm:$0xff]
    %v2151 = vld [vmem:[#allocation2 + $0x330] sm:$0xff]
    %v2152 = vld [vmem:[#allocation2 + $0x338] sm:$0xff]
    %v2153 = vld [vmem:[#allocation2 + $0x370] sm:$0xff]
    %v2154 = vld [vmem:[#allocation2 + $0x378] sm:$0xff]
    %v2155 = vld [vmem:[#allocation2 + $0x3b0] sm:$0xff]
    %v2156 = vld [vmem:[#allocation2 + $0x3b8] sm:$0xff]
    %v2157 = vld [vmem:[#allocation2 + $0x3f0] sm:$0xff]
    %v2158 = vld [vmem:[#allocation2 + $0x3f8] sm:$0xff]
    %v2159 = vld [vmem:[#allocation2 + $0x430] sm:$0xff]
    %v2160 = vld [vmem:[#allocation2 + $0x438] sm:$0xff]
    %v2161 = vld [vmem:[#allocation2 + $0x470] sm:$0xff]
    %v2162 = vld [vmem:[#allocation2 + $0x478] sm:$0xff]
    %v2163 = vld [vmem:[#allocation2 + $0x4b0] sm:$0xff]
    %v2164 = vld [vmem:[#allocation2 + $0x4b8] sm:$0xff]
    %v2165 = vld [vmem:[#allocation2 + $0x4f0] sm:$0xff]
    %v2166 = vld [vmem:[#allocation2 + $0x4f8] sm:$0xff]
    %v2167 = vld [vmem:[#allocation2 + $0x530] sm:$0xff]
    %v2168 = vld [vmem:[#allocation2 + $0x538] sm:$0xff]
    %v2169 = vld [vmem:[#allocation2 + $0x570] sm:$0xff]
    %v2170 = vld [vmem:[#allocation2 + $0x578] sm:$0xff]
    %v2171 = vld [vmem:[#allocation2 + $0x5b0] sm:$0xff]
    %v2172 = vld [vmem:[#allocation2 + $0x5b8] sm:$0xff]
    %v2173 = vld [vmem:[#allocation2 + $0x5f0] sm:$0xff]
    %v2174 = vld [vmem:[#allocation2 + $0x5f8] sm:$0xff]
    %v2175 = vld [vmem:[#allocation2 + $0x630] sm:$0xff]
    %v2176 = vld [vmem:[#allocation2 + $0x638] sm:$0xff]
    %v2177 = vld [vmem:[#allocation2 + $0x670] sm:$0xff]
    %v2178 = vld [vmem:[#allocation2 + $0x678] sm:$0xff]
    %v2179 = vld [vmem:[#allocation2 + $0x6b0] sm:$0xff]
    %v2180 = vld [vmem:[#allocation2 + $0x6b8] sm:$0xff]
    %v2181 = vld [vmem:[#allocation2 + $0x6f0] sm:$0xff]
    %v2182 = vld [vmem:[#allocation2 + $0x6f8] sm:$0xff]
    %v2183 = vld [vmem:[#allocation2 + $0x730] sm:$0xff]
    %v2184 = vld [vmem:[#allocation2 + $0x738] sm:$0xff]
    %v2185 = vld [vmem:[#allocation2 + $0x770] sm:$0xff]
    %v2186 = vld [vmem:[#allocation2 + $0x778] sm:$0xff]
    %v2187 = vld [vmem:[#allocation2 + $0x7b0] sm:$0xff]
    %v2188 = vld [vmem:[#allocation2 + $0x7b8] sm:$0xff]
    %v2189 = vld [vmem:[#allocation2 + $0x7f0] sm:$0xff]
    %v2190 = vld [vmem:[#allocation2 + $0x7f8] sm:$0xff]
    %v2191 = vpack.c.bf16 %v2125, %v2125
    %v2192 = vpack.c.bf16 %v2126, %v2126
    %v2257 = vunpack.c.l.b16 %v2127
    %v2258 = vunpack.c.h.b16 %v2127
    %v2259 = vunpack.c.l.b16 %v2128
    %v2260 = vunpack.c.h.b16 %v2128
    %v2261 = vunpack.c.l.b16 %v2129
    %v2262 = vunpack.c.h.b16 %v2129
    %v2263 = vunpack.c.l.b16 %v2130
    %v2264 = vunpack.c.h.b16 %v2130
    %v2265 = vunpack.c.l.b16 %v2131
    %v2266 = vunpack.c.h.b16 %v2131
    %v2267 = vunpack.c.l.b16 %v2132
    %v2268 = vunpack.c.h.b16 %v2132
    %v2269 = vunpack.c.l.b16 %v2133
    %v2270 = vunpack.c.h.b16 %v2133
    %v2271 = vunpack.c.l.b16 %v2134
    %v2272 = vunpack.c.h.b16 %v2134
    %v2273 = vunpack.c.l.b16 %v2135
    %v2274 = vunpack.c.h.b16 %v2135
    %v2275 = vunpack.c.l.b16 %v2136
    %v2276 = vunpack.c.h.b16 %v2136
    %v2277 = vunpack.c.l.b16 %v2137
    %v2278 = vunpack.c.h.b16 %v2137
    %v2279 = vunpack.c.l.b16 %v2138
    %v2280 = vunpack.c.h.b16 %v2138
    %v2281 = vunpack.c.l.b16 %v2139
    %v2282 = vunpack.c.h.b16 %v2139
    %v2283 = vunpack.c.l.b16 %v2140
    %v2284 = vunpack.c.h.b16 %v2140
    %v2285 = vunpack.c.l.b16 %v2141
    %v2286 = vunpack.c.h.b16 %v2141
    %v2287 = vunpack.c.l.b16 %v2142
    %v2288 = vunpack.c.h.b16 %v2142
    %v2289 = vunpack.c.l.b16 %v2143
    %v2290 = vunpack.c.h.b16 %v2143
    %v2291 = vunpack.c.l.b16 %v2144
    %v2292 = vunpack.c.h.b16 %v2144
    %v2293 = vunpack.c.l.b16 %v2145
    %v2294 = vunpack.c.h.b16 %v2145
    %v2295 = vunpack.c.l.b16 %v2146
    %v2296 = vunpack.c.h.b16 %v2146
    %v2297 = vunpack.c.l.b16 %v2147
    %v2298 = vunpack.c.h.b16 %v2147
    %v2299 = vunpack.c.l.b16 %v2148
    %v2300 = vunpack.c.h.b16 %v2148
    %v2301 = vunpack.c.l.b16 %v2149
    %v2302 = vunpack.c.h.b16 %v2149
    %v2303 = vunpack.c.l.b16 %v2150
    %v2304 = vunpack.c.h.b16 %v2150
    %v2305 = vunpack.c.l.b16 %v2151
    %v2306 = vunpack.c.h.b16 %v2151
    %v2307 = vunpack.c.l.b16 %v2152
    %v2308 = vunpack.c.h.b16 %v2152
    %v2309 = vunpack.c.l.b16 %v2153
    %v2310 = vunpack.c.h.b16 %v2153
    %v2311 = vunpack.c.l.b16 %v2154
    %v2312 = vunpack.c.h.b16 %v2154
    %v2313 = vunpack.c.l.b16 %v2155
    %v2314 = vunpack.c.h.b16 %v2155
    %v2315 = vunpack.c.l.b16 %v2156
    %v2316 = vunpack.c.h.b16 %v2156
    %v2317 = vunpack.c.l.b16 %v2157
    %v2318 = vunpack.c.h.b16 %v2157
    %v2319 = vunpack.c.l.b16 %v2158
    %v2320 = vunpack.c.h.b16 %v2158
    %v2321 = vunpack.c.l.b16 %v2159
    %v2322 = vunpack.c.h.b16 %v2159
    %v2323 = vunpack.c.l.b16 %v2160
    %v2324 = vunpack.c.h.b16 %v2160
    %v2325 = vunpack.c.l.b16 %v2161
    %v2326 = vunpack.c.h.b16 %v2161
    %v2327 = vunpack.c.l.b16 %v2162
    %v2328 = vunpack.c.h.b16 %v2162
    %v2329 = vunpack.c.l.b16 %v2163
    %v2330 = vunpack.c.h.b16 %v2163
    %v2331 = vunpack.c.l.b16 %v2164
    %v2332 = vunpack.c.h.b16 %v2164
    %v2333 = vunpack.c.l.b16 %v2165
    %v2334 = vunpack.c.h.b16 %v2165
    %v2335 = vunpack.c.l.b16 %v2166
    %v2336 = vunpack.c.h.b16 %v2166
    %v2337 = vunpack.c.l.b16 %v2167
    %v2338 = vunpack.c.h.b16 %v2167
    %v2339 = vunpack.c.l.b16 %v2168
    %v2340 = vunpack.c.h.b16 %v2168
    %v2341 = vunpack.c.l.b16 %v2169
    %v2342 = vunpack.c.h.b16 %v2169
    %v2343 = vunpack.c.l.b16 %v2170
    %v2344 = vunpack.c.h.b16 %v2170
    %v2345 = vunpack.c.l.b16 %v2171
    %v2346 = vunpack.c.h.b16 %v2171
    %v2347 = vunpack.c.l.b16 %v2172
    %v2348 = vunpack.c.h.b16 %v2172
    %v2349 = vunpack.c.l.b16 %v2173
    %v2350 = vunpack.c.h.b16 %v2173
    %v2351 = vunpack.c.l.b16 %v2174
    %v2352 = vunpack.c.h.b16 %v2174
    %v2353 = vunpack.c.l.b16 %v2175
    %v2354 = vunpack.c.h.b16 %v2175
    %v2355 = vunpack.c.l.b16 %v2176
    %v2356 = vunpack.c.h.b16 %v2176
    %v2357 = vunpack.c.l.b16 %v2177
    %v2358 = vunpack.c.h.b16 %v2177
    %v2359 = vunpack.c.l.b16 %v2178
    %v2360 = vunpack.c.h.b16 %v2178
    %v2361 = vunpack.c.l.b16 %v2179
    %v2362 = vunpack.c.h.b16 %v2179
    %v2363 = vunpack.c.l.b16 %v2180
    %v2364 = vunpack.c.h.b16 %v2180
    %v2365 = vunpack.c.l.b16 %v2181
    %v2366 = vunpack.c.h.b16 %v2181
    %v2367 = vunpack.c.l.b16 %v2182
    %v2368 = vunpack.c.h.b16 %v2182
    %v2369 = vunpack.c.l.b16 %v2183
    %v2370 = vunpack.c.h.b16 %v2183
    %v2371 = vunpack.c.l.b16 %v2184
    %v2372 = vunpack.c.h.b16 %v2184
    %v2373 = vunpack.c.l.b16 %v2185
    %v2374 = vunpack.c.h.b16 %v2185
    %v2375 = vunpack.c.l.b16 %v2186
    %v2376 = vunpack.c.h.b16 %v2186
    %v2377 = vunpack.c.l.b16 %v2187
    %v2378 = vunpack.c.h.b16 %v2187
    %v2379 = vunpack.c.l.b16 %v2188
    %v2380 = vunpack.c.h.b16 %v2188
    %v2381 = vunpack.c.l.b16 %v2189
    %v2382 = vunpack.c.h.b16 %v2189
    %v2383 = vunpack.c.l.b16 %v2190
    %v2384 = vunpack.c.h.b16 %v2190
    %v2385 = vpack.c.b16 %v2261, %v2257
    %v2386 = vpack.c.b16 %v2262, %v2258
    %v2387 = vpack.c.b16 %v2263, %v2259
    %v2388 = vpack.c.b16 %v2264, %v2260
    %v2389 = vpack.c.b16 %v2269, %v2265
    %v2390 = vpack.c.b16 %v2270, %v2266
    %v2391 = vpack.c.b16 %v2271, %v2267
    %v2392 = vpack.c.b16 %v2272, %v2268
    %v2393 = vpack.c.b16 %v2277, %v2273
    %v2394 = vpack.c.b16 %v2278, %v2274
    %v2395 = vpack.c.b16 %v2279, %v2275
    %v2396 = vpack.c.b16 %v2280, %v2276
    %v2397 = vpack.c.b16 %v2285, %v2281
    %v2398 = vpack.c.b16 %v2286, %v2282
    %v2399 = vpack.c.b16 %v2287, %v2283
    %v2400 = vpack.c.b16 %v2288, %v2284
    %v2401 = vpack.c.b16 %v2293, %v2289
    %v2402 = vpack.c.b16 %v2294, %v2290
    %v2403 = vpack.c.b16 %v2295, %v2291
    %v2404 = vpack.c.b16 %v2296, %v2292
    %v2405 = vpack.c.b16 %v2301, %v2297
    %v2406 = vpack.c.b16 %v2302, %v2298
    %v2407 = vpack.c.b16 %v2303, %v2299
    %v2408 = vpack.c.b16 %v2304, %v2300
    %v2409 = vpack.c.b16 %v2309, %v2305
    %v2410 = vpack.c.b16 %v2310, %v2306
    %v2411 = vpack.c.b16 %v2311, %v2307
    %v2412 = vpack.c.b16 %v2312, %v2308
    %v2413 = vpack.c.b16 %v2317, %v2313
    %v2414 = vpack.c.b16 %v2318, %v2314
    %v2415 = vpack.c.b16 %v2319, %v2315
    %v2416 = vpack.c.b16 %v2320, %v2316
    %v2417 = vpack.c.b16 %v2325, %v2321
    %v2418 = vpack.c.b16 %v2326, %v2322
    %v2419 = vpack.c.b16 %v2327, %v2323
    %v2420 = vpack.c.b16 %v2328, %v2324
    %v2421 = vpack.c.b16 %v2333, %v2329
    %v2422 = vpack.c.b16 %v2334, %v2330
    %v2423 = vpack.c.b16 %v2335, %v2331
    %v2424 = vpack.c.b16 %v2336, %v2332
    %v2425 = vpack.c.b16 %v2341, %v2337
    %v2426 = vpack.c.b16 %v2342, %v2338
    %v2427 = vpack.c.b16 %v2343, %v2339
    %v2428 = vpack.c.b16 %v2344, %v2340
    %v2429 = vpack.c.b16 %v2349, %v2345
    %v2430 = vpack.c.b16 %v2350, %v2346
    %v2431 = vpack.c.b16 %v2351, %v2347
    %v2432 = vpack.c.b16 %v2352, %v2348
    %v2433 = vpack.c.b16 %v2357, %v2353
    %v2434 = vpack.c.b16 %v2358, %v2354
    %v2435 = vpack.c.b16 %v2359, %v2355
    %v2436 = vpack.c.b16 %v2360, %v2356
    %v2437 = vpack.c.b16 %v2365, %v2361
    %v2438 = vpack.c.b16 %v2366, %v2362
    %v2439 = vpack.c.b16 %v2367, %v2363
    %v2440 = vpack.c.b16 %v2368, %v2364
    %v2441 = vpack.c.b16 %v2373, %v2369
    %v2442 = vpack.c.b16 %v2374, %v2370
    %v2443 = vpack.c.b16 %v2375, %v2371
    %v2444 = vpack.c.b16 %v2376, %v2372
    %v2445 = vpack.c.b16 %v2381, %v2377
    %v2446 = vpack.c.b16 %v2382, %v2378
    %v2447 = vpack.c.b16 %v2383, %v2379
    %v2448 = vpack.c.b16 %v2384, %v2380
    %2513 = vmatprep.subr.bf16.mxu0 %v2386
    %2514 = vmatpush1.bf16.msra.mxu0 %v2385
    %2515 = vmatprep.subr.bf16.mxu0 %v2390
    %2516 = vmatpush1.bf16.msra.mxu0 %v2389
    %2517 = vmatprep.subr.bf16.mxu0 %v2394
    %2518 = vmatpush1.bf16.msra.mxu0 %v2393
    %2519 = vmatprep.subr.bf16.mxu0 %v2398
    %2520 = vmatpush1.bf16.msra.mxu0 %v2397
    %2521 = vmatprep.subr.bf16.mxu0 %v2402
    %2522 = vmatpush1.bf16.msra.mxu0 %v2401
    %2523 = vmatprep.subr.bf16.mxu0 %v2406
    %2524 = vmatpush1.bf16.msra.mxu0 %v2405
    %2525 = vmatprep.subr.bf16.mxu0 %v2410
    %2526 = vmatpush1.bf16.msra.mxu0 %v2409
    %2527 = vmatprep.subr.bf16.mxu0 %v2414
    %2528 = vmatpush1.bf16.msra.mxu0 %v2413
    %2529 = vmatprep.subr.bf16.mxu0 %v2418
    %2530 = vmatpush1.bf16.msra.mxu0 %v2417
    %2531 = vmatprep.subr.bf16.mxu0 %v2422
    %2532 = vmatpush1.bf16.msra.mxu0 %v2421
    %2533 = vmatprep.subr.bf16.mxu0 %v2426
    %2534 = vmatpush1.bf16.msra.mxu0 %v2425
    %2535 = vmatprep.subr.bf16.mxu0 %v2430
    %2536 = vmatpush1.bf16.msra.mxu0 %v2429
    %2537 = vmatprep.subr.bf16.mxu0 %v2434
    %2538 = vmatpush1.bf16.msra.mxu0 %v2433
    %2539 = vmatprep.subr.bf16.mxu0 %v2438
    %2540 = vmatpush1.bf16.msra.mxu0 %v2437
    %2541 = vmatprep.subr.bf16.mxu0 %v2442
    %2542 = vmatpush1.bf16.msra.mxu0 %v2441
    %2543 = vmatprep.subr.bf16.mxu0 %v2446
    %2544 = vmatpush1.bf16.msra.mxu0 %v2445
    %2545 = vmatprep.mubr.bf16.mxu0 %v2192
    %2546 = vmatmul.mubr.bf16.gmra.mrb[0].mxu0 %v2191
    %v2547 = vpop.f32.mrb[0].mxu0
    %v2548 = vadd.f32 0.0, %v2547
    %v2549 = vpop.f32.mrb[0].mxu0
    %v2550 = vadd.f32 0.0, %v2549
    %v2551 = vpop.f32.mrb[0].mxu0
    %v2552 = vpop.f32.mrb[0].mxu0
    %2553 = vdwg.mxu0
    %2554 = vmatprep.subr.bf16.mxu0 %v2388
    %2555 = vmatpush1.bf16.msra.mxu0 %v2387
    %2556 = vmatprep.subr.bf16.mxu0 %v2392
    %2557 = vmatpush1.bf16.msra.mxu0 %v2391
    %2558 = vmatprep.subr.bf16.mxu0 %v2396
    %2559 = vmatpush1.bf16.msra.mxu0 %v2395
    %2560 = vmatprep.subr.bf16.mxu0 %v2400
    %2561 = vmatpush1.bf16.msra.mxu0 %v2399
    %2562 = vmatprep.subr.bf16.mxu0 %v2404
    %2563 = vmatpush1.bf16.msra.mxu0 %v2403
    %2564 = vmatprep.subr.bf16.mxu0 %v2408
    %2565 = vmatpush1.bf16.msra.mxu0 %v2407
    %2566 = vmatprep.subr.bf16.mxu0 %v2412
    %2567 = vmatpush1.bf16.msra.mxu0 %v2411
    %2568 = vmatprep.subr.bf16.mxu0 %v2416
    %2569 = vmatpush1.bf16.msra.mxu0 %v2415
    %2570 = vmatprep.subr.bf16.mxu0 %v2420
    %2571 = vmatpush1.bf16.msra.mxu0 %v2419
    %2572 = vmatprep.subr.bf16.mxu0 %v2424
    %2573 = vmatpush1.bf16.msra.mxu0 %v2423
    %2574 = vmatprep.subr.bf16.mxu0 %v2428
    %2575 = vmatpush1.bf16.msra.mxu0 %v2427
    %2576 = vmatprep.subr.bf16.mxu0 %v2432
    %2577 = vmatpush1.bf16.msra.mxu0 %v2431
    %2578 = vmatprep.subr.bf16.mxu0 %v2436
    %2579 = vmatpush1.bf16.msra.mxu0 %v2435
    %2580 = vmatprep.subr.bf16.mxu0 %v2440
    %2581 = vmatpush1.bf16.msra.mxu0 %v2439
    %2582 = vmatprep.subr.bf16.mxu0 %v2444
    %2583 = vmatpush1.bf16.msra.mxu0 %v2443
    %2584 = vmatprep.subr.bf16.mxu0 %v2448
    %2585 = vmatpush1.bf16.msra.mxu0 %v2447
    %2586 = vmatprep.mubr.bf16.mxu0 %v2192
    %2587 = vmatmul.mubr.bf16.gmra.mrb[0].mxu0 %v2191
    %v2588 = vpop.f32.mrb[0].mxu0
    %v2589 = vadd.f32 0.0, %v2588
    %v2590 = vpop.f32.mrb[0].mxu0
    %v2591 = vadd.f32 0.0, %v2590
    %v2592 = vpop.f32.mrb[0].mxu0
    %v2593 = vpop.f32.mrb[0].mxu0
    %2594 = vdwg.mxu0
    %s2595 = scalar_lea.vmem %s6, 35
    %v2596 = vld [vmem:[%s2595] ss:$8 sm:$0x3]
    %v2598 = vlaneseq
    %v2599 = vshrl.u32 %v2598, 7
    %v2600 = vsub.s32 0, %v2599
    %v2601 = vrot.slane %v2596, %v2600
    %v2602 = vlaneseq
    %v2603 = vshrl.u32 %v2602, 7
    %v2604 = vsub.s32 1, %v2603
    %v2605 = vrot.slane %v2596, %v2604
    %v2608 = vadd.f32 %v2548, %v2601
    %v2609 = vadd.f32 %v2550, %v2605
    %s2610 = scalar_lea.vmem %s6, 36
    %v2611 = vld [vmem:[%s2610] ss:$8 sm:$0x3]
    %s2612 = scalar_lea.vmem %s6, 37
    %v2613 = vld [vmem:[%s2612] ss:$8 sm:$0x3]
    %v2614 = vadd.f32 %v2608, %v2609
    %2615 = vadd.xlane.f32.xlu0 %v2614
    %v2616 = vpop.xlane.xlu0 %2615
    %v2617 = vmul.f32 %v2616, %v147
    %v2618 = vsub.f32 %v2608, %v2617
    %v2619 = vsub.f32 %v2609, %v2617
    %v2620 = vmul.f32 %v2618, %v2618
    %v2621 = vmul.f32 %v2619, %v2619
    %v2622 = vadd.f32 %v2620, %v2621
    %2623 = vadd.xlane.f32.xlu0 %v2622
    %v2624 = vpop.xlane.xlu0 %2623
    %v2625 = vmul.f32 %v2624, %v147
    %v2626 = vadd.f32 %v2625, 1e-05
    %v2627 = vrsqrt.pop %v2626
    %v2628 = vmul.f32 %v2618, %v2627
    %v2629 = vmul.f32 %v2619, %v2627
    %v2630 = vpack.c.bf16 %v2628, %v2628
    %v2631 = vpack.c.bf16 %v2629, %v2629
    %v2633 = vlaneseq
    %v2634 = vshrl.u32 %v2633, 7
    %v2635 = vsub.s32 0, %v2634
    %v2636 = vrot.slane %v2611, %v2635
    %v2637 = vlaneseq
    %v2638 = vshrl.u32 %v2637, 7
    %v2639 = vsub.s32 1, %v2638
    %v2640 = vrot.slane %v2611, %v2639
    %v2643 = vpack.c.bf16 %v2636, %v2636
    %v2644 = vpack.c.bf16 %v2640, %v2640
    %v2646 = vlaneseq
    %v2647 = vshrl.u32 %v2646, 7
    %v2648 = vsub.s32 0, %v2647
    %v2649 = vrot.slane %v2613, %v2648
    %v2650 = vlaneseq
    %v2651 = vshrl.u32 %v2650, 7
    %v2652 = vsub.s32 1, %v2651
    %v2653 = vrot.slane %v2613, %v2652
    %v2656 = vpack.c.bf16 %v2649, %v2649
    %v2657 = vpack.c.bf16 %v2653, %v2653
    %v2659 = vpack.i.b16 %v2643, %v2643
    %v2661 = vlaneseq
    %v2662 = vshrl.u32 %v2661, 7
    %v2663 = vsub.s32 0, %v2662
    %v2664 = vrot.slane %v2659, %v2663
    %v2666 = vpack.i.b16 %v2644, %v2644
    %v2668 = vlaneseq
    %v2669 = vshrl.u32 %v2668, 7
    %v2670 = vsub.s32 0, %v2669
    %v2671 = vrot.slane %v2666, %v2670
    %v2672 = vmul.bf16 %v2630, %v2664
    %v2673 = vmul.bf16 %v2631, %v2671
    %v2675 = vpack.i.b16 %v2656, %v2656
    %v2677 = vlaneseq
    %v2678 = vshrl.u32 %v2677, 7
    %v2679 = vsub.s32 0, %v2678
    %v2680 = vrot.slane %v2675, %v2679
    %v2682 = vpack.i.b16 %v2657, %v2657
    %v2684 = vlaneseq
    %v2685 = vshrl.u32 %v2684, 7
    %v2686 = vsub.s32 0, %v2685
    %v2687 = vrot.slane %v2682, %v2686
    %v2688 = vadd.bf16 %v2672, %v2680
    %v2689 = vadd.bf16 %v2673, %v2687
    %v2690 = vmul.bf16 %v2688, 1036860877
    %v2691 = vmul.bf16 %v2689, 1036860877
    %v2692 = vmax.bf16 %v2688, %v2690
    %v2693 = vmax.bf16 %v2689, %v2691
    %s2694 = scalar_lea.vmem %s6, 38
    %v2695 = vld [vmem:[%s2694] ss:$8 sm:$0x3]
    %v2697 = vlaneseq
    %v2698 = vshrl.u32 %v2697, 7
    %v2699 = vsub.s32 0, %v2698
    %v2700 = vrot.slane %v2695, %v2699
    %v2701 = vlaneseq
    %v2702 = vshrl.u32 %v2701, 7
    %v2703 = vsub.s32 1, %v2702
    %v2704 = vrot.slane %v2695, %v2703
    %v2707 = vadd.f32 %v2589, %v2700
    %v2708 = vadd.f32 %v2591, %v2704
    %s2709 = scalar_lea.vmem %s6, 39
    %v2710 = vld [vmem:[%s2709] ss:$8 sm:$0x3]
    %s2711 = scalar_lea.vmem %s6, 48
    %v2712 = vld [vmem:[%s2711] ss:$8 sm:$0x3]
    %v2713 = vadd.f32 %v2707, %v2708
    %2714 = vadd.xlane.f32.xlu0 %v2713
    %v2715 = vpop.xlane.xlu0 %2714
    %v2716 = vmul.f32 %v2715, %v147
    %v2717 = vsub.f32 %v2707, %v2716
    %v2718 = vsub.f32 %v2708, %v2716
    %v2719 = vmul.f32 %v2717, %v2717
    %v2720 = vmul.f32 %v2718, %v2718
    %v2721 = vadd.f32 %v2719, %v2720
    %2722 = vadd.xlane.f32.xlu0 %v2721
    %v2723 = vpop.xlane.xlu0 %2722
    %v2724 = vmul.f32 %v2723, %v147
    %v2725 = vadd.f32 %v2724, 1e-05
    %v2726 = vrsqrt.pop %v2725
    %v2727 = vmul.f32 %v2717, %v2726
    %v2728 = vmul.f32 %v2718, %v2726
    %v2729 = vpack.c.bf16 %v2727, %v2727
    %v2730 = vpack.c.bf16 %v2728, %v2728
    %v2732 = vlaneseq
    %v2733 = vshrl.u32 %v2732, 7
    %v2734 = vsub.s32 0, %v2733
    %v2735 = vrot.slane %v2710, %v2734
    %v2736 = vlaneseq
    %v2737 = vshrl.u32 %v2736, 7
    %v2738 = vsub.s32 1, %v2737
    %v2739 = vrot.slane %v2710, %v2738
    %v2742 = vpack.c.bf16 %v2735, %v2735
    %v2743 = vpack.c.bf16 %v2739, %v2739
    %v2745 = vlaneseq
    %v2746 = vshrl.u32 %v2745, 7
    %v2747 = vsub.s32 0, %v2746
    %v2748 = vrot.slane %v2712, %v2747
    %v2749 = vlaneseq
    %v2750 = vshrl.u32 %v2749, 7
    %v2751 = vsub.s32 1, %v2750
    %v2752 = vrot.slane %v2712, %v2751
    %v2755 = vpack.c.bf16 %v2748, %v2748
    %v2756 = vpack.c.bf16 %v2752, %v2752
    %v2758 = vpack.i.b16 %v2742, %v2742
    %v2760 = vlaneseq
    %v2761 = vshrl.u32 %v2760, 7
    %v2762 = vsub.s32 0, %v2761
    %v2763 = vrot.slane %v2758, %v2762
    %v2765 = vpack.i.b16 %v2743, %v2743
    %v2767 = vlaneseq
    %v2768 = vshrl.u32 %v2767, 7
    %v2769 = vsub.s32 0, %v2768
    %v2770 = vrot.slane %v2765, %v2769
    %v2771 = vmul.bf16 %v2729, %v2763
    %v2772 = vmul.bf16 %v2730, %v2770
    %v2774 = vpack.i.b16 %v2755, %v2755
    %v2776 = vlaneseq
    %v2777 = vshrl.u32 %v2776, 7
    %v2778 = vsub.s32 0, %v2777
    %v2779 = vrot.slane %v2774, %v2778
    %v2781 = vpack.i.b16 %v2756, %v2756
    %v2783 = vlaneseq
    %v2784 = vshrl.u32 %v2783, 7
    %v2785 = vsub.s32 0, %v2784
    %v2786 = vrot.slane %v2781, %v2785
    %v2787 = vadd.bf16 %v2771, %v2779
    %v2788 = vadd.bf16 %v2772, %v2786
    %v2789 = vmul.bf16 %v2787, 1036860877
    %v2790 = vmul.bf16 %v2788, 1036860877
    %v2791 = vmax.bf16 %v2787, %v2789
    %v2792 = vmax.bf16 %v2788, %v2790
    %v2793 = vld [vmem:[#allocation5] sm:$0xf]
    %v2794 = vld [vmem:[#allocation5 + $0x4] sm:$0xf]
    %v2795 = vld [vmem:[#allocation5 + $0x8] sm:$0xf]
    %v2796 = vld [vmem:[#allocation5 + $0xc] sm:$0xf]
    %v2797 = vld [vmem:[#allocation5 + $0x10] sm:$0xf]
    %v2798 = vld [vmem:[#allocation5 + $0x14] sm:$0xf]
    %v2799 = vld [vmem:[#allocation5 + $0x18] sm:$0xf]
    %v2800 = vld [vmem:[#allocation5 + $0x1c] sm:$0xf]
    %v2801 = vld [vmem:[#allocation5 + $0x20] sm:$0xf]
    %v2802 = vld [vmem:[#allocation5 + $0x24] sm:$0xf]
    %v2803 = vld [vmem:[#allocation5 + $0x28] sm:$0xf]
    %v2804 = vld [vmem:[#allocation5 + $0x2c] sm:$0xf]
    %v2805 = vld [vmem:[#allocation5 + $0x30] sm:$0xf]
    %v2806 = vld [vmem:[#allocation5 + $0x34] sm:$0xf]
    %v2807 = vld [vmem:[#allocation5 + $0x38] sm:$0xf]
    %v2808 = vld [vmem:[#allocation5 + $0x3c] sm:$0xf]
    %v2809 = vld [vmem:[#allocation5 + $0x40] sm:$0xf]
    %v2810 = vld [vmem:[#allocation5 + $0x44] sm:$0xf]
    %v2811 = vld [vmem:[#allocation5 + $0x48] sm:$0xf]
    %v2812 = vld [vmem:[#allocation5 + $0x4c] sm:$0xf]
    %v2813 = vld [vmem:[#allocation5 + $0x50] sm:$0xf]
    %v2814 = vld [vmem:[#allocation5 + $0x54] sm:$0xf]
    %v2815 = vld [vmem:[#allocation5 + $0x58] sm:$0xf]
    %v2816 = vld [vmem:[#allocation5 + $0x5c] sm:$0xf]
    %v2817 = vld [vmem:[#allocation5 + $0x60] sm:$0xf]
    %v2818 = vld [vmem:[#allocation5 + $0x64] sm:$0xf]
    %v2819 = vld [vmem:[#allocation5 + $0x68] sm:$0xf]
    %v2820 = vld [vmem:[#allocation5 + $0x6c] sm:$0xf]
    %v2821 = vld [vmem:[#allocation5 + $0x70] sm:$0xf]
    %v2822 = vld [vmem:[#allocation5 + $0x74] sm:$0xf]
    %v2823 = vld [vmem:[#allocation5 + $0x78] sm:$0xf]
    %v2824 = vld [vmem:[#allocation5 + $0x7c] sm:$0xf]
    %v2825 = vld [vmem:[%s6 + $0x31] ss:$0 sm:$0xff]
    %v2858 = vunpack.c.l.b16 %v2793
    %v2859 = vunpack.c.l.b16 %v2794
    %v2860 = vunpack.c.l.b16 %v2795
    %v2861 = vunpack.c.l.b16 %v2796
    %v2862 = vunpack.c.l.b16 %v2797
    %v2863 = vunpack.c.l.b16 %v2798
    %v2864 = vunpack.c.l.b16 %v2799
    %v2865 = vunpack.c.l.b16 %v2800
    %v2866 = vunpack.c.l.b16 %v2801
    %v2867 = vunpack.c.l.b16 %v2802
    %v2868 = vunpack.c.l.b16 %v2803
    %v2869 = vunpack.c.l.b16 %v2804
    %v2870 = vunpack.c.l.b16 %v2805
    %v2871 = vunpack.c.l.b16 %v2806
    %v2872 = vunpack.c.l.b16 %v2807
    %v2873 = vunpack.c.l.b16 %v2808
    %v2874 = vunpack.c.l.b16 %v2809
    %v2875 = vunpack.c.l.b16 %v2810
    %v2876 = vunpack.c.l.b16 %v2811
    %v2877 = vunpack.c.l.b16 %v2812
    %v2878 = vunpack.c.l.b16 %v2813
    %v2879 = vunpack.c.l.b16 %v2814
    %v2880 = vunpack.c.l.b16 %v2815
    %v2881 = vunpack.c.l.b16 %v2816
    %v2882 = vunpack.c.l.b16 %v2817
    %v2883 = vunpack.c.l.b16 %v2818
    %v2884 = vunpack.c.l.b16 %v2819
    %v2885 = vunpack.c.l.b16 %v2820
    %v2886 = vunpack.c.l.b16 %v2821
    %v2887 = vunpack.c.l.b16 %v2822
    %v2888 = vunpack.c.l.b16 %v2823
    %v2889 = vunpack.c.l.b16 %v2824
    %v2890 = vpack.c.b16 %v2859, %v2858
    %v2891 = vpack.c.b16 %v2861, %v2860
    %v2892 = vpack.c.b16 %v2863, %v2862
    %v2893 = vpack.c.b16 %v2865, %v2864
    %v2894 = vpack.c.b16 %v2867, %v2866
    %v2895 = vpack.c.b16 %v2869, %v2868
    %v2896 = vpack.c.b16 %v2871, %v2870
    %v2897 = vpack.c.b16 %v2873, %v2872
    %v2898 = vpack.c.b16 %v2875, %v2874
    %v2899 = vpack.c.b16 %v2877, %v2876
    %v2900 = vpack.c.b16 %v2879, %v2878
    %v2901 = vpack.c.b16 %v2881, %v2880
    %v2902 = vpack.c.b16 %v2883, %v2882
    %v2903 = vpack.c.b16 %v2885, %v2884
    %v2904 = vpack.c.b16 %v2887, %v2886
    %v2905 = vpack.c.b16 %v2889, %v2888
    %2922 = vmatprep.subr.bf16.mxu0 0
    %2923 = vmatpush1.bf16.msra.mxu0 %v2890
    %2924 = vmatprep.subr.bf16.mxu0 0
    %2925 = vmatpush1.bf16.msra.mxu0 %v2891
    %2926 = vmatprep.subr.bf16.mxu0 0
    %2927 = vmatpush1.bf16.msra.mxu0 %v2892
    %2928 = vmatprep.subr.bf16.mxu0 0
    %2929 = vmatpush1.bf16.msra.mxu0 %v2893
    %2930 = vmatprep.subr.bf16.mxu0 0
    %2931 = vmatpush1.bf16.msra.mxu0 %v2894
    %2932 = vmatprep.subr.bf16.mxu0 0
    %2933 = vmatpush1.bf16.msra.mxu0 %v2895
    %2934 = vmatprep.subr.bf16.mxu0 0
    %2935 = vmatpush1.bf16.msra.mxu0 %v2896
    %2936 = vmatprep.subr.bf16.mxu0 0
    %2937 = vmatpush1.bf16.msra.mxu0 %v2897
    %2938 = vmatprep.subr.bf16.mxu0 0
    %2939 = vmatpush1.bf16.msra.mxu0 %v2898
    %2940 = vmatprep.subr.bf16.mxu0 0
    %2941 = vmatpush1.bf16.msra.mxu0 %v2899
    %2942 = vmatprep.subr.bf16.mxu0 0
    %2943 = vmatpush1.bf16.msra.mxu0 %v2900
    %2944 = vmatprep.subr.bf16.mxu0 0
    %2945 = vmatpush1.bf16.msra.mxu0 %v2901
    %2946 = vmatprep.subr.bf16.mxu0 0
    %2947 = vmatpush1.bf16.msra.mxu0 %v2902
    %2948 = vmatprep.subr.bf16.mxu0 0
    %2949 = vmatpush1.bf16.msra.mxu0 %v2903
    %2950 = vmatprep.subr.bf16.mxu0 0
    %2951 = vmatpush1.bf16.msra.mxu0 %v2904
    %2952 = vmatprep.subr.bf16.mxu0 0
    %2953 = vmatpush1.bf16.msra.mxu0 %v2905
    %2954 = vmatprep.mubr.bf16.mxu0 %v2693
    %2955 = vmatmul.mubr.bf16.gmra.mrb[0].mxu0 %v2692
    %v2956 = vpop.f32.mrb[0].mxu0
    %v2957 = vadd.f32 %v2825, %v2956
    %v2958 = vpop.f32.mrb[0].mxu0
    %v2959 = vpop.f32.mrb[0].mxu0
    %v2960 = vpop.f32.mrb[0].mxu0
    %2961 = vdwg.mxu0
    %v2962 = vld [vmem:[%s6 + $0x32] ss:$0 sm:$0xff]
    %v2963 = vld [vmem:[%s6 + $0x33] ss:$0 sm:$0xff]
    %2964 = vadd.xlane.f32.xlu0 %v2957
    %v2965 = vpop.xlane.xlu0 %2964
    %v2966 = vrcp.pop 128.0
    %v2967 = vmul.f32 %v2965, %v2966
    %v2968 = vsub.f32 %v2957, %v2967
    %v2969 = vmul.f32 %v2968, %v2968
    %2970 = vadd.xlane.f32.xlu0 %v2969
    %v2971 = vpop.xlane.xlu0 %2970
    %v2972 = vmul.f32 %v2971, %v2966
    %v2973 = vadd.f32 %v2972, 1e-05
    %v2974 = vrsqrt.pop %v2973
    %v2975 = vmul.f32 %v2968, %v2974
    %v2976 = vpack.c.bf16 %v2975, %v2975
    %v2977 = vpack.c.bf16 %v2962, %v2962
    %v2978 = vpack.c.bf16 %v2963, %v2963
    %v2979 = vmul.bf16 %v2976, %v2977
    %v2980 = vadd.bf16 %v2979, %v2978
    %v2981 = vmul.bf16 %v2980, 1036860877
    %v2982 = vmax.bf16 %v2980, %v2981
    %s2983 = scalar_lea.vmem [#allocation5], 128
    %v2984 = vld [vmem:[%s2983] sm:$0xf]
    %v2985 = vld [vmem:[%s2983 + $0x4] sm:$0xf]
    %v2986 = vld [vmem:[%s2983 + $0x8] sm:$0xf]
    %v2987 = vld [vmem:[%s2983 + $0xc] sm:$0xf]
    %v2988 = vld [vmem:[%s2983 + $0x10] sm:$0xf]
    %v2989 = vld [vmem:[%s2983 + $0x14] sm:$0xf]
    %v2990 = vld [vmem:[%s2983 + $0x18] sm:$0xf]
    %v2991 = vld [vmem:[%s2983 + $0x1c] sm:$0xf]
    %v2992 = vld [vmem:[%s2983 + $0x20] sm:$0xf]
    %v2993 = vld [vmem:[%s2983 + $0x24] sm:$0xf]
    %v2994 = vld [vmem:[%s2983 + $0x28] sm:$0xf]
    %v2995 = vld [vmem:[%s2983 + $0x2c] sm:$0xf]
    %v2996 = vld [vmem:[%s2983 + $0x30] sm:$0xf]
    %v2997 = vld [vmem:[%s2983 + $0x34] sm:$0xf]
    %v2998 = vld [vmem:[%s2983 + $0x38] sm:$0xf]
    %v2999 = vld [vmem:[%s2983 + $0x3c] sm:$0xf]
    %v3000 = vld [vmem:[%s2983 + $0x40] sm:$0xf]
    %v3001 = vld [vmem:[%s2983 + $0x44] sm:$0xf]
    %v3002 = vld [vmem:[%s2983 + $0x48] sm:$0xf]
    %v3003 = vld [vmem:[%s2983 + $0x4c] sm:$0xf]
    %v3004 = vld [vmem:[%s2983 + $0x50] sm:$0xf]
    %v3005 = vld [vmem:[%s2983 + $0x54] sm:$0xf]
    %v3006 = vld [vmem:[%s2983 + $0x58] sm:$0xf]
    %v3007 = vld [vmem:[%s2983 + $0x5c] sm:$0xf]
    %v3008 = vld [vmem:[%s2983 + $0x60] sm:$0xf]
    %v3009 = vld [vmem:[%s2983 + $0x64] sm:$0xf]
    %v3010 = vld [vmem:[%s2983 + $0x68] sm:$0xf]
    %v3011 = vld [vmem:[%s2983 + $0x6c] sm:$0xf]
    %v3012 = vld [vmem:[%s2983 + $0x70] sm:$0xf]
    %v3013 = vld [vmem:[%s2983 + $0x74] sm:$0xf]
    %v3014 = vld [vmem:[%s2983 + $0x78] sm:$0xf]
    %v3015 = vld [vmem:[%s2983 + $0x7c] sm:$0xf]
    %v3016 = vld [vmem:[%s6 + $0x34] ss:$0 sm:$0xff]
    %v3049 = vunpack.c.l.b16 %v2984
    %v3050 = vunpack.c.l.b16 %v2985
    %v3051 = vunpack.c.l.b16 %v2986
    %v3052 = vunpack.c.l.b16 %v2987
    %v3053 = vunpack.c.l.b16 %v2988
    %v3054 = vunpack.c.l.b16 %v2989
    %v3055 = vunpack.c.l.b16 %v2990
    %v3056 = vunpack.c.l.b16 %v2991
    %v3057 = vunpack.c.l.b16 %v2992
    %v3058 = vunpack.c.l.b16 %v2993
    %v3059 = vunpack.c.l.b16 %v2994
    %v3060 = vunpack.c.l.b16 %v2995
    %v3061 = vunpack.c.l.b16 %v2996
    %v3062 = vunpack.c.l.b16 %v2997
    %v3063 = vunpack.c.l.b16 %v2998
    %v3064 = vunpack.c.l.b16 %v2999
    %v3065 = vunpack.c.l.b16 %v3000
    %v3066 = vunpack.c.l.b16 %v3001
    %v3067 = vunpack.c.l.b16 %v3002
    %v3068 = vunpack.c.l.b16 %v3003
    %v3069 = vunpack.c.l.b16 %v3004
    %v3070 = vunpack.c.l.b16 %v3005
    %v3071 = vunpack.c.l.b16 %v3006
    %v3072 = vunpack.c.l.b16 %v3007
    %v3073 = vunpack.c.l.b16 %v3008
    %v3074 = vunpack.c.l.b16 %v3009
    %v3075 = vunpack.c.l.b16 %v3010
    %v3076 = vunpack.c.l.b16 %v3011
    %v3077 = vunpack.c.l.b16 %v3012
    %v3078 = vunpack.c.l.b16 %v3013
    %v3079 = vunpack.c.l.b16 %v3014
    %v3080 = vunpack.c.l.b16 %v3015
    %v3081 = vpack.c.b16 %v3050, %v3049
    %v3082 = vpack.c.b16 %v3052, %v3051
    %v3083 = vpack.c.b16 %v3054, %v3053
    %v3084 = vpack.c.b16 %v3056, %v3055
    %v3085 = vpack.c.b16 %v3058, %v3057
    %v3086 = vpack.c.b16 %v3060, %v3059
    %v3087 = vpack.c.b16 %v3062, %v3061
    %v3088 = vpack.c.b16 %v3064, %v3063
    %v3089 = vpack.c.b16 %v3066, %v3065
    %v3090 = vpack.c.b16 %v3068, %v3067
    %v3091 = vpack.c.b16 %v3070, %v3069
    %v3092 = vpack.c.b16 %v3072, %v3071
    %v3093 = vpack.c.b16 %v3074, %v3073
    %v3094 = vpack.c.b16 %v3076, %v3075
    %v3095 = vpack.c.b16 %v3078, %v3077
    %v3096 = vpack.c.b16 %v3080, %v3079
    %3113 = vmatprep.subr.bf16.mxu0 0
    %3114 = vmatpush1.bf16.msra.mxu0 %v3081
    %3115 = vmatprep.subr.bf16.mxu0 0
    %3116 = vmatpush1.bf16.msra.mxu0 %v3082
    %3117 = vmatprep.subr.bf16.mxu0 0
    %3118 = vmatpush1.bf16.msra.mxu0 %v3083
    %3119 = vmatprep.subr.bf16.mxu0 0
    %3120 = vmatpush1.bf16.msra.mxu0 %v3084
    %3121 = vmatprep.subr.bf16.mxu0 0
    %3122 = vmatpush1.bf16.msra.mxu0 %v3085
    %3123 = vmatprep.subr.bf16.mxu0 0
    %3124 = vmatpush1.bf16.msra.mxu0 %v3086
    %3125 = vmatprep.subr.bf16.mxu0 0
    %3126 = vmatpush1.bf16.msra.mxu0 %v3087
    %3127 = vmatprep.subr.bf16.mxu0 0
    %3128 = vmatpush1.bf16.msra.mxu0 %v3088
    %3129 = vmatprep.subr.bf16.mxu0 0
    %3130 = vmatpush1.bf16.msra.mxu0 %v3089
    %3131 = vmatprep.subr.bf16.mxu0 0
    %3132 = vmatpush1.bf16.msra.mxu0 %v3090
    %3133 = vmatprep.subr.bf16.mxu0 0
    %3134 = vmatpush1.bf16.msra.mxu0 %v3091
    %3135 = vmatprep.subr.bf16.mxu0 0
    %3136 = vmatpush1.bf16.msra.mxu0 %v3092
    %3137 = vmatprep.subr.bf16.mxu0 0
    %3138 = vmatpush1.bf16.msra.mxu0 %v3093
    %3139 = vmatprep.subr.bf16.mxu0 0
    %3140 = vmatpush1.bf16.msra.mxu0 %v3094
    %3141 = vmatprep.subr.bf16.mxu0 0
    %3142 = vmatpush1.bf16.msra.mxu0 %v3095
    %3143 = vmatprep.subr.bf16.mxu0 0
    %3144 = vmatpush1.bf16.msra.mxu0 %v3096
    %3145 = vmatprep.mubr.bf16.mxu0 %v2792
    %3146 = vmatmul.mubr.bf16.gmra.mrb[0].mxu0 %v2791
    %v3147 = vpop.f32.mrb[0].mxu0
    %v3148 = vadd.f32 %v3016, %v3147
    %v3149 = vpop.f32.mrb[0].mxu0
    %v3150 = vpop.f32.mrb[0].mxu0
    %v3151 = vpop.f32.mrb[0].mxu0
    %3152 = vdwg.mxu0
    %v3153 = vld [vmem:[%s6 + $0x35] ss:$0 sm:$0xff]
    %v3154 = vld [vmem:[%s6 + $0x36] ss:$0 sm:$0xff]
    %3155 = vadd.xlane.f32.xlu0 %v3148
    %v3156 = vpop.xlane.xlu0 %3155
    %v3157 = vmul.f32 %v3156, %v2966
    %v3158 = vsub.f32 %v3148, %v3157
    %v3159 = vmul.f32 %v3158, %v3158
    %3160 = vadd.xlane.f32.xlu0 %v3159
    %v3161 = vpop.xlane.xlu0 %3160
    %v3162 = vmul.f32 %v3161, %v2966
    %v3163 = vadd.f32 %v3162, 1e-05
    %v3164 = vrsqrt.pop %v3163
    %v3165 = vmul.f32 %v3158, %v3164
    %v3166 = vpack.c.bf16 %v3165, %v3165
    %v3167 = vpack.c.bf16 %v3153, %v3153
    %v3168 = vpack.c.bf16 %v3154, %v3154
    %v3169 = vmul.bf16 %v3166, %v3167
    %v3170 = vadd.bf16 %v3169, %v3168
    %v3171 = vmul.bf16 %v3170, 1036860877
    %v3172 = vmax.bf16 %v3170, %v3171
    %v3173 = vld [vmem:[%s4] sm:$0xf]
    %v3174 = vld [vmem:[%s4 + $0x4] sm:$0xf]
    %v3175 = vld [vmem:[%s4 + $0x8] sm:$0xf]
    %v3176 = vld [vmem:[%s4 + $0xc] sm:$0xf]
    %v3177 = vld [vmem:[%s4 + $0x10] sm:$0xf]
    %v3178 = vld [vmem:[%s4 + $0x14] sm:$0xf]
    %v3179 = vld [vmem:[%s4 + $0x18] sm:$0xf]
    %v3180 = vld [vmem:[%s4 + $0x1c] sm:$0xf]
    %v3181 = vld [vmem:[%s4 + $0x20] sm:$0xf]
    %v3182 = vld [vmem:[%s4 + $0x24] sm:$0xf]
    %v3183 = vld [vmem:[%s4 + $0x28] sm:$0xf]
    %v3184 = vld [vmem:[%s4 + $0x2c] sm:$0xf]
    %v3185 = vld [vmem:[%s4 + $0x30] sm:$0xf]
    %v3186 = vld [vmem:[%s4 + $0x34] sm:$0xf]
    %v3187 = vld [vmem:[%s4 + $0x38] sm:$0xf]
    %v3188 = vld [vmem:[%s4 + $0x3c] sm:$0xf]
    %v3189 = vld [vmem:[%s6 + $0x37] ss:$0 sm:$0xff]
    %v3206 = vunpack.c.l.b16 %v3173
    %v3207 = vunpack.c.l.b16 %v3174
    %v3208 = vunpack.c.l.b16 %v3175
    %v3209 = vunpack.c.l.b16 %v3176
    %v3210 = vunpack.c.l.b16 %v3177
    %v3211 = vunpack.c.l.b16 %v3178
    %v3212 = vunpack.c.l.b16 %v3179
    %v3213 = vunpack.c.l.b16 %v3180
    %v3214 = vunpack.c.l.b16 %v3181
    %v3215 = vunpack.c.l.b16 %v3182
    %v3216 = vunpack.c.l.b16 %v3183
    %v3217 = vunpack.c.l.b16 %v3184
    %v3218 = vunpack.c.l.b16 %v3185
    %v3219 = vunpack.c.l.b16 %v3186
    %v3220 = vunpack.c.l.b16 %v3187
    %v3221 = vunpack.c.l.b16 %v3188
    %v3222 = vpack.c.b16 %v3207, %v3206
    %v3223 = vpack.c.b16 %v3209, %v3208
    %v3224 = vpack.c.b16 %v3211, %v3210
    %v3225 = vpack.c.b16 %v3213, %v3212
    %v3226 = vpack.c.b16 %v3215, %v3214
    %v3227 = vpack.c.b16 %v3217, %v3216
    %v3228 = vpack.c.b16 %v3219, %v3218
    %v3229 = vpack.c.b16 %v3221, %v3220
    %3238 = vmatprep.subr.bf16.mxu0 0
    %3239 = vmatpush1.bf16.msra.mxu0 %v3222
    %3240 = vmatprep.subr.bf16.mxu0 0
    %3241 = vmatpush1.bf16.msra.mxu0 %v3223
    %3242 = vmatprep.subr.bf16.mxu0 0
    %3243 = vmatpush1.bf16.msra.mxu0 %v3224
    %3244 = vmatprep.subr.bf16.mxu0 0
    %3245 = vmatpush1.bf16.msra.mxu0 %v3225
    %3246 = vmatprep.subr.bf16.mxu0 0
    %3247 = vmatpush1.bf16.msra.mxu0 %v3226
    %3248 = vmatprep.subr.bf16.mxu0 0
    %3249 = vmatpush1.bf16.msra.mxu0 %v3227
    %3250 = vmatprep.subr.bf16.mxu0 0
    %3251 = vmatpush1.bf16.msra.mxu0 %v3228
    %3252 = vmatprep.subr.bf16.mxu0 0
    %3253 = vmatpush1.bf16.msra.mxu0 %v3229
    %3254 = vmatprep.subr.bf16.mxu0 0
    %3255 = vmatpush1.bf16.msra.mxu0 0
    %3256 = vmatprep.subr.bf16.mxu0 0
    %3257 = vmatpush1.bf16.msra.mxu0 0
    %3258 = vmatprep.subr.bf16.mxu0 0
    %3259 = vmatpush1.bf16.msra.mxu0 0
    %3260 = vmatprep.subr.bf16.mxu0 0
    %3261 = vmatpush1.bf16.msra.mxu0 0
    %3262 = vmatprep.subr.bf16.mxu0 0
    %3263 = vmatpush1.bf16.msra.mxu0 0
    %3264 = vmatprep.subr.bf16.mxu0 0
    %3265 = vmatpush1.bf16.msra.mxu0 0
    %3266 = vmatprep.subr.bf16.mxu0 0
    %3267 = vmatpush1.bf16.msra.mxu0 0
    %3268 = vmatprep.subr.bf16.mxu0 0
    %3269 = vmatpush1.bf16.msra.mxu0 0
    %3270 = vmatprep.mubr.bf16.mxu0 0
    %3271 = vmatmul.mubr.bf16.gmra.mrb[0].mxu0 %v2982
    %v3272 = vpop.f32.mrb[0].mxu0
    %v3273 = vadd.f32 %v3189, %v3272
    %v3274 = vpop.f32.mrb[0].mxu0
    %v3275 = vpop.f32.mrb[0].mxu0
    %v3276 = vpop.f32.mrb[0].mxu0
    %3277 = vdwg.mxu0
    %v3278 = vld [vmem:[%s6 + $0x40] ss:$0 sm:$0xff]
    %v3279 = vld [vmem:[%s6 + $0x41] ss:$0 sm:$0xff]
    %vm3280 = vcmask 523264
    %v3281 = vsel %vm3280, %v3273, 0.0
    %3282 = vadd.xlane.f32.xlu0 %v3281
    %v3283 = vpop.xlane.xlu0 %3282
    %v3284 = vrcp.pop 64.0
    %v3285 = vmul.f32 %v3283, %v3284
    %v3286 = vsub.f32 %v3273, %v3285
    %v3287 = vmul.f32 %v3286, %v3286
    %v3288 = vsel %vm3280, %v3287, 0.0
    %3289 = vadd.xlane.f32.xlu0 %v3288
    %v3290 = vpop.xlane.xlu0 %3289
    %v3291 = vmul.f32 %v3290, %v3284
    %v3292 = vadd.f32 %v3291, 1e-05
    %v3293 = vrsqrt.pop %v3292
    %v3294 = vmul.f32 %v3286, %v3293
    %v3295 = vpack.c.bf16 %v3294, %v3294
    %v3296 = vpack.c.bf16 %v3278, %v3278
    %v3297 = vpack.c.bf16 %v3279, %v3279
    %v3298 = vmul.bf16 %v3295, %v3296
    %v3299 = vadd.bf16 %v3298, %v3297
    %v3300 = vmul.bf16 %v3299, 1036860877
    %v3301 = vmax.bf16 %v3299, %v3300
    %s3302 = scalar_lea.vmem %s4, 64
    %v3303 = vld [vmem:[%s3302] sm:$0xf]
    %v3304 = vld [vmem:[%s3302 + $0x4] sm:$0xf]
    %v3305 = vld [vmem:[%s3302 + $0x8] sm:$0xf]
    %v3306 = vld [vmem:[%s3302 + $0xc] sm:$0xf]
    %v3307 = vld [vmem:[%s3302 + $0x10] sm:$0xf]
    %v3308 = vld [vmem:[%s3302 + $0x14] sm:$0xf]
    %v3309 = vld [vmem:[%s3302 + $0x18] sm:$0xf]
    %v3310 = vld [vmem:[%s3302 + $0x1c] sm:$0xf]
    %v3311 = vld [vmem:[%s3302 + $0x20] sm:$0xf]
    %v3312 = vld [vmem:[%s3302 + $0x24] sm:$0xf]
    %v3313 = vld [vmem:[%s3302 + $0x28] sm:$0xf]
    %v3314 = vld [vmem:[%s3302 + $0x2c] sm:$0xf]
    %v3315 = vld [vmem:[%s3302 + $0x30] sm:$0xf]
    %v3316 = vld [vmem:[%s3302 + $0x34] sm:$0xf]
    %v3317 = vld [vmem:[%s3302 + $0x38] sm:$0xf]
    %v3318 = vld [vmem:[%s3302 + $0x3c] sm:$0xf]
    %v3319 = vld [vmem:[%s6 + $0x42] ss:$0 sm:$0xff]
    %v3336 = vunpack.c.l.b16 %v3303
    %v3337 = vunpack.c.l.b16 %v3304
    %v3338 = vunpack.c.l.b16 %v3305
    %v3339 = vunpack.c.l.b16 %v3306
    %v3340 = vunpack.c.l.b16 %v3307
    %v3341 = vunpack.c.l.b16 %v3308
    %v3342 = vunpack.c.l.b16 %v3309
    %v3343 = vunpack.c.l.b16 %v3310
    %v3344 = vunpack.c.l.b16 %v3311
    %v3345 = vunpack.c.l.b16 %v3312
    %v3346 = vunpack.c.l.b16 %v3313
    %v3347 = vunpack.c.l.b16 %v3314
    %v3348 = vunpack.c.l.b16 %v3315
    %v3349 = vunpack.c.l.b16 %v3316
    %v3350 = vunpack.c.l.b16 %v3317
    %v3351 = vunpack.c.l.b16 %v3318
    %v3352 = vpack.c.b16 %v3337, %v3336
    %v3353 = vpack.c.b16 %v3339, %v3338
    %v3354 = vpack.c.b16 %v3341, %v3340
    %v3355 = vpack.c.b16 %v3343, %v3342
    %v3356 = vpack.c.b16 %v3345, %v3344
    %v3357 = vpack.c.b16 %v3347, %v3346
    %v3358 = vpack.c.b16 %v3349, %v3348
    %v3359 = vpack.c.b16 %v3351, %v3350
    %3368 = vmatprep.subr.bf16.mxu0 0
    %3369 = vmatpush1.bf16.msra.mxu0 %v3352
    %3370 = vmatprep.subr.bf16.mxu0 0
    %3371 = vmatpush1.bf16.msra.mxu0 %v3353
    %3372 = vmatprep.subr.bf16.mxu0 0
    %3373 = vmatpush1.bf16.msra.mxu0 %v3354
    %3374 = vmatprep.subr.bf16.mxu0 0
    %3375 = vmatpush1.bf16.msra.mxu0 %v3355
    %3376 = vmatprep.subr.bf16.mxu0 0
    %3377 = vmatpush1.bf16.msra.mxu0 %v3356
    %3378 = vmatprep.subr.bf16.mxu0 0
    %3379 = vmatpush1.bf16.msra.mxu0 %v3357
    %3380 = vmatprep.subr.bf16.mxu0 0
    %3381 = vmatpush1.bf16.msra.mxu0 %v3358
    %3382 = vmatprep.subr.bf16.mxu0 0
    %3383 = vmatpush1.bf16.msra.mxu0 %v3359
    %3384 = vmatprep.subr.bf16.mxu0 0
    %3385 = vmatpush1.bf16.msra.mxu0 0
    %3386 = vmatprep.subr.bf16.mxu0 0
    %3387 = vmatpush1.bf16.msra.mxu0 0
    %3388 = vmatprep.subr.bf16.mxu0 0
    %3389 = vmatpush1.bf16.msra.mxu0 0
    %3390 = vmatprep.subr.bf16.mxu0 0
    %3391 = vmatpush1.bf16.msra.mxu0 0
    %3392 = vmatprep.subr.bf16.mxu0 0
    %3393 = vmatpush1.bf16.msra.mxu0 0
    %3394 = vmatprep.subr.bf16.mxu0 0
    %3395 = vmatpush1.bf16.msra.mxu0 0
    %3396 = vmatprep.subr.bf16.mxu0 0
    %3397 = vmatpush1.bf16.msra.mxu0 0
    %3398 = vmatprep.subr.bf16.mxu0 0
    %3399 = vmatpush1.bf16.msra.mxu0 0
    %3400 = vmatprep.mubr.bf16.mxu0 0
    %3401 = vmatmul.mubr.bf16.gmra.mrb[0].mxu0 %v3172
    %v3402 = vpop.f32.mrb[0].mxu0
    %v3403 = vadd.f32 %v3319, %v3402
    %v3404 = vpop.f32.mrb[0].mxu0
    %v3405 = vpop.f32.mrb[0].mxu0
    %v3406 = vpop.f32.mrb[0].mxu0
    %3407 = vdwg.mxu0
    %v3408 = vld [vmem:[%s6 + $0x43] ss:$0 sm:$0xff]
    %v3409 = vld [vmem:[%s6 + $0x44] ss:$0 sm:$0xff]
    %v3410 = vsel %vm3280, %v3403, 0.0
    %3411 = vadd.xlane.f32.xlu0 %v3410
    %v3412 = vpop.xlane.xlu0 %3411
    %v3413 = vmul.f32 %v3412, %v3284
    %v3414 = vsub.f32 %v3403, %v3413
    %v3415 = vmul.f32 %v3414, %v3414
    %v3416 = vsel %vm3280, %v3415, 0.0
    %3417 = vadd.xlane.f32.xlu0 %v3416
    %v3418 = vpop.xlane.xlu0 %3417
    %v3419 = vmul.f32 %v3418, %v3284
    %v3420 = vadd.f32 %v3419, 1e-05
    %v3421 = vrsqrt.pop %v3420
    %v3422 = vmul.f32 %v3414, %v3421
    %v3423 = vpack.c.bf16 %v3422, %v3422
    %v3424 = vpack.c.bf16 %v3408, %v3408
    %v3425 = vpack.c.bf16 %v3409, %v3409
    %v3426 = vmul.bf16 %v3423, %v3424
    %v3427 = vadd.bf16 %v3426, %v3425
    %v3428 = vmul.bf16 %v3427, 1036860877
    %v3429 = vmax.bf16 %v3427, %v3428
    %3431 = vrot.lane.b32.xlu0 %v3429, 64
    %v3432 = vpop.permute.xlu0 %3431
    %v3435 = vsel %vm3280, %v3301, %v3432
    %v3437 = vld [vmem:[%s5] sm:$0xf]
    %v3438 = vld [vmem:[%s5 + $0x4] sm:$0xf]
    %v3439 = vld [vmem:[%s5 + $0x8] sm:$0xf]
    %v3440 = vld [vmem:[%s5 + $0xc] sm:$0xf]
    %v3441 = vld [vmem:[%s5 + $0x10] sm:$0xf]
    %v3442 = vld [vmem:[%s5 + $0x14] sm:$0xf]
    %v3443 = vld [vmem:[%s5 + $0x18] sm:$0xf]
    %v3444 = vld [vmem:[%s5 + $0x1c] sm:$0xf]
    %v3445 = vld [vmem:[%s5 + $0x20] sm:$0xf]
    %v3446 = vld [vmem:[%s5 + $0x24] sm:$0xf]
    %v3447 = vld [vmem:[%s5 + $0x28] sm:$0xf]
    %v3448 = vld [vmem:[%s5 + $0x2c] sm:$0xf]
    %v3449 = vld [vmem:[%s5 + $0x30] sm:$0xf]
    %v3450 = vld [vmem:[%s5 + $0x34] sm:$0xf]
    %v3451 = vld [vmem:[%s5 + $0x38] sm:$0xf]
    %v3452 = vld [vmem:[%s5 + $0x3c] sm:$0xf]
    %v3453 = vld [vmem:[%s6 + $0x45] ss:$0 sm:$0xff]
    %v3470 = vunpack.c.l.b16 %v3437
    %v3471 = vunpack.c.l.b16 %v3438
    %v3472 = vunpack.c.l.b16 %v3439
    %v3473 = vunpack.c.l.b16 %v3440
    %v3474 = vunpack.c.l.b16 %v3441
    %v3475 = vunpack.c.l.b16 %v3442
    %v3476 = vunpack.c.l.b16 %v3443
    %v3477 = vunpack.c.l.b16 %v3444
    %v3478 = vunpack.c.l.b16 %v3445
    %v3479 = vunpack.c.l.b16 %v3446
    %v3480 = vunpack.c.l.b16 %v3447
    %v3481 = vunpack.c.l.b16 %v3448
    %v3482 = vunpack.c.l.b16 %v3449
    %v3483 = vunpack.c.l.b16 %v3450
    %v3484 = vunpack.c.l.b16 %v3451
    %v3485 = vunpack.c.l.b16 %v3452
    %v3486 = vpack.c.b16 %v3471, %v3470
    %v3487 = vpack.c.b16 %v3473, %v3472
    %v3488 = vpack.c.b16 %v3475, %v3474
    %v3489 = vpack.c.b16 %v3477, %v3476
    %v3490 = vpack.c.b16 %v3479, %v3478
    %v3491 = vpack.c.b16 %v3481, %v3480
    %v3492 = vpack.c.b16 %v3483, %v3482
    %v3493 = vpack.c.b16 %v3485, %v3484
    %3502 = vmatprep.subr.bf16.mxu0 0
    %3503 = vmatpush1.bf16.msra.mxu0 %v3486
    %3504 = vmatprep.subr.bf16.mxu0 0
    %3505 = vmatpush1.bf16.msra.mxu0 %v3487
    %3506 = vmatprep.subr.bf16.mxu0 0
    %3507 = vmatpush1.bf16.msra.mxu0 %v3488
    %3508 = vmatprep.subr.bf16.mxu0 0
    %3509 = vmatpush1.bf16.msra.mxu0 %v3489
    %3510 = vmatprep.subr.bf16.mxu0 0
    %3511 = vmatpush1.bf16.msra.mxu0 %v3490
    %3512 = vmatprep.subr.bf16.mxu0 0
    %3513 = vmatpush1.bf16.msra.mxu0 %v3491
    %3514 = vmatprep.subr.bf16.mxu0 0
    %3515 = vmatpush1.bf16.msra.mxu0 %v3492
    %3516 = vmatprep.subr.bf16.mxu0 0
    %3517 = vmatpush1.bf16.msra.mxu0 %v3493
    %3518 = vmatprep.subr.bf16.mxu0 0
    %3519 = vmatpush1.bf16.msra.mxu0 0
    %3520 = vmatprep.subr.bf16.mxu0 0
    %3521 = vmatpush1.bf16.msra.mxu0 0
    %3522 = vmatprep.subr.bf16.mxu0 0
    %3523 = vmatpush1.bf16.msra.mxu0 0
    %3524 = vmatprep.subr.bf16.mxu0 0
    %3525 = vmatpush1.bf16.msra.mxu0 0
    %3526 = vmatprep.subr.bf16.mxu0 0
    %3527 = vmatpush1.bf16.msra.mxu0 0
    %3528 = vmatprep.subr.bf16.mxu0 0
    %3529 = vmatpush1.bf16.msra.mxu0 0
    %3530 = vmatprep.subr.bf16.mxu0 0
    %3531 = vmatpush1.bf16.msra.mxu0 0
    %3532 = vmatprep.subr.bf16.mxu0 0
    %3533 = vmatpush1.bf16.msra.mxu0 0
    %3534 = vmatprep.mubr.bf16.mxu0 0
    %3535 = vmatmul.mubr.bf16.gmra.mrb[0].mxu0 %v3435
    %v3536 = vpop.f32.mrb[0].mxu0
    %v3537 = vadd.f32 %v3453, %v3536
    %v3538 = vpop.f32.mrb[0].mxu0
    %v3539 = vpop.f32.mrb[0].mxu0
    %v3540 = vpop.f32.mrb[0].mxu0
    %3541 = vdwg.mxu0
    %v3542 = vlaneseq
    %v3543 = vand.u32 %v3542, 127
    %vm3544 = vcmp.lt.s32.totalorder %v3543, 8
    %v3545 = vtanh.pop %v3537
    %v3546 = vsel %vm3544, %v3545, %v3537
    %3547 = vst [vmem:[#allocation7] sm:$0xff] %v3546
    // Predicated region
    $region38: #{tpu_custom_call.1} parent=1 // pred_check
      _
    $region39: #{tpu_custom_call.1} parent=1 // pred_check_branch
      %3549 = sbr.rel (0) target = $region41
    $region40: #{tpu_custom_call.1} parent=1 // pred_region
      %s3551 = ssub.s32 128, 128
      %3552 = vsyncadd [#allocation4], %s3551
      %s3554 = sshll.u32 [#allocation7], 4
      %s3555 = int_to_ptr.vmem [resolvable:$true] %s3554
      %3557 = dma.vmem_to_hbm [thread:$0]  %s3555, 128, %s7, [#allocation4]
    $region41: #{tpu_custom_call.1} parent=1 // pred_fallthru
      _
    // Predicated region
    $region42: #{tpu_custom_call.1} parent=1 // pred_check
      _
    $region43: #{tpu_custom_call.1} parent=1 // pred_check_branch
      %3559 = sbr.rel (0) target = $region45
    $region44: #{tpu_custom_call.1} parent=1 // pred_region
      %3560 = dma.done [#allocation4], 128
    $region45: #{tpu_custom_call.1} parent=1 // pred_fallthru
      _
    %3561 = vsyncpa [#allocation3], 1
    %3562 = vsyncpa [#allocation6], 1
    %3563 = vsyncpa [#allocation4], 1

</llo_original>
